<compile_context>
chip_gen: v5e
topology: v5e:2x2
jax: 0.10.0
libtpu: 0.0.40
codegen_flags: <defaults>
</compile_context>

<pallas_src>
import functools

import jax
import jax.numpy as jnp
from jax.experimental import pallas as pl
from jax.experimental.pallas import tpu as pltpu


def mlp_kernel(x_ref, w1_ref, b1_ref, w2_ref, b2_ref, w3_ref, b3_ref, o_ref):
    # x_ref: (TM, 20) bf16 tile. Weights are VMEM-resident bf16 (w1, w2) and
    # f32 (w3 row, biases). All accumulation in f32.
    x = x_ref[...]                                                    # bf16

    # Layer 1: (TM,20) @ (20,64) + (1,64) -> ReLU           [MXU, f32 acc]
    h1 = jnp.dot(x, w1_ref[...], preferred_element_type=jnp.float32) + b1_ref[...]
    h1 = jnp.maximum(h1, 0.0)

    # Layer 2: (TM,64) @ (64,64) + (1,64) -> ReLU           [MXU, f32 acc]
    h2 = jnp.dot(h1.astype(jnp.bfloat16), w2_ref[...],
                 preferred_element_type=jnp.float32) + b2_ref[...]
    h2 = jnp.maximum(h2, 0.0)

    # Layer 3: single output column -> VPU multiply + cross-lane reduce
    # instead of a wasteful 1-column MXU pass.
    h3 = jnp.sum(h2 * w3_ref[...], axis=-1, keepdims=True) + b3_ref[...]

    o_ref[...] = jax.nn.sigmoid(h3).astype(o_ref.dtype)


def _mlp_pallas(x, w1, b1, w2, b2, w3_row, b3, *, block_m):
    """x: (B, 20) f32. Weights already prepped (bf16 / row-shaped) by caller."""
    B = x.shape[0]
    n_tiles = pl.cdiv(B, block_m)
    B_pad = n_tiles * block_m

    # Pad batch to a multiple of the tile size; garbage rows are sliced off.
    if B_pad != B:
        x = jnp.pad(x, ((0, B_pad - B), (0, 0)))

    # One-time cast of the activations to bf16 (halves input DMA bytes, keeps
    # the MXU on its native bf16 path on all generations).
    x_bf16 = x.astype(jnp.bfloat16)

    # Full-array blocks with constant index maps => weights/biases stay
    # resident in VMEM for the whole grid.
    resident = lambda a: pl.BlockSpec(a.shape, lambda i: (0,) * a.ndim)

    out = pl.pallas_call(
        mlp_kernel,
        out_shape=jax.ShapeDtypeStruct((B_pad, 1), jnp.float32),
        grid=(n_tiles,),
        in_specs=[
            pl.BlockSpec((block_m, 20), lambda i: (i, 0)),   # x tile
            resident(w1), resident(b1),
            resident(w2), resident(b2),
            resident(w3_row), resident(b3),
        ],
        out_specs=pl.BlockSpec((block_m, 1), lambda i: (i, 0)),
        compiler_params=pltpu.CompilerParams(
            dimension_semantics=("parallel",)),
    )(x_bf16, w1, b1, w2, b2, w3_row, b3)

    return out[:B]


def mlp_forward(x, params, *, block_m=1024, min_kernel_batch=1024):
    """Forward pass.  x: (B, 20) float32; params: dict of (in,out) weights.

    For tiny batches the Pallas kernel is pure launch overhead, so dispatch
    to plain jnp below `min_kernel_batch`.
    """
    B = x.shape[0]
    if B < min_kernel_batch:
        return mlp_reference(x, params)

    # One-time wrapper-side prep (not re-executed per grid step):
    w1 = params["w1"].astype(jnp.bfloat16)          # (20, 64)
    w2 = params["w2"].astype(jnp.bfloat16)          # (64, 64)
    w3_row = params["w3"].reshape(1, 64)            # f32 row for VPU epilogue
    b1, b2 = params["b1"], params["b2"]             # (1, 64) f32
    b3 = params["b3"].reshape(1, 1)                 # (1, 1) f32

    return _mlp_pallas(x, w1, b1, w2, b2, w3_row, b3, block_m=block_m)


def init_params(key):
    """Deterministic init mimicking nn.Linear's U(-1/sqrt(in), 1/sqrt(in))."""
    def linear(k, fan_in, fan_out):
        kw, kb = jax.random.split(k)
        bound = 1.0 / jnp.sqrt(fan_in)
        # Stored as (in, out) so kernel does x @ W (PyTorch stores (out, in)).
        w = jax.random.uniform(kw, (fan_in, fan_out), jnp.float32, -bound, bound)
        b = jax.random.uniform(kb, (1, fan_out), jnp.float32, -bound, bound)
        return w, b

    k1, k2, k3 = jax.random.split(key, 3)
    w1, b1 = linear(k1, 20, 64)
    w2, b2 = linear(k2, 64, 64)
    w3, b3 = linear(k3, 64, 1)
    return {"w1": w1, "b1": b1, "w2": w2, "b2": b2, "w3": w3, "b3": b3}


def mlp_reference(x, p):
    h1 = jnp.maximum(x @ p["w1"] + p["b1"], 0.0)
    h2 = jnp.maximum(h1 @ p["w2"] + p["b2"], 0.0)
    return jax.nn.sigmoid(h2 @ p["w3"] + p["b3"])


if __name__ == "__main__":
    key = jax.random.PRNGKey(0)
    kx, kp = jax.random.split(key)

    params = init_params(kp)

    # Batch large enough to actually dispatch to (and pipeline through) the
    # Pallas kernel, and deliberately NOT a multiple of the tile size so the
    # padding path is exercised.  Still tiny in absolute bytes (~170 KB).
    B = 2085
    x = jax.random.normal(kx, (B, 20), dtype=jnp.float32)

    out = mlp_forward(x, params, block_m=1024, min_kernel_batch=1024)
    jax.block_until_ready(out)

    ref = mlp_reference(x, params)
    assert out.shape == (B, 1), out.shape
    # bf16 operands (f32 accumulation) => relaxed tolerance vs f32 reference.
    assert jnp.allclose(out, ref, atol=2e-2, rtol=2e-2), "mismatch vs reference"

    # Also exercise the small-batch jnp dispatch path once.
    small = mlp_forward(x[:8], params)
    jax.block_until_ready(small)
    assert small.shape == (8, 1)

    print("KERNEL_OK")
</pallas_src>

<mosaic_0001>
module attributes {stable_mosaic.version = 11 : i64} {
  func.func @mlp_kernel(%arg0: i32, %arg1: memref<1024x20xbf16, #tpu.memory_space<vmem>>, %arg2: memref<20x64xbf16, #tpu.memory_space<vmem>>, %arg3: memref<1x64xf32, #tpu.memory_space<vmem>>, %arg4: memref<64x64xbf16, #tpu.memory_space<vmem>>, %arg5: memref<1x64xf32, #tpu.memory_space<vmem>>, %arg6: memref<1x64xf32, #tpu.memory_space<vmem>>, %arg7: memref<1x1xf32, #tpu.memory_space<vmem>>, %arg8: memref<1024x1xf32, #tpu.memory_space<vmem>>) attributes {dimension_semantics = [#tpu.dimension_semantics<parallel>], iteration_bounds = array<i64: 3>, scalar_prefetch = 0 : i64, scratch_operands = 0 : i64, tpu.core_type = #tpu.core_type<tc>, window_params = [{transform_indices = @transform_0, window_bounds = array<i64: 1024, 20>}, {pipeline_mode = #tpu.pipeline_mode<synchronous>, transform_indices = @transform_1, window_bounds = array<i64: 20, 64>}, {pipeline_mode = #tpu.pipeline_mode<synchronous>, transform_indices = @transform_2, window_bounds = array<i64: 1, 64>}, {pipeline_mode = #tpu.pipeline_mode<synchronous>, transform_indices = @transform_3, window_bounds = array<i64: 64, 64>}, {pipeline_mode = #tpu.pipeline_mode<synchronous>, transform_indices = @transform_4, window_bounds = array<i64: 1, 64>}, {pipeline_mode = #tpu.pipeline_mode<synchronous>, transform_indices = @transform_5, window_bounds = array<i64: 1, 64>}, {pipeline_mode = #tpu.pipeline_mode<synchronous>, transform_indices = @transform_6, window_bounds = array<i64: 1, 1>}, {transform_indices = @transform_7, window_bounds = array<i64: 1024, 1>}]} {
    %c0 = arith.constant 0 : index
    %c0_0 = arith.constant 0 : index
    %0 = vector.load %arg1[%c0, %c0_0] : memref<1024x20xbf16, #tpu.memory_space<vmem>>, vector<1024x20xbf16>
    %c0_1 = arith.constant 0 : index
    %c0_2 = arith.constant 0 : index
    %1 = vector.load %arg2[%c0_1, %c0_2] : memref<20x64xbf16, #tpu.memory_space<vmem>>, vector<20x64xbf16>
    %cst = arith.constant dense<0.000000e+00> : vector<1024x64xf32>
    %2 = tpu.matmul %0, %1, %cst {dimension_numbers = #tpu.dot_dimension_numbers<[1], [0], [0], [1], [0, 0, 1, 1], [], []>} : vector<1024x20xbf16>, vector<20x64xbf16>, vector<1024x64xf32> -> vector<1024x64xf32>
    %c0_3 = arith.constant 0 : index
    %c0_4 = arith.constant 0 : index
    %3 = vector.load %arg3[%c0_3, %c0_4] : memref<1x64xf32, #tpu.memory_space<vmem>>, vector<1x64xf32>
    %4 = vector.broadcast %3 : vector<1x64xf32> to vector<1024x64xf32>
    %5 = arith.addf %2, %4 : vector<1024x64xf32>
    %cst_5 = arith.constant 0.000000e+00 : f32
    %6 = vector.broadcast %cst_5 : f32 to vector<1024x64xf32>
    %7 = arith.maximumf %5, %6 : vector<1024x64xf32>
    %8 = arith.truncf %7 : vector<1024x64xf32> to vector<1024x64xbf16>
    %c0_6 = arith.constant 0 : index
    %c0_7 = arith.constant 0 : index
    %9 = vector.load %arg4[%c0_6, %c0_7] : memref<64x64xbf16, #tpu.memory_space<vmem>>, vector<64x64xbf16>
    %cst_8 = arith.constant dense<0.000000e+00> : vector<1024x64xf32>
    %10 = tpu.matmul %8, %9, %cst_8 {dimension_numbers = #tpu.dot_dimension_numbers<[1], [0], [0], [1], [0, 0, 1, 1], [], []>} : vector<1024x64xbf16>, vector<64x64xbf16>, vector<1024x64xf32> -> vector<1024x64xf32>
    %c0_9 = arith.constant 0 : index
    %c0_10 = arith.constant 0 : index
    %11 = vector.load %arg5[%c0_9, %c0_10] : memref<1x64xf32, #tpu.memory_space<vmem>>, vector<1x64xf32>
    %12 = vector.broadcast %11 : vector<1x64xf32> to vector<1024x64xf32>
    %13 = arith.addf %10, %12 : vector<1024x64xf32>
    %cst_11 = arith.constant 0.000000e+00 : f32
    %14 = vector.broadcast %cst_11 : f32 to vector<1024x64xf32>
    %15 = arith.maximumf %13, %14 : vector<1024x64xf32>
    %c0_12 = arith.constant 0 : index
    %c0_13 = arith.constant 0 : index
    %16 = vector.load %arg6[%c0_12, %c0_13] : memref<1x64xf32, #tpu.memory_space<vmem>>, vector<1x64xf32>
    %17 = vector.broadcast %16 : vector<1x64xf32> to vector<1024x64xf32>
    %18 = arith.mulf %15, %17 : vector<1024x64xf32>
    %cst_14 = arith.constant dense<0.000000e+00> : vector<1024xf32>
    %19 = vector.multi_reduction <add>, %18, %cst_14 [1] : vector<1024x64xf32> to vector<1024xf32>
    %20 = vector.shape_cast %19 : vector<1024xf32> to vector<1024x1xf32>
    %c0_15 = arith.constant 0 : index
    %c0_16 = arith.constant 0 : index
    %21 = vector.load %arg7[%c0_15, %c0_16] : memref<1x1xf32, #tpu.memory_space<vmem>>, vector<1x1xf32>
    %22 = vector.broadcast %21 : vector<1x1xf32> to vector<1024x1xf32>
    %23 = arith.addf %20, %22 : vector<1024x1xf32>
    %24 = arith.negf %23 : vector<1024x1xf32>
    %25 = math.exp %24 : vector<1024x1xf32>
    %cst_17 = arith.constant 1.000000e+00 : f32
    %26 = vector.broadcast %cst_17 : f32 to vector<1024x1xf32>
    %27 = arith.addf %26, %25 : vector<1024x1xf32>
    %28 = arith.divf %26, %27 : vector<1024x1xf32>
    %c0_18 = arith.constant 0 : index
    %c0_19 = arith.constant 0 : index
    %29 = vector.load %arg8[%c0_18, %c0_19] : memref<1024x1xf32, #tpu.memory_space<vmem>>, vector<1024x1xf32>
    tpu.vector_store %arg8[%c0_18, %c0_19], %28 {strides = array<i32>} : memref<1024x1xf32, #tpu.memory_space<vmem>>, vector<1024x1xf32>,
    return
  }
  func.func @transform_0(%arg0: i32) -> (i32, i32) {
    %c0_i32 = arith.constant 0 : i32
    %c0_i32_0 = arith.constant 0 : i32
    return %arg0, %c0_i32 : i32, i32
  }
  func.func @transform_1(%arg0: i32) -> (i32, i32) {
    %c0_i32 = arith.constant 0 : i32
    %c0_i32_0 = arith.constant 0 : i32
    %c0_i32_1 = arith.constant 0 : i32
    return %c0_i32, %c0_i32_0 : i32, i32
  }
  func.func @transform_2(%arg0: i32) -> (i32, i32) {
    %c0_i32 = arith.constant 0 : i32
    %c0_i32_0 = arith.constant 0 : i32
    %c0_i32_1 = arith.constant 0 : i32
    return %c0_i32, %c0_i32_0 : i32, i32
  }
  func.func @transform_3(%arg0: i32) -> (i32, i32) {
    %c0_i32 = arith.constant 0 : i32
    %c0_i32_0 = arith.constant 0 : i32
    %c0_i32_1 = arith.constant 0 : i32
    return %c0_i32, %c0_i32_0 : i32, i32
  }
  func.func @transform_4(%arg0: i32) -> (i32, i32) {
    %c0_i32 = arith.constant 0 : i32
    %c0_i32_0 = arith.constant 0 : i32
    %c0_i32_1 = arith.constant 0 : i32
    return %c0_i32, %c0_i32_0 : i32, i32
  }
  func.func @transform_5(%arg0: i32) -> (i32, i32) {
    %c0_i32 = arith.constant 0 : i32
    %c0_i32_0 = arith.constant 0 : i32
    %c0_i32_1 = arith.constant 0 : i32
    return %c0_i32, %c0_i32_0 : i32, i32
  }
  func.func @transform_6(%arg0: i32) -> (i32, i32) {
    %c0_i32 = arith.constant 0 : i32
    %c0_i32_0 = arith.constant 0 : i32
    %c0_i32_1 = arith.constant 0 : i32
    return %c0_i32, %c0_i32_0 : i32, i32
  }
  func.func @transform_7(%arg0: i32) -> (i32, i32) {
    %c0_i32 = arith.constant 0 : i32
    %c0_i32_0 = arith.constant 0 : i32
    return %arg0, %c0_i32 : i32, i32
  }
}

</mosaic_0001>

<llo_original>
// kernel: tpu_custom_call.1
$region0: #{tpu_custom_call.1}
  #allocation0 [shape = 'u32[]', space=smem, size = 0x4, offset = 0x4, fixed_abs, tag = 'smem constant byte address 0x4 - core index']
  #allocation1 [shape = 'u32[72,128]{1,0:T(1,128)}', space=vmem, size = 0x9000, scoped, tag = 'internal scratch']
  #allocation2 [shape = 'f32[1,1]{1,0:T(1,128)S(1)}', space=vmem, size = 0x200, scoped, tag = 'scoped memory for tpu_custom_call.1']
  %s0 = inlined_call_operand.vmem [shape: bf16[3072,20], index: 0, kind: input, shape index: {}]
  %s1 = inlined_call_operand.hbm [shape: bf16[20,64], index: 1, kind: input, shape index: {}]
  %s2 = inlined_call_operand.hbm [shape: f32[1,64], index: 2, kind: input, shape index: {}]
  %s3 = inlined_call_operand.hbm [shape: bf16[64,64], index: 3, kind: input, shape index: {}]
  %s4 = inlined_call_operand.hbm [shape: f32[1,64], index: 4, kind: input, shape index: {}]
  %s5 = inlined_call_operand.hbm [shape: f32[1,64], index: 5, kind: input, shape index: {}]
  %s6 = inlined_call_operand.<no memory space> [shape: f32[1,1], index: 6, kind: input, shape index: {}]
  %s7 = inlined_call_operand.vmem [shape: f32[3072,1], index: 7, kind: output, shape index: {}]
  %s8 = sld [smem:[#allocation0]]
  $region81: #{tpu_custom_call.1} parent=0
    _
  %s10 = ssub.s32 1, %s8
  %s11 = scalar_select 0, %s10, %s8
  %v12 = vstv %s6
  %13 = vst [vmem:[#allocation2] sm:$0x1] %v12
  $region1: #{tpu_custom_call.1} parent=0
    #allocation3 [shape = 'u8[6144]{0}', space=vmem, size = 0x1800, scoped, tag = 'input window, operand 1, single buffered']
    #allocation4 [shape = 's32[2]{0}', space=sflag, size = 0x8, scoped, tag = 'scoped memory for tpu_custom_call.1']
    #allocation5 [shape = 'u8[512]{0}', space=vmem, size = 0x400, scoped, tag = 'input window, operand 2, single buffered']
    #allocation6 [shape = 's32[1]{0}', space=sflag, size = 0x4, scoped, tag = 'scoped memory for tpu_custom_call.1']
    #allocation7 [shape = 'u8[16384]{0}', space=vmem, size = 0x4000, scoped, tag = 'input window, operand 3, single buffered']
    #allocation8 [shape = 'u8[512]{0}', space=vmem, size = 0x400, scoped, tag = 'input window, operand 4, single buffered']
    #allocation9 [shape = 's32[1]{0}', space=sflag, size = 0x4, scoped, tag = 'scoped memory for tpu_custom_call.1']
    #allocation10 [shape = 'u8[512]{0}', space=vmem, size = 0x400, scoped, tag = 'input window, operand 5, single buffered']
    %14 = vsyncpa [#allocation4], 0
    %15 = vsyncpa [#allocation6], 0
    %16 = vsyncpa [#allocation9], 0
    loop: start=0, step=1, limit=5
    $region2: #{tpu_custom_call.1} parent=1 // loop_pre_header
      _
    $region3: #{tpu_custom_call.1} parent=1 // loop_header
      %s18 = sphi 0, %s22
      %p19 = scmp.ge.s32.totalorder %s18, 5
      %s28 = sphi 0, %s30
      %s31 = sphi 0, %s28
      %s32 = sphi 0, %s31
      %s48 = sphi 0, %s32
      %s52 = sphi 0, %s52
      %s54 = sphi 0, %s52
      %s55 = sphi 0, %s54
      %s69 = sphi 0, %s55
      %s73 = sphi 0, %s73
      %s75 = sphi 0, %s73
      %s76 = sphi 0, %s75
      %s90 = sphi 0, %s76
      %s94 = sphi 0, %s94
      %s96 = sphi 0, %s94
      %s97 = sphi 0, %s96
      %s111 = sphi 0, %s97
      %s115 = sphi 0, %s115
      %s117 = sphi 0, %s115
      %s118 = sphi 0, %s117
      %s132 = sphi 0, %s118
      %s136 = sphi 0, %s136
      %s138 = sphi 0, %s136
      %s139 = sphi 0, %s138
      %s153 = sphi 0, %s139
      %s157 = sphi 0, %s157
      %s159 = sphi 0, %s157
      %s160 = sphi 0, %s159
      %s174 = sphi 0, %s160
      %s180 = sphi 0, %s182
      %s183 = sphi 0, %s180
      %s184 = sphi 0, %s183
      %s200 = sphi 0, %s184
    $region4: #{tpu_custom_call.1} parent=1 // loop_header_branch
      %21 = sbr.rel (%p19) target = $region8
    $region5: #{tpu_custom_call.1} parent=1 // loop_body
      %s23 = ssub.s32 %s18, 1
      %s24 = ssub.s32 %s18, 2
      %s25 = sadd.s32 %s18, 1
      %s26 = ssub.s32 %s18, %s25
      %p27 = scmp.eq.s32.totalorder %s26, 0
      %s29 = sadd.s32 %s28, 1
      %s30 = scalar_select %p27, %s28, %s29
      %p33 = pneg %p27
      %p34 = scmp.eq.s32.totalorder %s18, 2
      %p35 = por %p33, %p34
      %p36 = scmp.ne.s32.totalorder %s28, %s31
      %p37 = scmp.eq.s32.totalorder %s18, 0
      %p38 = por %p36, %p37
      %p39 = scmp.ne.s32.totalorder %s28, %s31
      %p40 = scmp.eq.s32.totalorder %s23, 2
      %p41 = por %p39, %p40
      %p42 = scmp.ne.s32.totalorder %s31, %s32
      %p43 = scmp.eq.s32.totalorder %s23, 0
      %p44 = por %p42, %p43
      %p45 = scmp.ne.s32.totalorder %s31, %s32
      %p46 = scmp.eq.s32.totalorder %s24, 2
      %p47 = por %p45, %p46
      %p49 = scmp.ne.s32.totalorder %s32, %s48
      %p50 = scmp.eq.s32.totalorder %s24, 0
      %p51 = por %p49, %p50
      %s53 = sadd.s32 %s52, 1
      %p56 = scmp.eq.s32.totalorder %s18, 2
      %p57 = scmp.ne.s32.totalorder %s52, %s54
      %p58 = scmp.eq.s32.totalorder %s18, 0
      %p59 = por %p57, %p58
      %p60 = scmp.ne.s32.totalorder %s52, %s54
      %p61 = scmp.eq.s32.totalorder %s23, 2
      %p62 = por %p60, %p61
      %p63 = scmp.ne.s32.totalorder %s54, %s55
      %p64 = scmp.eq.s32.totalorder %s23, 0
      %p65 = por %p63, %p64
      %p66 = scmp.ne.s32.totalorder %s54, %s55
      %p67 = scmp.eq.s32.totalorder %s24, 2
      %p68 = por %p66, %p67
      %p70 = scmp.ne.s32.totalorder %s55, %s69
      %p71 = scmp.eq.s32.totalorder %s24, 0
      %p72 = por %p70, %p71
      %s74 = sadd.s32 %s73, 1
      %p77 = scmp.eq.s32.totalorder %s18, 2
      %p78 = scmp.ne.s32.totalorder %s73, %s75
      %p79 = scmp.eq.s32.totalorder %s18, 0
      %p80 = por %p78, %p79
      %p81 = scmp.ne.s32.totalorder %s73, %s75
      %p82 = scmp.eq.s32.totalorder %s23, 2
      %p83 = por %p81, %p82
      %p84 = scmp.ne.s32.totalorder %s75, %s76
      %p85 = scmp.eq.s32.totalorder %s23, 0
      %p86 = por %p84, %p85
      %p87 = scmp.ne.s32.totalorder %s75, %s76
      %p88 = scmp.eq.s32.totalorder %s24, 2
      %p89 = por %p87, %p88
      %p91 = scmp.ne.s32.totalorder %s76, %s90
      %p92 = scmp.eq.s32.totalorder %s24, 0
      %p93 = por %p91, %p92
      %s95 = sadd.s32 %s94, 1
      %p98 = scmp.eq.s32.totalorder %s18, 2
      %p99 = scmp.ne.s32.totalorder %s94, %s96
      %p100 = scmp.eq.s32.totalorder %s18, 0
      %p101 = por %p99, %p100
      %p102 = scmp.ne.s32.totalorder %s94, %s96
      %p103 = scmp.eq.s32.totalorder %s23, 2
      %p104 = por %p102, %p103
      %p105 = scmp.ne.s32.totalorder %s96, %s97
      %p106 = scmp.eq.s32.totalorder %s23, 0
      %p107 = por %p105, %p106
      %p108 = scmp.ne.s32.totalorder %s96, %s97
      %p109 = scmp.eq.s32.totalorder %s24, 2
      %p110 = por %p108, %p109
      %p112 = scmp.ne.s32.totalorder %s97, %s111
      %p113 = scmp.eq.s32.totalorder %s24, 0
      %p114 = por %p112, %p113
      %s116 = sadd.s32 %s115, 1
      %p119 = scmp.eq.s32.totalorder %s18, 2
      %p120 = scmp.ne.s32.totalorder %s115, %s117
      %p121 = scmp.eq.s32.totalorder %s18, 0
      %p122 = por %p120, %p121
      %p123 = scmp.ne.s32.totalorder %s115, %s117
      %p124 = scmp.eq.s32.totalorder %s23, 2
      %p125 = por %p123, %p124
      %p126 = scmp.ne.s32.totalorder %s117, %s118
      %p127 = scmp.eq.s32.totalorder %s23, 0
      %p128 = por %p126, %p127
      %p129 = scmp.ne.s32.totalorder %s117, %s118
      %p130 = scmp.eq.s32.totalorder %s24, 2
      %p131 = por %p129, %p130
      %p133 = scmp.ne.s32.totalorder %s118, %s132
      %p134 = scmp.eq.s32.totalorder %s24, 0
      %p135 = por %p133, %p134
      %s137 = sadd.s32 %s136, 1
      %p140 = scmp.eq.s32.totalorder %s18, 2
      %p141 = scmp.ne.s32.totalorder %s136, %s138
      %p142 = scmp.eq.s32.totalorder %s18, 0
      %p143 = por %p141, %p142
      %p144 = scmp.ne.s32.totalorder %s136, %s138
      %p145 = scmp.eq.s32.totalorder %s23, 2
      %p146 = por %p144, %p145
      %p147 = scmp.ne.s32.totalorder %s138, %s139
      %p148 = scmp.eq.s32.totalorder %s23, 0
      %p149 = por %p147, %p148
      %p150 = scmp.ne.s32.totalorder %s138, %s139
      %p151 = scmp.eq.s32.totalorder %s24, 2
      %p152 = por %p150, %p151
      %p154 = scmp.ne.s32.totalorder %s139, %s153
      %p155 = scmp.eq.s32.totalorder %s24, 0
      %p156 = por %p154, %p155
      %s158 = sadd.s32 %s157, 1
      %p161 = scmp.eq.s32.totalorder %s18, 2
      %p162 = scmp.ne.s32.totalorder %s157, %s159
      %p163 = scmp.eq.s32.totalorder %s18, 0
      %p164 = por %p162, %p163
      %p165 = scmp.ne.s32.totalorder %s157, %s159
      %p166 = scmp.eq.s32.totalorder %s23, 2
      %p167 = por %p165, %p166
      %p168 = scmp.ne.s32.totalorder %s159, %s160
      %p169 = scmp.eq.s32.totalorder %s23, 0
      %p170 = por %p168, %p169
      %p171 = scmp.ne.s32.totalorder %s159, %s160
      %p172 = scmp.eq.s32.totalorder %s24, 2
      %p173 = por %p171, %p172
      %p175 = scmp.ne.s32.totalorder %s160, %s174
      %p176 = scmp.eq.s32.totalorder %s24, 0
      %p177 = por %p175, %p176
      %s178 = ssub.s32 %s18, %s25
      %p179 = scmp.eq.s32.totalorder %s178, 0
      %s181 = sadd.s32 %s180, 1
      %s182 = scalar_select %p179, %s180, %s181
      %p185 = pneg %p179
      %p186 = scmp.eq.s32.totalorder %s18, 2
      %p187 = por %p185, %p186
      %p188 = scmp.ne.s32.totalorder %s180, %s183
      %p189 = scmp.eq.s32.totalorder %s18, 0
      %p190 = por %p188, %p189
      %p191 = scmp.ne.s32.totalorder %s180, %s183
      %p192 = scmp.eq.s32.totalorder %s23, 2
      %p193 = por %p191, %p192
      %p194 = scmp.ne.s32.totalorder %s183, %s184
      %p195 = scmp.eq.s32.totalorder %s23, 0
      %p196 = por %p194, %p195
      %p197 = scmp.ne.s32.totalorder %s183, %s184
      %p198 = scmp.eq.s32.totalorder %s24, 2
      %p199 = por %p197, %p198
      %p201 = scmp.ne.s32.totalorder %s184, %s200
      %p202 = scmp.eq.s32.totalorder %s24, 0
      %p203 = por %p201, %p202
      %p204 = scmp.le.s32.totalorder 1, %s18
      %p205 = scmp.lt.s32.totalorder %s18, 4
      %p206 = pnand %p204, %p205
      %p207 = pneg %p206
      // Predicated region
      $region9: #{tpu_custom_call.1} parent=5 // pred_check
        _
      $region10: #{tpu_custom_call.1} parent=5 // pred_check_branch
        %209 = sbr.rel (%p206) target = $region12
      $region11: #{tpu_custom_call.1} parent=5 // pred_region
        %s210 = ssub.s32 %s18, 1
        // Predicated region
        $region13: #{tpu_custom_call.1} parent=11 // pred_check
          %p211 = pneg %p65
        $region14: #{tpu_custom_call.1} parent=11 // pred_check_branch
          %213 = sbr.rel (%p211) target = $region16
        $region15: #{tpu_custom_call.1} parent=11 // pred_region
          %215 = vsyncadd [#allocation4], 0
          %s216 = sshll.u32 %s1, 4
          %s217 = int_to_ptr.hbm [resolvable:$true] %s216
          %s218 = sshll.u32 [#allocation3], 4
          %s219 = int_to_ptr.vmem [resolvable:$true] %s218
          %224 = dma.hbm_to_vmem [thread:$0]  %s217, 192, %s219, [#allocation4], 64, 64, 4
        $region16: #{tpu_custom_call.1} parent=11 // pred_fallthru
          _
        // Predicated region
        $region17: #{tpu_custom_call.1} parent=11 // pred_check
          %p225 = pneg %p86
        $region18: #{tpu_custom_call.1} parent=11 // pred_check_branch
          %227 = sbr.rel (%p225) target = $region20
        $region19: #{tpu_custom_call.1} parent=11 // pred_region
          %229 = vsyncadd [#allocation6], 0
          %s231 = sshll.u32 %s2, 4
          %s232 = int_to_ptr.hbm [resolvable:$true] %s231
          %s233 = sshll.u32 [#allocation5], 4
          %s234 = int_to_ptr.vmem [resolvable:$true] %s233
          %236 = dma.hbm_to_vmem [thread:$0]  %s232, 16, %s234, [#allocation6]
        $region20: #{tpu_custom_call.1} parent=11 // pred_fallthru
          _
        // Predicated region
        $region21: #{tpu_custom_call.1} parent=11 // pred_check
          %p237 = pneg %p107
        $region22: #{tpu_custom_call.1} parent=11 // pred_check_branch
          %239 = sbr.rel (%p237) target = $region24
        $region23: #{tpu_custom_call.1} parent=11 // pred_region
          %241 = vsyncadd [#allocation6], 0
          %s242 = sshll.u32 %s3, 4
          %s243 = int_to_ptr.hbm [resolvable:$true] %s242
          %s244 = sshll.u32 [#allocation7], 4
          %s245 = int_to_ptr.vmem [resolvable:$true] %s244
          %250 = dma.hbm_to_vmem [thread:$0]  %s243, 512, %s245, [#allocation6], 64, 64, 4
        $region24: #{tpu_custom_call.1} parent=11 // pred_fallthru
          _
        // Predicated region
        $region25: #{tpu_custom_call.1} parent=11 // pred_check
          %p251 = pneg %p128
        $region26: #{tpu_custom_call.1} parent=11 // pred_check_branch
          %253 = sbr.rel (%p251) target = $region28
        $region27: #{tpu_custom_call.1} parent=11 // pred_region
          %255 = vsyncadd [#allocation9], 0
          %s257 = sshll.u32 %s4, 4
          %s258 = int_to_ptr.hbm [resolvable:$true] %s257
          %s259 = sshll.u32 [#allocation8], 4
          %s260 = int_to_ptr.vmem [resolvable:$true] %s259
          %262 = dma.hbm_to_vmem [thread:$0]  %s258, 16, %s260, [#allocation9]
        $region28: #{tpu_custom_call.1} parent=11 // pred_fallthru
          _
        // Predicated region
        $region29: #{tpu_custom_call.1} parent=11 // pred_check
          %p263 = pneg %p149
        $region30: #{tpu_custom_call.1} parent=11 // pred_check_branch
          %265 = sbr.rel (%p263) target = $region32
        $region31: #{tpu_custom_call.1} parent=11 // pred_region
          %267 = vsyncadd [#allocation9], 0
          %s269 = sshll.u32 %s5, 4
          %s270 = int_to_ptr.hbm [resolvable:$true] %s269
          %s271 = sshll.u32 [#allocation10], 4
          %s272 = int_to_ptr.vmem [resolvable:$true] %s271
          %274 = dma.hbm_to_vmem [thread:$0]  %s270, 16, %s272, [#allocation9]
        $region32: #{tpu_custom_call.1} parent=11 // pred_fallthru
          _
        // Predicated region
        $region33: #{tpu_custom_call.1} parent=11 // pred_check
          %p275 = pneg %p170
        $region34: #{tpu_custom_call.1} parent=11 // pred_check_branch
          %277 = sbr.rel (%p275) target = $region36
        $region35: #{tpu_custom_call.1} parent=11 // pred_region
          _
        $region36: #{tpu_custom_call.1} parent=11 // pred_fallthru
          _
      $region12: #{tpu_custom_call.1} parent=5 // pred_fallthru
        _
      %p278 = scmp.lt.s32.totalorder %s18, 3
      // Predicated region
      $region37: #{tpu_custom_call.1} parent=5 // pred_check
        %p279 = pneg %p278
      $region38: #{tpu_custom_call.1} parent=5 // pred_check_branch
        %281 = sbr.rel (%p279) target = $region40
      $region39: #{tpu_custom_call.1} parent=5 // pred_region
        // Predicated region
        $region41: #{tpu_custom_call.1} parent=39 // pred_check
          %p282 = pneg %p38
        $region42: #{tpu_custom_call.1} parent=39 // pred_check_branch
          %284 = sbr.rel (%p282) target = $region44
        $region43: #{tpu_custom_call.1} parent=39 // pred_region
          %s285 = smul.u32 128, %s18
          %p286 = scmp.lt.s32.totalorder %s285, 383
          %s287 = scalar_select %p286, %s285, 383
          %s288 = smul.addr %s287, 4
          %s289 = scalar_lea.vmem %s0, %s288
          %s290 = smul.u32 128, %s18
        $region44: #{tpu_custom_call.1} parent=39 // pred_fallthru
          _
      $region40: #{tpu_custom_call.1} parent=5 // pred_fallthru
        _
      %p291 = scmp.le.s32.totalorder 1, %s18
      %p292 = scmp.lt.s32.totalorder %s18, 4
      %p293 = pnand %p291, %p292
      %p294 = pneg %p293
      // Predicated region
      $region45: #{tpu_custom_call.1} parent=5 // pred_check
        _
      $region46: #{tpu_custom_call.1} parent=5 // pred_check_branch
        %296 = sbr.rel (%p293) target = $region48
      $region47: #{tpu_custom_call.1} parent=5 // pred_region
        %s297 = ssub.s32 %s18, 1
        // Predicated region
        $region49: #{tpu_custom_call.1} parent=47 // pred_check
          %p298 = pneg %p65
        $region50: #{tpu_custom_call.1} parent=47 // pred_check_branch
          %300 = sbr.rel (%p298) target = $region52
        $region51: #{tpu_custom_call.1} parent=47 // pred_region
          %302 = dma.done [#allocation4], 192
        $region52: #{tpu_custom_call.1} parent=47 // pred_fallthru
          _
        // Predicated region
        $region53: #{tpu_custom_call.1} parent=47 // pred_check
          %p303 = pneg %p86
        $region54: #{tpu_custom_call.1} parent=47 // pred_check_branch
          %305 = sbr.rel (%p303) target = $region56
        $region55: #{tpu_custom_call.1} parent=47 // pred_region
          %307 = dma.done [#allocation6], 16
        $region56: #{tpu_custom_call.1} parent=47 // pred_fallthru
          _
        // Predicated region
        $region57: #{tpu_custom_call.1} parent=47 // pred_check
          %p308 = pneg %p107
        $region58: #{tpu_custom_call.1} parent=47 // pred_check_branch
          %310 = sbr.rel (%p308) target = $region60
        $region59: #{tpu_custom_call.1} parent=47 // pred_region
          %312 = dma.done [#allocation6], 512
        $region60: #{tpu_custom_call.1} parent=47 // pred_fallthru
          _
        // Predicated region
        $region61: #{tpu_custom_call.1} parent=47 // pred_check
          %p313 = pneg %p128
        $region62: #{tpu_custom_call.1} parent=47 // pred_check_branch
          %315 = sbr.rel (%p313) target = $region64
        $region63: #{tpu_custom_call.1} parent=47 // pred_region
          %317 = dma.done [#allocation9], 16
        $region64: #{tpu_custom_call.1} parent=47 // pred_fallthru
          _
        // Predicated region
        $region65: #{tpu_custom_call.1} parent=47 // pred_check
          %p318 = pneg %p149
        $region66: #{tpu_custom_call.1} parent=47 // pred_check_branch
          %320 = sbr.rel (%p318) target = $region68
        $region67: #{tpu_custom_call.1} parent=47 // pred_region
          %322 = dma.done [#allocation9], 16
        $region68: #{tpu_custom_call.1} parent=47 // pred_fallthru
          _
        %s323 = smul.u32 128, %s23
        %p324 = scmp.lt.s32.totalorder %s323, 383
        %s325 = scalar_select %p324, %s323, 383
        %s326 = smul.addr %s325, 4
        %s327 = scalar_lea.vmem %s0, %s326
        %p328 = pneg %p44
        %p329 = pneg %p41
        %p330 = pneg %p65
        %p331 = pneg %p62
        %p332 = pneg %p86
        %p333 = pneg %p83
        %p334 = pneg %p107
        %p335 = pneg %p104
        %p336 = pneg %p128
        %p337 = pneg %p125
        %p338 = pneg %p149
        %p339 = pneg %p146
        %p340 = pneg %p170
        %p341 = pneg %p167
        %p342 = pneg %p196
        %p343 = pneg %p193
        %s344 = smul.u32 128, %s23
        %p345 = scmp.lt.s32.totalorder %s344, 383
        %s346 = scalar_select %p345, %s344, 383
        %s347 = smul.addr %s346, 8
        %s348 = scalar_lea.vmem %s7, %s347
        %s349 = smul.u32 128, %s23
        %p350 = scmp.lt.s32.totalorder %s349, 383
        %s351 = scalar_select %p350, %s349, 383
        %s352 = smul.addr %s351, 4
        %s353 = scalar_lea.vmem %s0, %s352
        %s354 = smul.u32 128, %s23
        %s355 = smul.u32 128, %s23
        %p356 = scmp.lt.s32.totalorder %s355, 383
        %s357 = scalar_select %p356, %s355, 383
        %s358 = smul.addr %s357, 8
        %s359 = scalar_lea.vmem %s7, %s358
        %s360 = smul.u32 128, %s23
        %v362 = vld [vmem:[%s353] sm:$0xf]
        %v363 = vld [vmem:[%s353 + $0x4] sm:$0xf]
        %v364 = vld [vmem:[%s353 + $0x8] sm:$0xf]
        %v365 = vld [vmem:[%s353 + $0xc] sm:$0xf]
        %v366 = vld [vmem:[%s353 + $0x10] sm:$0xf]
        %v367 = vld [vmem:[%s353 + $0x14] sm:$0xf]
        %v368 = vld [vmem:[%s353 + $0x18] sm:$0xf]
        %v369 = vld [vmem:[%s353 + $0x1c] sm:$0xf]
        %v370 = vld [vmem:[%s353 + $0x20] sm:$0xf]
        %v371 = vld [vmem:[%s353 + $0x24] sm:$0xf]
        %v372 = vld [vmem:[%s353 + $0x28] sm:$0xf]
        %v373 = vld [vmem:[%s353 + $0x2c] sm:$0xf]
        %v374 = vld [vmem:[%s353 + $0x30] sm:$0xf]
        %v375 = vld [vmem:[%s353 + $0x34] sm:$0xf]
        %v376 = vld [vmem:[%s353 + $0x38] sm:$0xf]
        %v377 = vld [vmem:[%s353 + $0x3c] sm:$0xf]
        %v378 = vld [vmem:[%s353 + $0x40] sm:$0xf]
        %v379 = vld [vmem:[%s353 + $0x44] sm:$0xf]
        %v380 = vld [vmem:[%s353 + $0x48] sm:$0xf]
        %v381 = vld [vmem:[%s353 + $0x4c] sm:$0xf]
        %v382 = vld [vmem:[%s353 + $0x50] sm:$0xf]
        %v383 = vld [vmem:[%s353 + $0x54] sm:$0xf]
        %v384 = vld [vmem:[%s353 + $0x58] sm:$0xf]
        %v385 = vld [vmem:[%s353 + $0x5c] sm:$0xf]
        %v386 = vld [vmem:[%s353 + $0x60] sm:$0xf]
        %v387 = vld [vmem:[%s353 + $0x64] sm:$0xf]
        %v388 = vld [vmem:[%s353 + $0x68] sm:$0xf]
        %v389 = vld [vmem:[%s353 + $0x6c] sm:$0xf]
        %v390 = vld [vmem:[%s353 + $0x70] sm:$0xf]
        %v391 = vld [vmem:[%s353 + $0x74] sm:$0xf]
        %v392 = vld [vmem:[%s353 + $0x78] sm:$0xf]
        %v393 = vld [vmem:[%s353 + $0x7c] sm:$0xf]
        %v394 = vld [vmem:[%s353 + $0x80] sm:$0xf]
        %v395 = vld [vmem:[%s353 + $0x84] sm:$0xf]
        %v396 = vld [vmem:[%s353 + $0x88] sm:$0xf]
        %v397 = vld [vmem:[%s353 + $0x8c] sm:$0xf]
        %v398 = vld [vmem:[%s353 + $0x90] sm:$0xf]
        %v399 = vld [vmem:[%s353 + $0x94] sm:$0xf]
        %v400 = vld [vmem:[%s353 + $0x98] sm:$0xf]
        %v401 = vld [vmem:[%s353 + $0x9c] sm:$0xf]
        %v402 = vld [vmem:[%s353 + $0xa0] sm:$0xf]
        %v403 = vld [vmem:[%s353 + $0xa4] sm:$0xf]
        %v404 = vld [vmem:[%s353 + $0xa8] sm:$0xf]
        %v405 = vld [vmem:[%s353 + $0xac] sm:$0xf]
        %v406 = vld [vmem:[%s353 + $0xb0] sm:$0xf]
        %v407 = vld [vmem:[%s353 + $0xb4] sm:$0xf]
        %v408 = vld [vmem:[%s353 + $0xb8] sm:$0xf]
        %v409 = vld [vmem:[%s353 + $0xbc] sm:$0xf]
        %v410 = vld [vmem:[%s353 + $0xc0] sm:$0xf]
        %v411 = vld [vmem:[%s353 + $0xc4] sm:$0xf]
        %v412 = vld [vmem:[%s353 + $0xc8] sm:$0xf]
        %v413 = vld [vmem:[%s353 + $0xcc] sm:$0xf]
        %v414 = vld [vmem:[%s353 + $0xd0] sm:$0xf]
        %v415 = vld [vmem:[%s353 + $0xd4] sm:$0xf]
        %v416 = vld [vmem:[%s353 + $0xd8] sm:$0xf]
        %v417 = vld [vmem:[%s353 + $0xdc] sm:$0xf]
        %v418 = vld [vmem:[%s353 + $0xe0] sm:$0xf]
        %v419 = vld [vmem:[%s353 + $0xe4] sm:$0xf]
        %v420 = vld [vmem:[%s353 + $0xe8] sm:$0xf]
        %v421 = vld [vmem:[%s353 + $0xec] sm:$0xf]
        %v422 = vld [vmem:[%s353 + $0xf0] sm:$0xf]
        %v423 = vld [vmem:[%s353 + $0xf4] sm:$0xf]
        %v424 = vld [vmem:[%s353 + $0xf8] sm:$0xf]
        %v425 = vld [vmem:[%s353 + $0xfc] sm:$0xf]
        %v426 = vld [vmem:[%s353 + $0x100] sm:$0xf]
        %v427 = vld [vmem:[%s353 + $0x104] sm:$0xf]
        %v428 = vld [vmem:[%s353 + $0x108] sm:$0xf]
        %v429 = vld [vmem:[%s353 + $0x10c] sm:$0xf]
        %v430 = vld [vmem:[%s353 + $0x110] sm:$0xf]
        %v431 = vld [vmem:[%s353 + $0x114] sm:$0xf]
        %v432 = vld [vmem:[%s353 + $0x118] sm:$0xf]
        %v433 = vld [vmem:[%s353 + $0x11c] sm:$0xf]
        %v434 = vld [vmem:[%s353 + $0x120] sm:$0xf]
        %v435 = vld [vmem:[%s353 + $0x124] sm:$0xf]
        %v436 = vld [vmem:[%s353 + $0x128] sm:$0xf]
        %v437 = vld [vmem:[%s353 + $0x12c] sm:$0xf]
        %v438 = vld [vmem:[%s353 + $0x130] sm:$0xf]
        %v439 = vld [vmem:[%s353 + $0x134] sm:$0xf]
        %v440 = vld [vmem:[%s353 + $0x138] sm:$0xf]
        %v441 = vld [vmem:[%s353 + $0x13c] sm:$0xf]
        %v442 = vld [vmem:[%s353 + $0x140] sm:$0xf]
        %v443 = vld [vmem:[%s353 + $0x144] sm:$0xf]
        %v444 = vld [vmem:[%s353 + $0x148] sm:$0xf]
        %v445 = vld [vmem:[%s353 + $0x14c] sm:$0xf]
        %v446 = vld [vmem:[%s353 + $0x150] sm:$0xf]
        %v447 = vld [vmem:[%s353 + $0x154] sm:$0xf]
        %v448 = vld [vmem:[%s353 + $0x158] sm:$0xf]
        %v449 = vld [vmem:[%s353 + $0x15c] sm:$0xf]
        %v450 = vld [vmem:[%s353 + $0x160] sm:$0xf]
        %v451 = vld [vmem:[%s353 + $0x164] sm:$0xf]
        %v452 = vld [vmem:[%s353 + $0x168] sm:$0xf]
        %v453 = vld [vmem:[%s353 + $0x16c] sm:$0xf]
        %v454 = vld [vmem:[%s353 + $0x170] sm:$0xf]
        %v455 = vld [vmem:[%s353 + $0x174] sm:$0xf]
        %v456 = vld [vmem:[%s353 + $0x178] sm:$0xf]
        %v457 = vld [vmem:[%s353 + $0x17c] sm:$0xf]
        %v458 = vld [vmem:[%s353 + $0x180] sm:$0xf]
        %v459 = vld [vmem:[%s353 + $0x184] sm:$0xf]
        %v460 = vld [vmem:[%s353 + $0x188] sm:$0xf]
        %v461 = vld [vmem:[%s353 + $0x18c] sm:$0xf]
        %v462 = vld [vmem:[%s353 + $0x190] sm:$0xf]
        %v463 = vld [vmem:[%s353 + $0x194] sm:$0xf]
        %v464 = vld [vmem:[%s353 + $0x198] sm:$0xf]
        %v465 = vld [vmem:[%s353 + $0x19c] sm:$0xf]
        %v466 = vld [vmem:[%s353 + $0x1a0] sm:$0xf]
        %v467 = vld [vmem:[%s353 + $0x1a4] sm:$0xf]
        %v468 = vld [vmem:[%s353 + $0x1a8] sm:$0xf]
        %v469 = vld [vmem:[%s353 + $0x1ac] sm:$0xf]
        %v470 = vld [vmem:[%s353 + $0x1b0] sm:$0xf]
        %v471 = vld [vmem:[%s353 + $0x1b4] sm:$0xf]
        %v472 = vld [vmem:[%s353 + $0x1b8] sm:$0xf]
        %v473 = vld [vmem:[%s353 + $0x1bc] sm:$0xf]
        %v474 = vld [vmem:[%s353 + $0x1c0] sm:$0xf]
        %v475 = vld [vmem:[%s353 + $0x1c4] sm:$0xf]
        %v476 = vld [vmem:[%s353 + $0x1c8] sm:$0xf]
        %v477 = vld [vmem:[%s353 + $0x1cc] sm:$0xf]
        %v478 = vld [vmem:[%s353 + $0x1d0] sm:$0xf]
        %v479 = vld [vmem:[%s353 + $0x1d4] sm:$0xf]
        %v480 = vld [vmem:[%s353 + $0x1d8] sm:$0xf]
        %v481 = vld [vmem:[%s353 + $0x1dc] sm:$0xf]
        %v482 = vld [vmem:[%s353 + $0x1e0] sm:$0xf]
        %v483 = vld [vmem:[%s353 + $0x1e4] sm:$0xf]
        %v484 = vld [vmem:[%s353 + $0x1e8] sm:$0xf]
        %v485 = vld [vmem:[%s353 + $0x1ec] sm:$0xf]
        %v486 = vld [vmem:[%s353 + $0x1f0] sm:$0xf]
        %v487 = vld [vmem:[%s353 + $0x1f4] sm:$0xf]
        %v488 = vld [vmem:[%s353 + $0x1f8] sm:$0xf]
        %v489 = vld [vmem:[%s353 + $0x1fc] sm:$0xf]
        %v490 = vld [vmem:[#allocation3] sm:$0xf]
        %v491 = vld [vmem:[#allocation3 + $0x4] sm:$0xf]
        %v492 = vld [vmem:[#allocation3 + $0x8] sm:$0x3]
        %v493 = vld [vmem:[#allocation5] sm:$0x1]
        %v495 = vperm.slane %v493, 0
        %v625 = vunpack.c.l.b16 %v362
        %v626 = vunpack.c.l.b16 %v363
        %v627 = vunpack.c.l.b16 %v364
        %v628 = vunpack.c.l.b16 %v365
        %v629 = vunpack.c.l.b16 %v366
        %v630 = vunpack.c.l.b16 %v367
        %v631 = vunpack.c.l.b16 %v368
        %v632 = vunpack.c.l.b16 %v369
        %v633 = vunpack.c.l.b16 %v370
        %v634 = vunpack.c.l.b16 %v371
        %v635 = vunpack.c.l.b16 %v372
        %v636 = vunpack.c.l.b16 %v373
        %v637 = vunpack.c.l.b16 %v374
        %v638 = vunpack.c.l.b16 %v375
        %v639 = vunpack.c.l.b16 %v376
        %v640 = vunpack.c.l.b16 %v377
        %v641 = vunpack.c.l.b16 %v378
        %v642 = vunpack.c.l.b16 %v379
        %v643 = vunpack.c.l.b16 %v380
        %v644 = vunpack.c.l.b16 %v381
        %v645 = vunpack.c.l.b16 %v382
        %v646 = vunpack.c.l.b16 %v383
        %v647 = vunpack.c.l.b16 %v384
        %v648 = vunpack.c.l.b16 %v385
        %v649 = vunpack.c.l.b16 %v386
        %v650 = vunpack.c.l.b16 %v387
        %v651 = vunpack.c.l.b16 %v388
        %v652 = vunpack.c.l.b16 %v389
        %v653 = vunpack.c.l.b16 %v390
        %v654 = vunpack.c.l.b16 %v391
        %v655 = vunpack.c.l.b16 %v392
        %v656 = vunpack.c.l.b16 %v393
        %v657 = vunpack.c.l.b16 %v394
        %v658 = vunpack.c.l.b16 %v395
        %v659 = vunpack.c.l.b16 %v396
        %v660 = vunpack.c.l.b16 %v397
        %v661 = vunpack.c.l.b16 %v398
        %v662 = vunpack.c.l.b16 %v399
        %v663 = vunpack.c.l.b16 %v400
        %v664 = vunpack.c.l.b16 %v401
        %v665 = vunpack.c.l.b16 %v402
        %v666 = vunpack.c.l.b16 %v403
        %v667 = vunpack.c.l.b16 %v404
        %v668 = vunpack.c.l.b16 %v405
        %v669 = vunpack.c.l.b16 %v406
        %v670 = vunpack.c.l.b16 %v407
        %v671 = vunpack.c.l.b16 %v408
        %v672 = vunpack.c.l.b16 %v409
        %v673 = vunpack.c.l.b16 %v410
        %v674 = vunpack.c.l.b16 %v411
        %v675 = vunpack.c.l.b16 %v412
        %v676 = vunpack.c.l.b16 %v413
        %v677 = vunpack.c.l.b16 %v414
        %v678 = vunpack.c.l.b16 %v415
        %v679 = vunpack.c.l.b16 %v416
        %v680 = vunpack.c.l.b16 %v417
        %v681 = vunpack.c.l.b16 %v418
        %v682 = vunpack.c.l.b16 %v419
        %v683 = vunpack.c.l.b16 %v420
        %v684 = vunpack.c.l.b16 %v421
        %v685 = vunpack.c.l.b16 %v422
        %v686 = vunpack.c.l.b16 %v423
        %v687 = vunpack.c.l.b16 %v424
        %v688 = vunpack.c.l.b16 %v425
        %v689 = vunpack.c.l.b16 %v426
        %v690 = vunpack.c.l.b16 %v427
        %v691 = vunpack.c.l.b16 %v428
        %v692 = vunpack.c.l.b16 %v429
        %v693 = vunpack.c.l.b16 %v430
        %v694 = vunpack.c.l.b16 %v431
        %v695 = vunpack.c.l.b16 %v432
        %v696 = vunpack.c.l.b16 %v433
        %v697 = vunpack.c.l.b16 %v434
        %v698 = vunpack.c.l.b16 %v435
        %v699 = vunpack.c.l.b16 %v436
        %v700 = vunpack.c.l.b16 %v437
        %v701 = vunpack.c.l.b16 %v438
        %v702 = vunpack.c.l.b16 %v439
        %v703 = vunpack.c.l.b16 %v440
        %v704 = vunpack.c.l.b16 %v441
        %v705 = vunpack.c.l.b16 %v442
        %v706 = vunpack.c.l.b16 %v443
        %v707 = vunpack.c.l.b16 %v444
        %v708 = vunpack.c.l.b16 %v445
        %v709 = vunpack.c.l.b16 %v446
        %v710 = vunpack.c.l.b16 %v447
        %v711 = vunpack.c.l.b16 %v448
        %v712 = vunpack.c.l.b16 %v449
        %v713 = vunpack.c.l.b16 %v450
        %v714 = vunpack.c.l.b16 %v451
        %v715 = vunpack.c.l.b16 %v452
        %v716 = vunpack.c.l.b16 %v453
        %v717 = vunpack.c.l.b16 %v454
        %v718 = vunpack.c.l.b16 %v455
        %v719 = vunpack.c.l.b16 %v456
        %v720 = vunpack.c.l.b16 %v457
        %v721 = vunpack.c.l.b16 %v458
        %v722 = vunpack.c.l.b16 %v459
        %v723 = vunpack.c.l.b16 %v460
        %v724 = vunpack.c.l.b16 %v461
        %v725 = vunpack.c.l.b16 %v462
        %v726 = vunpack.c.l.b16 %v463
        %v727 = vunpack.c.l.b16 %v464
        %v728 = vunpack.c.l.b16 %v465
        %v729 = vunpack.c.l.b16 %v466
        %v730 = vunpack.c.l.b16 %v467
        %v731 = vunpack.c.l.b16 %v468
        %v732 = vunpack.c.l.b16 %v469
        %v733 = vunpack.c.l.b16 %v470
        %v734 = vunpack.c.l.b16 %v471
        %v735 = vunpack.c.l.b16 %v472
        %v736 = vunpack.c.l.b16 %v473
        %v737 = vunpack.c.l.b16 %v474
        %v738 = vunpack.c.l.b16 %v475
        %v739 = vunpack.c.l.b16 %v476
        %v740 = vunpack.c.l.b16 %v477
        %v741 = vunpack.c.l.b16 %v478
        %v742 = vunpack.c.l.b16 %v479
        %v743 = vunpack.c.l.b16 %v480
        %v744 = vunpack.c.l.b16 %v481
        %v745 = vunpack.c.l.b16 %v482
        %v746 = vunpack.c.l.b16 %v483
        %v747 = vunpack.c.l.b16 %v484
        %v748 = vunpack.c.l.b16 %v485
        %v749 = vunpack.c.l.b16 %v486
        %v750 = vunpack.c.l.b16 %v487
        %v751 = vunpack.c.l.b16 %v488
        %v752 = vunpack.c.l.b16 %v489
        %v753 = vpack.c.b16 %v626, %v625
        %v754 = vpack.c.b16 %v628, %v627
        %v755 = vpack.c.b16 %v630, %v629
        %v756 = vpack.c.b16 %v632, %v631
        %v757 = vpack.c.b16 %v634, %v633
        %v758 = vpack.c.b16 %v636, %v635
        %v759 = vpack.c.b16 %v638, %v637
        %v760 = vpack.c.b16 %v640, %v639
        %v761 = vpack.c.b16 %v642, %v641
        %v762 = vpack.c.b16 %v644, %v643
        %v763 = vpack.c.b16 %v646, %v645
        %v764 = vpack.c.b16 %v648, %v647
        %v765 = vpack.c.b16 %v650, %v649
        %v766 = vpack.c.b16 %v652, %v651
        %v767 = vpack.c.b16 %v654, %v653
        %v768 = vpack.c.b16 %v656, %v655
        %v769 = vpack.c.b16 %v658, %v657
        %v770 = vpack.c.b16 %v660, %v659
        %v771 = vpack.c.b16 %v662, %v661
        %v772 = vpack.c.b16 %v664, %v663
        %v773 = vpack.c.b16 %v666, %v665
        %v774 = vpack.c.b16 %v668, %v667
        %v775 = vpack.c.b16 %v670, %v669
        %v776 = vpack.c.b16 %v672, %v671
        %v777 = vpack.c.b16 %v674, %v673
        %v778 = vpack.c.b16 %v676, %v675
        %v779 = vpack.c.b16 %v678, %v677
        %v780 = vpack.c.b16 %v680, %v679
        %v781 = vpack.c.b16 %v682, %v681
        %v782 = vpack.c.b16 %v684, %v683
        %v783 = vpack.c.b16 %v686, %v685
        %v784 = vpack.c.b16 %v688, %v687
        %v785 = vpack.c.b16 %v690, %v689
        %v786 = vpack.c.b16 %v692, %v691
        %v787 = vpack.c.b16 %v694, %v693
        %v788 = vpack.c.b16 %v696, %v695
        %v789 = vpack.c.b16 %v698, %v697
        %v790 = vpack.c.b16 %v700, %v699
        %v791 = vpack.c.b16 %v702, %v701
        %v792 = vpack.c.b16 %v704, %v703
        %v793 = vpack.c.b16 %v706, %v705
        %v794 = vpack.c.b16 %v708, %v707
        %v795 = vpack.c.b16 %v710, %v709
        %v796 = vpack.c.b16 %v712, %v711
        %v797 = vpack.c.b16 %v714, %v713
        %v798 = vpack.c.b16 %v716, %v715
        %v799 = vpack.c.b16 %v718, %v717
        %v800 = vpack.c.b16 %v720, %v719
        %v801 = vpack.c.b16 %v722, %v721
        %v802 = vpack.c.b16 %v724, %v723
        %v803 = vpack.c.b16 %v726, %v725
        %v804 = vpack.c.b16 %v728, %v727
        %v805 = vpack.c.b16 %v730, %v729
        %v806 = vpack.c.b16 %v732, %v731
        %v807 = vpack.c.b16 %v734, %v733
        %v808 = vpack.c.b16 %v736, %v735
        %v809 = vpack.c.b16 %v738, %v737
        %v810 = vpack.c.b16 %v740, %v739
        %v811 = vpack.c.b16 %v742, %v741
        %v812 = vpack.c.b16 %v744, %v743
        %v813 = vpack.c.b16 %v746, %v745
        %v814 = vpack.c.b16 %v748, %v747
        %v815 = vpack.c.b16 %v750, %v749
        %v816 = vpack.c.b16 %v752, %v751
        %v820 = vunpack.c.l.b16 %v490
        %v821 = vunpack.c.l.b16 %v491
        %v822 = vunpack.c.l.b16 %v492
        %v823 = vpack.c.b16 %v821, %v820
        %v824 = vpack.c.b16 %v822, %v822
        %vm826 = vcmask 162816
        %v828 = vsel %vm826, %v753, 0
        %v831 = vsel %vm826, %v754, 0
        %v834 = vsel %vm826, %v755, 0
        %v837 = vsel %vm826, %v756, 0
        %v840 = vsel %vm826, %v757, 0
        %v843 = vsel %vm826, %v758, 0
        %v846 = vsel %vm826, %v759, 0
        %v849 = vsel %vm826, %v760, 0
        %v852 = vsel %vm826, %v761, 0
        %v855 = vsel %vm826, %v762, 0
        %v858 = vsel %vm826, %v763, 0
        %v861 = vsel %vm826, %v764, 0
        %v864 = vsel %vm826, %v765, 0
        %v867 = vsel %vm826, %v766, 0
        %v870 = vsel %vm826, %v767, 0
        %v873 = vsel %vm826, %v768, 0
        %v876 = vsel %vm826, %v769, 0
        %v879 = vsel %vm826, %v770, 0
        %v882 = vsel %vm826, %v771, 0
        %v885 = vsel %vm826, %v772, 0
        %v888 = vsel %vm826, %v773, 0
        %v891 = vsel %vm826, %v774, 0
        %v894 = vsel %vm826, %v775, 0
        %v897 = vsel %vm826, %v776, 0
        %v900 = vsel %vm826, %v777, 0
        %v903 = vsel %vm826, %v778, 0
        %v906 = vsel %vm826, %v779, 0
        %v909 = vsel %vm826, %v780, 0
        %v912 = vsel %vm826, %v781, 0
        %v915 = vsel %vm826, %v782, 0
        %v918 = vsel %vm826, %v783, 0
        %v921 = vsel %vm826, %v784, 0
        %v924 = vsel %vm826, %v785, 0
        %v927 = vsel %vm826, %v786, 0
        %v930 = vsel %vm826, %v787, 0
        %v933 = vsel %vm826, %v788, 0
        %v936 = vsel %vm826, %v789, 0
        %v939 = vsel %vm826, %v790, 0
        %v942 = vsel %vm826, %v791, 0
        %v945 = vsel %vm826, %v792, 0
        %v948 = vsel %vm826, %v793, 0
        %v951 = vsel %vm826, %v794, 0
        %v954 = vsel %vm826, %v795, 0
        %v957 = vsel %vm826, %v796, 0
        %v960 = vsel %vm826, %v797, 0
        %v963 = vsel %vm826, %v798, 0
        %v966 = vsel %vm826, %v799, 0
        %v969 = vsel %vm826, %v800, 0
        %v972 = vsel %vm826, %v801, 0
        %v975 = vsel %vm826, %v802, 0
        %v978 = vsel %vm826, %v803, 0
        %v981 = vsel %vm826, %v804, 0
        %v984 = vsel %vm826, %v805, 0
        %v987 = vsel %vm826, %v806, 0
        %v990 = vsel %vm826, %v807, 0
        %v993 = vsel %vm826, %v808, 0
        %v996 = vsel %vm826, %v809, 0
        %v999 = vsel %vm826, %v810, 0
        %v1002 = vsel %vm826, %v811, 0
        %v1005 = vsel %vm826, %v812, 0
        %v1008 = vsel %vm826, %v813, 0
        %v1011 = vsel %vm826, %v814, 0
        %v1014 = vsel %vm826, %v815, 0
        %v1017 = vsel %vm826, %v816, 0
        %vm1019 = vcmask 1041408
        %v1021 = vsel %vm1019, %v824, 0
        %1023 = vmatpush.bf16.msra.mxu0 0
        %1024 = vmatpush.bf16.msra.mxu0 0
        %1025 = vmatpush.bf16.msra.mxu0 0
        %1026 = vmatpush.bf16.msra.mxu0 0
        %1027 = vmatpush.bf16.msra.mxu0 0
        %1028 = vmatpush.bf16.msra.mxu0 0
        %1029 = vmatpush.bf16.msra.mxu0 %v1021
        %1030 = vmatpush.bf16.msra.mxu0 %v823
        %1031 = vmatmul.bf16.gmra.mxu0 %v828
        %v1032 = vpop.f32.mrf.mxu0
        %v1033 = vadd.f32 %v495, %v1032
        %v1034 = vpop.f32.mrf.mxu0
        %v1035 = vadd.f32 %v495, %v1034
        %1036 = vmatmul.bf16.gmra.mxu0 %v831
        %v1037 = vpop.f32.mrf.mxu0
        %v1038 = vadd.f32 %v495, %v1037
        %v1039 = vpop.f32.mrf.mxu0
        %v1040 = vadd.f32 %v495, %v1039
        %1041 = vmatmul.bf16.gmra.mxu0 %v834
        %v1042 = vpop.f32.mrf.mxu0
        %v1043 = vadd.f32 %v495, %v1042
        %v1044 = vpop.f32.mrf.mxu0
        %v1045 = vadd.f32 %v495, %v1044
        %1046 = vmatmul.bf16.gmra.mxu0 %v837
        %v1047 = vpop.f32.mrf.mxu0
        %v1048 = vadd.f32 %v495, %v1047
        %v1049 = vpop.f32.mrf.mxu0
        %v1050 = vadd.f32 %v495, %v1049
        %1051 = vmatmul.bf16.gmra.mxu0 %v840
        %v1052 = vpop.f32.mrf.mxu0
        %v1053 = vadd.f32 %v495, %v1052
        %v1054 = vpop.f32.mrf.mxu0
        %v1055 = vadd.f32 %v495, %v1054
        %1056 = vmatmul.bf16.gmra.mxu0 %v843
        %v1057 = vpop.f32.mrf.mxu0
        %v1058 = vadd.f32 %v495, %v1057
        %v1059 = vpop.f32.mrf.mxu0
        %v1060 = vadd.f32 %v495, %v1059
        %1061 = vmatmul.bf16.gmra.mxu0 %v846
        %v1062 = vpop.f32.mrf.mxu0
        %v1063 = vadd.f32 %v495, %v1062
        %v1064 = vpop.f32.mrf.mxu0
        %v1065 = vadd.f32 %v495, %v1064
        %1066 = vmatmul.bf16.gmra.mxu0 %v849
        %v1067 = vpop.f32.mrf.mxu0
        %v1068 = vadd.f32 %v495, %v1067
        %v1069 = vpop.f32.mrf.mxu0
        %v1070 = vadd.f32 %v495, %v1069
        %1071 = vmatmul.bf16.gmra.mxu0 %v852
        %v1072 = vpop.f32.mrf.mxu0
        %v1073 = vadd.f32 %v495, %v1072
        %v1074 = vpop.f32.mrf.mxu0
        %v1075 = vadd.f32 %v495, %v1074
        %1076 = vmatmul.bf16.gmra.mxu0 %v855
        %v1077 = vpop.f32.mrf.mxu0
        %v1078 = vadd.f32 %v495, %v1077
        %v1079 = vpop.f32.mrf.mxu0
        %v1080 = vadd.f32 %v495, %v1079
        %1081 = vmatmul.bf16.gmra.mxu0 %v858
        %v1082 = vpop.f32.mrf.mxu0
        %v1083 = vadd.f32 %v495, %v1082
        %v1084 = vpop.f32.mrf.mxu0
        %v1085 = vadd.f32 %v495, %v1084
        %1086 = vmatmul.bf16.gmra.mxu0 %v861
        %v1087 = vpop.f32.mrf.mxu0
        %v1088 = vadd.f32 %v495, %v1087
        %v1089 = vpop.f32.mrf.mxu0
        %v1090 = vadd.f32 %v495, %v1089
        %1091 = vmatmul.bf16.gmra.mxu0 %v864
        %v1092 = vpop.f32.mrf.mxu0
        %v1093 = vadd.f32 %v495, %v1092
        %v1094 = vpop.f32.mrf.mxu0
        %v1095 = vadd.f32 %v495, %v1094
        %1096 = vmatmul.bf16.gmra.mxu0 %v867
        %v1097 = vpop.f32.mrf.mxu0
        %v1098 = vadd.f32 %v495, %v1097
        %v1099 = vpop.f32.mrf.mxu0
        %v1100 = vadd.f32 %v495, %v1099
        %1101 = vmatmul.bf16.gmra.mxu0 %v870
        %v1102 = vpop.f32.mrf.mxu0
        %v1103 = vadd.f32 %v495, %v1102
        %v1104 = vpop.f32.mrf.mxu0
        %v1105 = vadd.f32 %v495, %v1104
        %1106 = vmatmul.bf16.gmra.mxu0 %v873
        %v1107 = vpop.f32.mrf.mxu0
        %v1108 = vadd.f32 %v495, %v1107
        %v1109 = vpop.f32.mrf.mxu0
        %v1110 = vadd.f32 %v495, %v1109
        %1111 = vmatmul.bf16.gmra.mxu0 %v876
        %v1112 = vpop.f32.mrf.mxu0
        %v1113 = vadd.f32 %v495, %v1112
        %v1114 = vpop.f32.mrf.mxu0
        %v1115 = vadd.f32 %v495, %v1114
        %1116 = vmatmul.bf16.gmra.mxu0 %v879
        %v1117 = vpop.f32.mrf.mxu0
        %v1118 = vadd.f32 %v495, %v1117
        %v1119 = vpop.f32.mrf.mxu0
        %v1120 = vadd.f32 %v495, %v1119
        %1121 = vmatmul.bf16.gmra.mxu0 %v882
        %v1122 = vpop.f32.mrf.mxu0
        %v1123 = vadd.f32 %v495, %v1122
        %v1124 = vpop.f32.mrf.mxu0
        %v1125 = vadd.f32 %v495, %v1124
        %1126 = vmatmul.bf16.gmra.mxu0 %v885
        %v1127 = vpop.f32.mrf.mxu0
        %v1128 = vadd.f32 %v495, %v1127
        %v1129 = vpop.f32.mrf.mxu0
        %v1130 = vadd.f32 %v495, %v1129
        %1131 = vmatmul.bf16.gmra.mxu0 %v888
        %v1132 = vpop.f32.mrf.mxu0
        %v1133 = vadd.f32 %v495, %v1132
        %v1134 = vpop.f32.mrf.mxu0
        %v1135 = vadd.f32 %v495, %v1134
        %1136 = vmatmul.bf16.gmra.mxu0 %v891
        %v1137 = vpop.f32.mrf.mxu0
        %v1138 = vadd.f32 %v495, %v1137
        %v1139 = vpop.f32.mrf.mxu0
        %v1140 = vadd.f32 %v495, %v1139
        %1141 = vmatmul.bf16.gmra.mxu0 %v894
        %v1142 = vpop.f32.mrf.mxu0
        %v1143 = vadd.f32 %v495, %v1142
        %v1144 = vpop.f32.mrf.mxu0
        %v1145 = vadd.f32 %v495, %v1144
        %1146 = vmatmul.bf16.gmra.mxu0 %v897
        %v1147 = vpop.f32.mrf.mxu0
        %v1148 = vadd.f32 %v495, %v1147
        %v1149 = vpop.f32.mrf.mxu0
        %v1150 = vadd.f32 %v495, %v1149
        %1151 = vmatmul.bf16.gmra.mxu0 %v900
        %v1152 = vpop.f32.mrf.mxu0
        %v1153 = vadd.f32 %v495, %v1152
        %v1154 = vpop.f32.mrf.mxu0
        %v1155 = vadd.f32 %v495, %v1154
        %1156 = vmatmul.bf16.gmra.mxu0 %v903
        %v1157 = vpop.f32.mrf.mxu0
        %v1158 = vadd.f32 %v495, %v1157
        %v1159 = vpop.f32.mrf.mxu0
        %v1160 = vadd.f32 %v495, %v1159
        %1161 = vmatmul.bf16.gmra.mxu0 %v906
        %v1162 = vpop.f32.mrf.mxu0
        %v1163 = vadd.f32 %v495, %v1162
        %v1164 = vpop.f32.mrf.mxu0
        %v1165 = vadd.f32 %v495, %v1164
        %1166 = vmatmul.bf16.gmra.mxu0 %v909
        %v1167 = vpop.f32.mrf.mxu0
        %v1168 = vadd.f32 %v495, %v1167
        %v1169 = vpop.f32.mrf.mxu0
        %v1170 = vadd.f32 %v495, %v1169
        %1171 = vmatmul.bf16.gmra.mxu0 %v912
        %v1172 = vpop.f32.mrf.mxu0
        %v1173 = vadd.f32 %v495, %v1172
        %v1174 = vpop.f32.mrf.mxu0
        %v1175 = vadd.f32 %v495, %v1174
        %1176 = vmatmul.bf16.gmra.mxu0 %v915
        %v1177 = vpop.f32.mrf.mxu0
        %v1178 = vadd.f32 %v495, %v1177
        %v1179 = vpop.f32.mrf.mxu0
        %v1180 = vadd.f32 %v495, %v1179
        %1181 = vmatmul.bf16.gmra.mxu0 %v918
        %v1182 = vpop.f32.mrf.mxu0
        %v1183 = vadd.f32 %v495, %v1182
        %v1184 = vpop.f32.mrf.mxu0
        %v1185 = vadd.f32 %v495, %v1184
        %1186 = vmatmul.bf16.gmra.mxu0 %v921
        %v1187 = vpop.f32.mrf.mxu0
        %v1188 = vadd.f32 %v495, %v1187
        %v1189 = vpop.f32.mrf.mxu0
        %v1190 = vadd.f32 %v495, %v1189
        %1191 = vmatmul.bf16.gmra.mxu0 %v924
        %v1192 = vpop.f32.mrf.mxu0
        %v1193 = vadd.f32 %v495, %v1192
        %v1194 = vpop.f32.mrf.mxu0
        %v1195 = vadd.f32 %v495, %v1194
        %1196 = vmatmul.bf16.gmra.mxu0 %v927
        %v1197 = vpop.f32.mrf.mxu0
        %v1198 = vadd.f32 %v495, %v1197
        %v1199 = vpop.f32.mrf.mxu0
        %v1200 = vadd.f32 %v495, %v1199
        %1201 = vmatmul.bf16.gmra.mxu0 %v930
        %v1202 = vpop.f32.mrf.mxu0
        %v1203 = vadd.f32 %v495, %v1202
        %v1204 = vpop.f32.mrf.mxu0
        %v1205 = vadd.f32 %v495, %v1204
        %1206 = vmatmul.bf16.gmra.mxu0 %v933
        %v1207 = vpop.f32.mrf.mxu0
        %v1208 = vadd.f32 %v495, %v1207
        %v1209 = vpop.f32.mrf.mxu0
        %v1210 = vadd.f32 %v495, %v1209
        %1211 = vmatmul.bf16.gmra.mxu0 %v936
        %v1212 = vpop.f32.mrf.mxu0
        %v1213 = vadd.f32 %v495, %v1212
        %v1214 = vpop.f32.mrf.mxu0
        %v1215 = vadd.f32 %v495, %v1214
        %1216 = vmatmul.bf16.gmra.mxu0 %v939
        %v1217 = vpop.f32.mrf.mxu0
        %v1218 = vadd.f32 %v495, %v1217
        %v1219 = vpop.f32.mrf.mxu0
        %v1220 = vadd.f32 %v495, %v1219
        %1221 = vmatmul.bf16.gmra.mxu0 %v942
        %v1222 = vpop.f32.mrf.mxu0
        %v1223 = vadd.f32 %v495, %v1222
        %v1224 = vpop.f32.mrf.mxu0
        %v1225 = vadd.f32 %v495, %v1224
        %1226 = vmatmul.bf16.gmra.mxu0 %v945
        %v1227 = vpop.f32.mrf.mxu0
        %v1228 = vadd.f32 %v495, %v1227
        %v1229 = vpop.f32.mrf.mxu0
        %v1230 = vadd.f32 %v495, %v1229
        %1231 = vmatmul.bf16.gmra.mxu0 %v948
        %v1232 = vpop.f32.mrf.mxu0
        %v1233 = vadd.f32 %v495, %v1232
        %v1234 = vpop.f32.mrf.mxu0
        %v1235 = vadd.f32 %v495, %v1234
        %1236 = vmatmul.bf16.gmra.mxu0 %v951
        %v1237 = vpop.f32.mrf.mxu0
        %v1238 = vadd.f32 %v495, %v1237
        %v1239 = vpop.f32.mrf.mxu0
        %v1240 = vadd.f32 %v495, %v1239
        %1241 = vmatmul.bf16.gmra.mxu0 %v954
        %v1242 = vpop.f32.mrf.mxu0
        %v1243 = vadd.f32 %v495, %v1242
        %v1244 = vpop.f32.mrf.mxu0
        %v1245 = vadd.f32 %v495, %v1244
        %1246 = vmatmul.bf16.gmra.mxu0 %v957
        %v1247 = vpop.f32.mrf.mxu0
        %v1248 = vadd.f32 %v495, %v1247
        %v1249 = vpop.f32.mrf.mxu0
        %v1250 = vadd.f32 %v495, %v1249
        %1251 = vmatmul.bf16.gmra.mxu0 %v960
        %v1252 = vpop.f32.mrf.mxu0
        %v1253 = vadd.f32 %v495, %v1252
        %v1254 = vpop.f32.mrf.mxu0
        %v1255 = vadd.f32 %v495, %v1254
        %1256 = vmatmul.bf16.gmra.mxu0 %v963
        %v1257 = vpop.f32.mrf.mxu0
        %v1258 = vadd.f32 %v495, %v1257
        %v1259 = vpop.f32.mrf.mxu0
        %v1260 = vadd.f32 %v495, %v1259
        %1261 = vmatmul.bf16.gmra.mxu0 %v966
        %v1262 = vpop.f32.mrf.mxu0
        %v1263 = vadd.f32 %v495, %v1262
        %v1264 = vpop.f32.mrf.mxu0
        %v1265 = vadd.f32 %v495, %v1264
        %1266 = vmatmul.bf16.gmra.mxu0 %v969
        %v1267 = vpop.f32.mrf.mxu0
        %v1268 = vadd.f32 %v495, %v1267
        %v1269 = vpop.f32.mrf.mxu0
        %v1270 = vadd.f32 %v495, %v1269
        %1271 = vmatmul.bf16.gmra.mxu0 %v972
        %v1272 = vpop.f32.mrf.mxu0
        %v1273 = vadd.f32 %v495, %v1272
        %v1274 = vpop.f32.mrf.mxu0
        %v1275 = vadd.f32 %v495, %v1274
        %1276 = vmatmul.bf16.gmra.mxu0 %v975
        %v1277 = vpop.f32.mrf.mxu0
        %v1278 = vadd.f32 %v495, %v1277
        %v1279 = vpop.f32.mrf.mxu0
        %v1280 = vadd.f32 %v495, %v1279
        %1281 = vmatmul.bf16.gmra.mxu0 %v978
        %v1282 = vpop.f32.mrf.mxu0
        %v1283 = vadd.f32 %v495, %v1282
        %v1284 = vpop.f32.mrf.mxu0
        %v1285 = vadd.f32 %v495, %v1284
        %1286 = vmatmul.bf16.gmra.mxu0 %v981
        %v1287 = vpop.f32.mrf.mxu0
        %v1288 = vadd.f32 %v495, %v1287
        %v1289 = vpop.f32.mrf.mxu0
        %v1290 = vadd.f32 %v495, %v1289
        %1291 = vmatmul.bf16.gmra.mxu0 %v984
        %v1292 = vpop.f32.mrf.mxu0
        %v1293 = vadd.f32 %v495, %v1292
        %v1294 = vpop.f32.mrf.mxu0
        %v1295 = vadd.f32 %v495, %v1294
        %1296 = vmatmul.bf16.gmra.mxu0 %v987
        %v1297 = vpop.f32.mrf.mxu0
        %v1298 = vadd.f32 %v495, %v1297
        %v1299 = vpop.f32.mrf.mxu0
        %v1300 = vadd.f32 %v495, %v1299
        %1301 = vmatmul.bf16.gmra.mxu0 %v990
        %v1302 = vpop.f32.mrf.mxu0
        %v1303 = vadd.f32 %v495, %v1302
        %v1304 = vpop.f32.mrf.mxu0
        %v1305 = vadd.f32 %v495, %v1304
        %1306 = vmatmul.bf16.gmra.mxu0 %v993
        %v1307 = vpop.f32.mrf.mxu0
        %v1308 = vadd.f32 %v495, %v1307
        %v1309 = vpop.f32.mrf.mxu0
        %v1310 = vadd.f32 %v495, %v1309
        %1311 = vmatmul.bf16.gmra.mxu0 %v996
        %v1312 = vpop.f32.mrf.mxu0
        %v1313 = vadd.f32 %v495, %v1312
        %v1314 = vpop.f32.mrf.mxu0
        %v1315 = vadd.f32 %v495, %v1314
        %1316 = vmatmul.bf16.gmra.mxu0 %v999
        %v1317 = vpop.f32.mrf.mxu0
        %v1318 = vadd.f32 %v495, %v1317
        %v1319 = vpop.f32.mrf.mxu0
        %v1320 = vadd.f32 %v495, %v1319
        %1321 = vmatmul.bf16.gmra.mxu0 %v1002
        %v1322 = vpop.f32.mrf.mxu0
        %v1323 = vadd.f32 %v495, %v1322
        %v1324 = vpop.f32.mrf.mxu0
        %v1325 = vadd.f32 %v495, %v1324
        %1326 = vmatmul.bf16.gmra.mxu0 %v1005
        %v1327 = vpop.f32.mrf.mxu0
        %v1328 = vadd.f32 %v495, %v1327
        %v1329 = vpop.f32.mrf.mxu0
        %v1330 = vadd.f32 %v495, %v1329
        %1331 = vmatmul.bf16.gmra.mxu0 %v1008
        %v1332 = vpop.f32.mrf.mxu0
        %v1333 = vadd.f32 %v495, %v1332
        %v1334 = vpop.f32.mrf.mxu0
        %v1335 = vadd.f32 %v495, %v1334
        %1336 = vmatmul.bf16.gmra.mxu0 %v1011
        %v1337 = vpop.f32.mrf.mxu0
        %v1338 = vadd.f32 %v495, %v1337
        %v1339 = vpop.f32.mrf.mxu0
        %v1340 = vadd.f32 %v495, %v1339
        %1341 = vmatmul.bf16.gmra.mxu0 %v1014
        %v1342 = vpop.f32.mrf.mxu0
        %v1343 = vadd.f32 %v495, %v1342
        %v1344 = vpop.f32.mrf.mxu0
        %v1345 = vadd.f32 %v495, %v1344
        %1346 = vmatmul.bf16.gmra.mxu0 %v1017
        %v1347 = vpop.f32.mrf.mxu0
        %v1348 = vadd.f32 %v495, %v1347
        %v1349 = vpop.f32.mrf.mxu0
        %v1350 = vadd.f32 %v495, %v1349
        %1351 = vdwg.mxu0
        %v1352 = vmax.f32 %v1033, 0.0
        %v1353 = vmax.f32 %v1035, 0.0
        %v1354 = vmax.f32 %v1038, 0.0
        %v1355 = vmax.f32 %v1040, 0.0
        %v1356 = vmax.f32 %v1043, 0.0
        %v1357 = vmax.f32 %v1045, 0.0
        %v1358 = vmax.f32 %v1048, 0.0
        %v1359 = vmax.f32 %v1050, 0.0
        %v1360 = vmax.f32 %v1053, 0.0
        %v1361 = vmax.f32 %v1055, 0.0
        %v1362 = vmax.f32 %v1058, 0.0
        %v1363 = vmax.f32 %v1060, 0.0
        %v1364 = vmax.f32 %v1063, 0.0
        %v1365 = vmax.f32 %v1065, 0.0
        %v1366 = vmax.f32 %v1068, 0.0
        %v1367 = vmax.f32 %v1070, 0.0
        %v1368 = vmax.f32 %v1073, 0.0
        %v1369 = vmax.f32 %v1075, 0.0
        %v1370 = vmax.f32 %v1078, 0.0
        %v1371 = vmax.f32 %v1080, 0.0
        %v1372 = vmax.f32 %v1083, 0.0
        %v1373 = vmax.f32 %v1085, 0.0
        %v1374 = vmax.f32 %v1088, 0.0
        %v1375 = vmax.f32 %v1090, 0.0
        %v1376 = vmax.f32 %v1093, 0.0
        %v1377 = vmax.f32 %v1095, 0.0
        %v1378 = vmax.f32 %v1098, 0.0
        %v1379 = vmax.f32 %v1100, 0.0
        %v1380 = vmax.f32 %v1103, 0.0
        %v1381 = vmax.f32 %v1105, 0.0
        %v1382 = vmax.f32 %v1108, 0.0
        %v1383 = vmax.f32 %v1110, 0.0
        %v1384 = vmax.f32 %v1113, 0.0
        %v1385 = vmax.f32 %v1115, 0.0
        %v1386 = vmax.f32 %v1118, 0.0
        %v1387 = vmax.f32 %v1120, 0.0
        %v1388 = vmax.f32 %v1123, 0.0
        %v1389 = vmax.f32 %v1125, 0.0
        %v1390 = vmax.f32 %v1128, 0.0
        %v1391 = vmax.f32 %v1130, 0.0
        %v1392 = vmax.f32 %v1133, 0.0
        %v1393 = vmax.f32 %v1135, 0.0
        %v1394 = vmax.f32 %v1138, 0.0
        %v1395 = vmax.f32 %v1140, 0.0
        %v1396 = vmax.f32 %v1143, 0.0
        %v1397 = vmax.f32 %v1145, 0.0
        %v1398 = vmax.f32 %v1148, 0.0
        %v1399 = vmax.f32 %v1150, 0.0
        %v1400 = vmax.f32 %v1153, 0.0
        %v1401 = vmax.f32 %v1155, 0.0
        %v1402 = vmax.f32 %v1158, 0.0
        %v1403 = vmax.f32 %v1160, 0.0
        %v1404 = vmax.f32 %v1163, 0.0
        %v1405 = vmax.f32 %v1165, 0.0
        %v1406 = vmax.f32 %v1168, 0.0
        %v1407 = vmax.f32 %v1170, 0.0
        %v1408 = vmax.f32 %v1173, 0.0
        %v1409 = vmax.f32 %v1175, 0.0
        %v1410 = vmax.f32 %v1178, 0.0
        %v1411 = vmax.f32 %v1180, 0.0
        %v1412 = vmax.f32 %v1183, 0.0
        %v1413 = vmax.f32 %v1185, 0.0
        %v1414 = vmax.f32 %v1188, 0.0
        %v1415 = vmax.f32 %v1190, 0.0
        %v1416 = vmax.f32 %v1193, 0.0
        %v1417 = vmax.f32 %v1195, 0.0
        %v1418 = vmax.f32 %v1198, 0.0
        %v1419 = vmax.f32 %v1200, 0.0
        %v1420 = vmax.f32 %v1203, 0.0
        %v1421 = vmax.f32 %v1205, 0.0
        %v1422 = vmax.f32 %v1208, 0.0
        %v1423 = vmax.f32 %v1210, 0.0
        %v1424 = vmax.f32 %v1213, 0.0
        %v1425 = vmax.f32 %v1215, 0.0
        %v1426 = vmax.f32 %v1218, 0.0
        %v1427 = vmax.f32 %v1220, 0.0
        %v1428 = vmax.f32 %v1223, 0.0
        %v1429 = vmax.f32 %v1225, 0.0
        %v1430 = vmax.f32 %v1228, 0.0
        %v1431 = vmax.f32 %v1230, 0.0
        %v1432 = vmax.f32 %v1233, 0.0
        %v1433 = vmax.f32 %v1235, 0.0
        %v1434 = vmax.f32 %v1238, 0.0
        %v1435 = vmax.f32 %v1240, 0.0
        %v1436 = vmax.f32 %v1243, 0.0
        %v1437 = vmax.f32 %v1245, 0.0
        %v1438 = vmax.f32 %v1248, 0.0
        %v1439 = vmax.f32 %v1250, 0.0
        %v1440 = vmax.f32 %v1253, 0.0
        %v1441 = vmax.f32 %v1255, 0.0
        %v1442 = vmax.f32 %v1258, 0.0
        %v1443 = vmax.f32 %v1260, 0.0
        %v1444 = vmax.f32 %v1263, 0.0
        %v1445 = vmax.f32 %v1265, 0.0
        %v1446 = vmax.f32 %v1268, 0.0
        %v1447 = vmax.f32 %v1270, 0.0
        %v1448 = vmax.f32 %v1273, 0.0
        %v1449 = vmax.f32 %v1275, 0.0
        %v1450 = vmax.f32 %v1278, 0.0
        %v1451 = vmax.f32 %v1280, 0.0
        %v1452 = vmax.f32 %v1283, 0.0
        %v1453 = vmax.f32 %v1285, 0.0
        %v1454 = vmax.f32 %v1288, 0.0
        %v1455 = vmax.f32 %v1290, 0.0
        %v1456 = vmax.f32 %v1293, 0.0
        %v1457 = vmax.f32 %v1295, 0.0
        %v1458 = vmax.f32 %v1298, 0.0
        %v1459 = vmax.f32 %v1300, 0.0
        %v1460 = vmax.f32 %v1303, 0.0
        %v1461 = vmax.f32 %v1305, 0.0
        %v1462 = vmax.f32 %v1308, 0.0
        %v1463 = vmax.f32 %v1310, 0.0
        %v1464 = vmax.f32 %v1313, 0.0
        %v1465 = vmax.f32 %v1315, 0.0
        %v1466 = vmax.f32 %v1318, 0.0
        %v1467 = vmax.f32 %v1320, 0.0
        %v1468 = vmax.f32 %v1323, 0.0
        %v1469 = vmax.f32 %v1325, 0.0
        %v1470 = vmax.f32 %v1328, 0.0
        %v1471 = vmax.f32 %v1330, 0.0
        %v1472 = vmax.f32 %v1333, 0.0
        %v1473 = vmax.f32 %v1335, 0.0
        %v1474 = vmax.f32 %v1338, 0.0
        %v1475 = vmax.f32 %v1340, 0.0
        %v1476 = vmax.f32 %v1343, 0.0
        %v1477 = vmax.f32 %v1345, 0.0
        %v1478 = vmax.f32 %v1348, 0.0
        %v1479 = vmax.f32 %v1350, 0.0
        %v1480 = vpack.c.bf16 %v1353, %v1352
        %v1481 = vpack.c.bf16 %v1355, %v1354
        %v1482 = vpack.c.bf16 %v1357, %v1356
        %v1483 = vpack.c.bf16 %v1359, %v1358
        %v1484 = vpack.c.bf16 %v1361, %v1360
        %v1485 = vpack.c.bf16 %v1363, %v1362
        %v1486 = vpack.c.bf16 %v1365, %v1364
        %v1487 = vpack.c.bf16 %v1367, %v1366
        %v1488 = vpack.c.bf16 %v1369, %v1368
        %v1489 = vpack.c.bf16 %v1371, %v1370
        %v1490 = vpack.c.bf16 %v1373, %v1372
        %v1491 = vpack.c.bf16 %v1375, %v1374
        %v1492 = vpack.c.bf16 %v1377, %v1376
        %v1493 = vpack.c.bf16 %v1379, %v1378
        %v1494 = vpack.c.bf16 %v1381, %v1380
        %v1495 = vpack.c.bf16 %v1383, %v1382
        %v1496 = vpack.c.bf16 %v1385, %v1384
        %v1497 = vpack.c.bf16 %v1387, %v1386
        %v1498 = vpack.c.bf16 %v1389, %v1388
        %v1499 = vpack.c.bf16 %v1391, %v1390
        %v1500 = vpack.c.bf16 %v1393, %v1392
        %v1501 = vpack.c.bf16 %v1395, %v1394
        %v1502 = vpack.c.bf16 %v1397, %v1396
        %v1503 = vpack.c.bf16 %v1399, %v1398
        %v1504 = vpack.c.bf16 %v1401, %v1400
        %v1505 = vpack.c.bf16 %v1403, %v1402
        %v1506 = vpack.c.bf16 %v1405, %v1404
        %v1507 = vpack.c.bf16 %v1407, %v1406
        %v1508 = vpack.c.bf16 %v1409, %v1408
        %v1509 = vpack.c.bf16 %v1411, %v1410
        %v1510 = vpack.c.bf16 %v1413, %v1412
        %v1511 = vpack.c.bf16 %v1415, %v1414
        %v1512 = vpack.c.bf16 %v1417, %v1416
        %v1513 = vpack.c.bf16 %v1419, %v1418
        %v1514 = vpack.c.bf16 %v1421, %v1420
        %v1515 = vpack.c.bf16 %v1423, %v1422
        %v1516 = vpack.c.bf16 %v1425, %v1424
        %v1517 = vpack.c.bf16 %v1427, %v1426
        %v1518 = vpack.c.bf16 %v1429, %v1428
        %v1519 = vpack.c.bf16 %v1431, %v1430
        %v1520 = vpack.c.bf16 %v1433, %v1432
        %v1521 = vpack.c.bf16 %v1435, %v1434
        %v1522 = vpack.c.bf16 %v1437, %v1436
        %v1523 = vpack.c.bf16 %v1439, %v1438
        %v1524 = vpack.c.bf16 %v1441, %v1440
        %v1525 = vpack.c.bf16 %v1443, %v1442
        %v1526 = vpack.c.bf16 %v1445, %v1444
        %v1527 = vpack.c.bf16 %v1447, %v1446
        %v1528 = vpack.c.bf16 %v1449, %v1448
        %v1529 = vpack.c.bf16 %v1451, %v1450
        %v1530 = vpack.c.bf16 %v1453, %v1452
        %v1531 = vpack.c.bf16 %v1455, %v1454
        %v1532 = vpack.c.bf16 %v1457, %v1456
        %v1533 = vpack.c.bf16 %v1459, %v1458
        %v1534 = vpack.c.bf16 %v1461, %v1460
        %v1535 = vpack.c.bf16 %v1463, %v1462
        %v1536 = vpack.c.bf16 %v1465, %v1464
        %v1537 = vpack.c.bf16 %v1467, %v1466
        %v1538 = vpack.c.bf16 %v1469, %v1468
        %v1539 = vpack.c.bf16 %v1471, %v1470
        %v1540 = vpack.c.bf16 %v1473, %v1472
        %v1541 = vpack.c.bf16 %v1475, %v1474
        %v1542 = vpack.c.bf16 %v1477, %v1476
        %v1543 = vpack.c.bf16 %v1479, %v1478
        %v1544 = vld [vmem:[#allocation7] sm:$0xf]
        %v1545 = vld [vmem:[#allocation7 + $0x4] sm:$0xf]
        %v1546 = vld [vmem:[#allocation7 + $0x8] sm:$0xf]
        %v1547 = vld [vmem:[#allocation7 + $0xc] sm:$0xf]
        %v1548 = vld [vmem:[#allocation7 + $0x10] sm:$0xf]
        %v1549 = vld [vmem:[#allocation7 + $0x14] sm:$0xf]
        %v1550 = vld [vmem:[#allocation7 + $0x18] sm:$0xf]
        %v1551 = vld [vmem:[#allocation7 + $0x1c] sm:$0xf]
        %v1552 = vld [vmem:[#allocation8] sm:$0x1]
        %v1554 = vperm.slane %v1552, 0
        %v1564 = vunpack.c.l.b16 %v1544
        %v1565 = vunpack.c.l.b16 %v1545
        %v1566 = vunpack.c.l.b16 %v1546
        %v1567 = vunpack.c.l.b16 %v1547
        %v1568 = vunpack.c.l.b16 %v1548
        %v1569 = vunpack.c.l.b16 %v1549
        %v1570 = vunpack.c.l.b16 %v1550
        %v1571 = vunpack.c.l.b16 %v1551
        %v1572 = vpack.c.b16 %v1565, %v1564
        %v1573 = vpack.c.b16 %v1567, %v1566
        %v1574 = vpack.c.b16 %v1569, %v1568
        %v1575 = vpack.c.b16 %v1571, %v1570
        %vm1580 = vcmask 523264
        %v1582 = vsel %vm1580, %v1480, 0
        %v1585 = vsel %vm1580, %v1481, 0
        %v1588 = vsel %vm1580, %v1482, 0
        %v1591 = vsel %vm1580, %v1483, 0
        %v1594 = vsel %vm1580, %v1484, 0
        %v1597 = vsel %vm1580, %v1485, 0
        %v1600 = vsel %vm1580, %v1486, 0
        %v1603 = vsel %vm1580, %v1487, 0
        %v1606 = vsel %vm1580, %v1488, 0
        %v1609 = vsel %vm1580, %v1489, 0
        %v1612 = vsel %vm1580, %v1490, 0
        %v1615 = vsel %vm1580, %v1491, 0
        %v1618 = vsel %vm1580, %v1492, 0
        %v1621 = vsel %vm1580, %v1493, 0
        %v1624 = vsel %vm1580, %v1494, 0
        %v1627 = vsel %vm1580, %v1495, 0
        %v1630 = vsel %vm1580, %v1496, 0
        %v1633 = vsel %vm1580, %v1497, 0
        %v1636 = vsel %vm1580, %v1498, 0
        %v1639 = vsel %vm1580, %v1499, 0
        %v1642 = vsel %vm1580, %v1500, 0
        %v1645 = vsel %vm1580, %v1501, 0
        %v1648 = vsel %vm1580, %v1502, 0
        %v1651 = vsel %vm1580, %v1503, 0
        %v1654 = vsel %vm1580, %v1504, 0
        %v1657 = vsel %vm1580, %v1505, 0
        %v1660 = vsel %vm1580, %v1506, 0
        %v1663 = vsel %vm1580, %v1507, 0
        %v1666 = vsel %vm1580, %v1508, 0
        %v1669 = vsel %vm1580, %v1509, 0
        %v1672 = vsel %vm1580, %v1510, 0
        %v1675 = vsel %vm1580, %v1511, 0
        %v1678 = vsel %vm1580, %v1512, 0
        %v1681 = vsel %vm1580, %v1513, 0
        %v1684 = vsel %vm1580, %v1514, 0
        %v1687 = vsel %vm1580, %v1515, 0
        %v1690 = vsel %vm1580, %v1516, 0
        %v1693 = vsel %vm1580, %v1517, 0
        %v1696 = vsel %vm1580, %v1518, 0
        %v1699 = vsel %vm1580, %v1519, 0
        %v1702 = vsel %vm1580, %v1520, 0
        %v1705 = vsel %vm1580, %v1521, 0
        %v1708 = vsel %vm1580, %v1522, 0
        %v1711 = vsel %vm1580, %v1523, 0
        %v1714 = vsel %vm1580, %v1524, 0
        %v1717 = vsel %vm1580, %v1525, 0
        %v1720 = vsel %vm1580, %v1526, 0
        %v1723 = vsel %vm1580, %v1527, 0
        %v1726 = vsel %vm1580, %v1528, 0
        %v1729 = vsel %vm1580, %v1529, 0
        %v1732 = vsel %vm1580, %v1530, 0
        %v1735 = vsel %vm1580, %v1531, 0
        %v1738 = vsel %vm1580, %v1532, 0
        %v1741 = vsel %vm1580, %v1533, 0
        %v1744 = vsel %vm1580, %v1534, 0
        %v1747 = vsel %vm1580, %v1535, 0
        %v1750 = vsel %vm1580, %v1536, 0
        %v1753 = vsel %vm1580, %v1537, 0
        %v1756 = vsel %vm1580, %v1538, 0
        %v1759 = vsel %vm1580, %v1539, 0
        %v1762 = vsel %vm1580, %v1540, 0
        %v1765 = vsel %vm1580, %v1541, 0
        %v1768 = vsel %vm1580, %v1542, 0
        %v1771 = vsel %vm1580, %v1543, 0
        %1773 = vmatpush.bf16.msra.mxu0 0
        %1774 = vmatpush.bf16.msra.mxu0 0
        %1775 = vmatpush.bf16.msra.mxu0 0
        %1776 = vmatpush.bf16.msra.mxu0 0
        %1777 = vmatpush.bf16.msra.mxu0 %v1575
        %1778 = vmatpush.bf16.msra.mxu0 %v1574
        %1779 = vmatpush.bf16.msra.mxu0 %v1573
        %1780 = vmatpush.bf16.msra.mxu0 %v1572
        %1781 = vmatmul.bf16.gmra.mxu0 %v1582
        %v1782 = vpop.f32.mrf.mxu0
        %v1783 = vadd.f32 %v1554, %v1782
        %v1784 = vpop.f32.mrf.mxu0
        %v1785 = vadd.f32 %v1554, %v1784
        %1786 = vmatmul.bf16.gmra.mxu0 %v1585
        %v1787 = vpop.f32.mrf.mxu0
        %v1788 = vadd.f32 %v1554, %v1787
        %v1789 = vpop.f32.mrf.mxu0
        %v1790 = vadd.f32 %v1554, %v1789
        %1791 = vmatmul.bf16.gmra.mxu0 %v1588
        %v1792 = vpop.f32.mrf.mxu0
        %v1793 = vadd.f32 %v1554, %v1792
        %v1794 = vpop.f32.mrf.mxu0
        %v1795 = vadd.f32 %v1554, %v1794
        %1796 = vmatmul.bf16.gmra.mxu0 %v1591
        %v1797 = vpop.f32.mrf.mxu0
        %v1798 = vadd.f32 %v1554, %v1797
        %v1799 = vpop.f32.mrf.mxu0
        %v1800 = vadd.f32 %v1554, %v1799
        %1801 = vmatmul.bf16.gmra.mxu0 %v1594
        %v1802 = vpop.f32.mrf.mxu0
        %v1803 = vadd.f32 %v1554, %v1802
        %v1804 = vpop.f32.mrf.mxu0
        %v1805 = vadd.f32 %v1554, %v1804
        %1806 = vmatmul.bf16.gmra.mxu0 %v1597
        %v1807 = vpop.f32.mrf.mxu0
        %v1808 = vadd.f32 %v1554, %v1807
        %v1809 = vpop.f32.mrf.mxu0
        %v1810 = vadd.f32 %v1554, %v1809
        %1811 = vmatmul.bf16.gmra.mxu0 %v1600
        %v1812 = vpop.f32.mrf.mxu0
        %v1813 = vadd.f32 %v1554, %v1812
        %v1814 = vpop.f32.mrf.mxu0
        %v1815 = vadd.f32 %v1554, %v1814
        %1816 = vmatmul.bf16.gmra.mxu0 %v1603
        %v1817 = vpop.f32.mrf.mxu0
        %v1818 = vadd.f32 %v1554, %v1817
        %v1819 = vpop.f32.mrf.mxu0
        %v1820 = vadd.f32 %v1554, %v1819
        %1821 = vmatmul.bf16.gmra.mxu0 %v1606
        %v1822 = vpop.f32.mrf.mxu0
        %v1823 = vadd.f32 %v1554, %v1822
        %v1824 = vpop.f32.mrf.mxu0
        %v1825 = vadd.f32 %v1554, %v1824
        %1826 = vmatmul.bf16.gmra.mxu0 %v1609
        %v1827 = vpop.f32.mrf.mxu0
        %v1828 = vadd.f32 %v1554, %v1827
        %v1829 = vpop.f32.mrf.mxu0
        %v1830 = vadd.f32 %v1554, %v1829
        %1831 = vmatmul.bf16.gmra.mxu0 %v1612
        %v1832 = vpop.f32.mrf.mxu0
        %v1833 = vadd.f32 %v1554, %v1832
        %v1834 = vpop.f32.mrf.mxu0
        %v1835 = vadd.f32 %v1554, %v1834
        %1836 = vmatmul.bf16.gmra.mxu0 %v1615
        %v1837 = vpop.f32.mrf.mxu0
        %v1838 = vadd.f32 %v1554, %v1837
        %v1839 = vpop.f32.mrf.mxu0
        %v1840 = vadd.f32 %v1554, %v1839
        %1841 = vmatmul.bf16.gmra.mxu0 %v1618
        %v1842 = vpop.f32.mrf.mxu0
        %v1843 = vadd.f32 %v1554, %v1842
        %v1844 = vpop.f32.mrf.mxu0
        %v1845 = vadd.f32 %v1554, %v1844
        %1846 = vmatmul.bf16.gmra.mxu0 %v1621
        %v1847 = vpop.f32.mrf.mxu0
        %v1848 = vadd.f32 %v1554, %v1847
        %v1849 = vpop.f32.mrf.mxu0
        %v1850 = vadd.f32 %v1554, %v1849
        %1851 = vmatmul.bf16.gmra.mxu0 %v1624
        %v1852 = vpop.f32.mrf.mxu0
        %v1853 = vadd.f32 %v1554, %v1852
        %v1854 = vpop.f32.mrf.mxu0
        %v1855 = vadd.f32 %v1554, %v1854
        %1856 = vmatmul.bf16.gmra.mxu0 %v1627
        %v1857 = vpop.f32.mrf.mxu0
        %v1858 = vadd.f32 %v1554, %v1857
        %v1859 = vpop.f32.mrf.mxu0
        %v1860 = vadd.f32 %v1554, %v1859
        %1861 = vmatmul.bf16.gmra.mxu0 %v1630
        %v1862 = vpop.f32.mrf.mxu0
        %v1863 = vadd.f32 %v1554, %v1862
        %v1864 = vpop.f32.mrf.mxu0
        %v1865 = vadd.f32 %v1554, %v1864
        %1866 = vmatmul.bf16.gmra.mxu0 %v1633
        %v1867 = vpop.f32.mrf.mxu0
        %v1868 = vadd.f32 %v1554, %v1867
        %v1869 = vpop.f32.mrf.mxu0
        %v1870 = vadd.f32 %v1554, %v1869
        %1871 = vmatmul.bf16.gmra.mxu0 %v1636
        %v1872 = vpop.f32.mrf.mxu0
        %v1873 = vadd.f32 %v1554, %v1872
        %v1874 = vpop.f32.mrf.mxu0
        %v1875 = vadd.f32 %v1554, %v1874
        %1876 = vmatmul.bf16.gmra.mxu0 %v1639
        %v1877 = vpop.f32.mrf.mxu0
        %v1878 = vadd.f32 %v1554, %v1877
        %v1879 = vpop.f32.mrf.mxu0
        %v1880 = vadd.f32 %v1554, %v1879
        %1881 = vmatmul.bf16.gmra.mxu0 %v1642
        %v1882 = vpop.f32.mrf.mxu0
        %v1883 = vadd.f32 %v1554, %v1882
        %v1884 = vpop.f32.mrf.mxu0
        %v1885 = vadd.f32 %v1554, %v1884
        %1886 = vmatmul.bf16.gmra.mxu0 %v1645
        %v1887 = vpop.f32.mrf.mxu0
        %v1888 = vadd.f32 %v1554, %v1887
        %v1889 = vpop.f32.mrf.mxu0
        %v1890 = vadd.f32 %v1554, %v1889
        %1891 = vmatmul.bf16.gmra.mxu0 %v1648
        %v1892 = vpop.f32.mrf.mxu0
        %v1893 = vadd.f32 %v1554, %v1892
        %v1894 = vpop.f32.mrf.mxu0
        %v1895 = vadd.f32 %v1554, %v1894
        %1896 = vmatmul.bf16.gmra.mxu0 %v1651
        %v1897 = vpop.f32.mrf.mxu0
        %v1898 = vadd.f32 %v1554, %v1897
        %v1899 = vpop.f32.mrf.mxu0
        %v1900 = vadd.f32 %v1554, %v1899
        %1901 = vmatmul.bf16.gmra.mxu0 %v1654
        %v1902 = vpop.f32.mrf.mxu0
        %v1903 = vadd.f32 %v1554, %v1902
        %v1904 = vpop.f32.mrf.mxu0
        %v1905 = vadd.f32 %v1554, %v1904
        %1906 = vmatmul.bf16.gmra.mxu0 %v1657
        %v1907 = vpop.f32.mrf.mxu0
        %v1908 = vadd.f32 %v1554, %v1907
        %v1909 = vpop.f32.mrf.mxu0
        %v1910 = vadd.f32 %v1554, %v1909
        %1911 = vmatmul.bf16.gmra.mxu0 %v1660
        %v1912 = vpop.f32.mrf.mxu0
        %v1913 = vadd.f32 %v1554, %v1912
        %v1914 = vpop.f32.mrf.mxu0
        %v1915 = vadd.f32 %v1554, %v1914
        %1916 = vmatmul.bf16.gmra.mxu0 %v1663
        %v1917 = vpop.f32.mrf.mxu0
        %v1918 = vadd.f32 %v1554, %v1917
        %v1919 = vpop.f32.mrf.mxu0
        %v1920 = vadd.f32 %v1554, %v1919
        %1921 = vmatmul.bf16.gmra.mxu0 %v1666
        %v1922 = vpop.f32.mrf.mxu0
        %v1923 = vadd.f32 %v1554, %v1922
        %v1924 = vpop.f32.mrf.mxu0
        %v1925 = vadd.f32 %v1554, %v1924
        %1926 = vmatmul.bf16.gmra.mxu0 %v1669
        %v1927 = vpop.f32.mrf.mxu0
        %v1928 = vadd.f32 %v1554, %v1927
        %v1929 = vpop.f32.mrf.mxu0
        %v1930 = vadd.f32 %v1554, %v1929
        %1931 = vmatmul.bf16.gmra.mxu0 %v1672
        %v1932 = vpop.f32.mrf.mxu0
        %v1933 = vadd.f32 %v1554, %v1932
        %v1934 = vpop.f32.mrf.mxu0
        %v1935 = vadd.f32 %v1554, %v1934
        %1936 = vmatmul.bf16.gmra.mxu0 %v1675
        %v1937 = vpop.f32.mrf.mxu0
        %v1938 = vadd.f32 %v1554, %v1937
        %v1939 = vpop.f32.mrf.mxu0
        %v1940 = vadd.f32 %v1554, %v1939
        %1941 = vmatmul.bf16.gmra.mxu0 %v1678
        %v1942 = vpop.f32.mrf.mxu0
        %v1943 = vadd.f32 %v1554, %v1942
        %v1944 = vpop.f32.mrf.mxu0
        %v1945 = vadd.f32 %v1554, %v1944
        %1946 = vmatmul.bf16.gmra.mxu0 %v1681
        %v1947 = vpop.f32.mrf.mxu0
        %v1948 = vadd.f32 %v1554, %v1947
        %v1949 = vpop.f32.mrf.mxu0
        %v1950 = vadd.f32 %v1554, %v1949
        %1951 = vmatmul.bf16.gmra.mxu0 %v1684
        %v1952 = vpop.f32.mrf.mxu0
        %v1953 = vadd.f32 %v1554, %v1952
        %v1954 = vpop.f32.mrf.mxu0
        %v1955 = vadd.f32 %v1554, %v1954
        %1956 = vmatmul.bf16.gmra.mxu0 %v1687
        %v1957 = vpop.f32.mrf.mxu0
        %v1958 = vadd.f32 %v1554, %v1957
        %v1959 = vpop.f32.mrf.mxu0
        %v1960 = vadd.f32 %v1554, %v1959
        %1961 = vmatmul.bf16.gmra.mxu0 %v1690
        %v1962 = vpop.f32.mrf.mxu0
        %v1963 = vadd.f32 %v1554, %v1962
        %v1964 = vpop.f32.mrf.mxu0
        %v1965 = vadd.f32 %v1554, %v1964
        %1966 = vmatmul.bf16.gmra.mxu0 %v1693
        %v1967 = vpop.f32.mrf.mxu0
        %v1968 = vadd.f32 %v1554, %v1967
        %v1969 = vpop.f32.mrf.mxu0
        %v1970 = vadd.f32 %v1554, %v1969
        %1971 = vmatmul.bf16.gmra.mxu0 %v1696
        %v1972 = vpop.f32.mrf.mxu0
        %v1973 = vadd.f32 %v1554, %v1972
        %v1974 = vpop.f32.mrf.mxu0
        %v1975 = vadd.f32 %v1554, %v1974
        %1976 = vmatmul.bf16.gmra.mxu0 %v1699
        %v1977 = vpop.f32.mrf.mxu0
        %v1978 = vadd.f32 %v1554, %v1977
        %v1979 = vpop.f32.mrf.mxu0
        %v1980 = vadd.f32 %v1554, %v1979
        %1981 = vmatmul.bf16.gmra.mxu0 %v1702
        %v1982 = vpop.f32.mrf.mxu0
        %v1983 = vadd.f32 %v1554, %v1982
        %v1984 = vpop.f32.mrf.mxu0
        %v1985 = vadd.f32 %v1554, %v1984
        %1986 = vmatmul.bf16.gmra.mxu0 %v1705
        %v1987 = vpop.f32.mrf.mxu0
        %v1988 = vadd.f32 %v1554, %v1987
        %v1989 = vpop.f32.mrf.mxu0
        %v1990 = vadd.f32 %v1554, %v1989
        %1991 = vmatmul.bf16.gmra.mxu0 %v1708
        %v1992 = vpop.f32.mrf.mxu0
        %v1993 = vadd.f32 %v1554, %v1992
        %v1994 = vpop.f32.mrf.mxu0
        %v1995 = vadd.f32 %v1554, %v1994
        %1996 = vmatmul.bf16.gmra.mxu0 %v1711
        %v1997 = vpop.f32.mrf.mxu0
        %v1998 = vadd.f32 %v1554, %v1997
        %v1999 = vpop.f32.mrf.mxu0
        %v2000 = vadd.f32 %v1554, %v1999
        %2001 = vmatmul.bf16.gmra.mxu0 %v1714
        %v2002 = vpop.f32.mrf.mxu0
        %v2003 = vadd.f32 %v1554, %v2002
        %v2004 = vpop.f32.mrf.mxu0
        %v2005 = vadd.f32 %v1554, %v2004
        %2006 = vmatmul.bf16.gmra.mxu0 %v1717
        %v2007 = vpop.f32.mrf.mxu0
        %v2008 = vadd.f32 %v1554, %v2007
        %v2009 = vpop.f32.mrf.mxu0
        %v2010 = vadd.f32 %v1554, %v2009
        %2011 = vmatmul.bf16.gmra.mxu0 %v1720
        %v2012 = vpop.f32.mrf.mxu0
        %v2013 = vadd.f32 %v1554, %v2012
        %v2014 = vpop.f32.mrf.mxu0
        %v2015 = vadd.f32 %v1554, %v2014
        %2016 = vmatmul.bf16.gmra.mxu0 %v1723
        %v2017 = vpop.f32.mrf.mxu0
        %v2018 = vadd.f32 %v1554, %v2017
        %v2019 = vpop.f32.mrf.mxu0
        %v2020 = vadd.f32 %v1554, %v2019
        %2021 = vmatmul.bf16.gmra.mxu0 %v1726
        %v2022 = vpop.f32.mrf.mxu0
        %v2023 = vadd.f32 %v1554, %v2022
        %v2024 = vpop.f32.mrf.mxu0
        %v2025 = vadd.f32 %v1554, %v2024
        %2026 = vmatmul.bf16.gmra.mxu0 %v1729
        %v2027 = vpop.f32.mrf.mxu0
        %v2028 = vadd.f32 %v1554, %v2027
        %v2029 = vpop.f32.mrf.mxu0
        %v2030 = vadd.f32 %v1554, %v2029
        %2031 = vmatmul.bf16.gmra.mxu0 %v1732
        %v2032 = vpop.f32.mrf.mxu0
        %v2033 = vadd.f32 %v1554, %v2032
        %v2034 = vpop.f32.mrf.mxu0
        %v2035 = vadd.f32 %v1554, %v2034
        %2036 = vmatmul.bf16.gmra.mxu0 %v1735
        %v2037 = vpop.f32.mrf.mxu0
        %v2038 = vadd.f32 %v1554, %v2037
        %v2039 = vpop.f32.mrf.mxu0
        %v2040 = vadd.f32 %v1554, %v2039
        %2041 = vmatmul.bf16.gmra.mxu0 %v1738
        %v2042 = vpop.f32.mrf.mxu0
        %v2043 = vadd.f32 %v1554, %v2042
        %v2044 = vpop.f32.mrf.mxu0
        %v2045 = vadd.f32 %v1554, %v2044
        %2046 = vmatmul.bf16.gmra.mxu0 %v1741
        %v2047 = vpop.f32.mrf.mxu0
        %v2048 = vadd.f32 %v1554, %v2047
        %v2049 = vpop.f32.mrf.mxu0
        %v2050 = vadd.f32 %v1554, %v2049
        %2051 = vmatmul.bf16.gmra.mxu0 %v1744
        %v2052 = vpop.f32.mrf.mxu0
        %v2053 = vadd.f32 %v1554, %v2052
        %v2054 = vpop.f32.mrf.mxu0
        %v2055 = vadd.f32 %v1554, %v2054
        %2056 = vmatmul.bf16.gmra.mxu0 %v1747
        %v2057 = vpop.f32.mrf.mxu0
        %v2058 = vadd.f32 %v1554, %v2057
        %v2059 = vpop.f32.mrf.mxu0
        %v2060 = vadd.f32 %v1554, %v2059
        %2061 = vmatmul.bf16.gmra.mxu0 %v1750
        %v2062 = vpop.f32.mrf.mxu0
        %v2063 = vadd.f32 %v1554, %v2062
        %v2064 = vpop.f32.mrf.mxu0
        %v2065 = vadd.f32 %v1554, %v2064
        %2066 = vmatmul.bf16.gmra.mxu0 %v1753
        %v2067 = vpop.f32.mrf.mxu0
        %v2068 = vadd.f32 %v1554, %v2067
        %v2069 = vpop.f32.mrf.mxu0
        %v2070 = vadd.f32 %v1554, %v2069
        %2071 = vmatmul.bf16.gmra.mxu0 %v1756
        %v2072 = vpop.f32.mrf.mxu0
        %v2073 = vadd.f32 %v1554, %v2072
        %v2074 = vpop.f32.mrf.mxu0
        %v2075 = vadd.f32 %v1554, %v2074
        %2076 = vmatmul.bf16.gmra.mxu0 %v1759
        %v2077 = vpop.f32.mrf.mxu0
        %v2078 = vadd.f32 %v1554, %v2077
        %v2079 = vpop.f32.mrf.mxu0
        %v2080 = vadd.f32 %v1554, %v2079
        %2081 = vmatmul.bf16.gmra.mxu0 %v1762
        %v2082 = vpop.f32.mrf.mxu0
        %v2083 = vadd.f32 %v1554, %v2082
        %v2084 = vpop.f32.mrf.mxu0
        %v2085 = vadd.f32 %v1554, %v2084
        %2086 = vmatmul.bf16.gmra.mxu0 %v1765
        %v2087 = vpop.f32.mrf.mxu0
        %v2088 = vadd.f32 %v1554, %v2087
        %v2089 = vpop.f32.mrf.mxu0
        %v2090 = vadd.f32 %v1554, %v2089
        %2091 = vmatmul.bf16.gmra.mxu0 %v1768
        %v2092 = vpop.f32.mrf.mxu0
        %v2093 = vadd.f32 %v1554, %v2092
        %v2094 = vpop.f32.mrf.mxu0
        %v2095 = vadd.f32 %v1554, %v2094
        %2096 = vmatmul.bf16.gmra.mxu0 %v1771
        %v2097 = vpop.f32.mrf.mxu0
        %v2098 = vadd.f32 %v1554, %v2097
        %v2099 = vpop.f32.mrf.mxu0
        %v2100 = vadd.f32 %v1554, %v2099
        %2101 = vdwg.mxu0
        %v2102 = vmax.f32 %v1783, 0.0
        %v2103 = vmax.f32 %v1785, 0.0
        %v2104 = vmax.f32 %v1788, 0.0
        %v2105 = vmax.f32 %v1790, 0.0
        %v2106 = vmax.f32 %v1793, 0.0
        %v2107 = vmax.f32 %v1795, 0.0
        %v2108 = vmax.f32 %v1798, 0.0
        %v2109 = vmax.f32 %v1800, 0.0
        %v2110 = vmax.f32 %v1803, 0.0
        %v2111 = vmax.f32 %v1805, 0.0
        %v2112 = vmax.f32 %v1808, 0.0
        %v2113 = vmax.f32 %v1810, 0.0
        %v2114 = vmax.f32 %v1813, 0.0
        %v2115 = vmax.f32 %v1815, 0.0
        %v2116 = vmax.f32 %v1818, 0.0
        %v2117 = vmax.f32 %v1820, 0.0
        %v2118 = vmax.f32 %v1823, 0.0
        %v2119 = vmax.f32 %v1825, 0.0
        %v2120 = vmax.f32 %v1828, 0.0
        %v2121 = vmax.f32 %v1830, 0.0
        %v2122 = vmax.f32 %v1833, 0.0
        %v2123 = vmax.f32 %v1835, 0.0
        %v2124 = vmax.f32 %v1838, 0.0
        %v2125 = vmax.f32 %v1840, 0.0
        %v2126 = vmax.f32 %v1843, 0.0
        %v2127 = vmax.f32 %v1845, 0.0
        %v2128 = vmax.f32 %v1848, 0.0
        %v2129 = vmax.f32 %v1850, 0.0
        %v2130 = vmax.f32 %v1853, 0.0
        %v2131 = vmax.f32 %v1855, 0.0
        %v2132 = vmax.f32 %v1858, 0.0
        %v2133 = vmax.f32 %v1860, 0.0
        %v2134 = vmax.f32 %v1863, 0.0
        %v2135 = vmax.f32 %v1865, 0.0
        %v2136 = vmax.f32 %v1868, 0.0
        %v2137 = vmax.f32 %v1870, 0.0
        %v2138 = vmax.f32 %v1873, 0.0
        %v2139 = vmax.f32 %v1875, 0.0
        %v2140 = vmax.f32 %v1878, 0.0
        %v2141 = vmax.f32 %v1880, 0.0
        %v2142 = vmax.f32 %v1883, 0.0
        %v2143 = vmax.f32 %v1885, 0.0
        %v2144 = vmax.f32 %v1888, 0.0
        %v2145 = vmax.f32 %v1890, 0.0
        %v2146 = vmax.f32 %v1893, 0.0
        %v2147 = vmax.f32 %v1895, 0.0
        %v2148 = vmax.f32 %v1898, 0.0
        %v2149 = vmax.f32 %v1900, 0.0
        %v2150 = vmax.f32 %v1903, 0.0
        %v2151 = vmax.f32 %v1905, 0.0
        %v2152 = vmax.f32 %v1908, 0.0
        %v2153 = vmax.f32 %v1910, 0.0
        %v2154 = vmax.f32 %v1913, 0.0
        %v2155 = vmax.f32 %v1915, 0.0
        %v2156 = vmax.f32 %v1918, 0.0
        %v2157 = vmax.f32 %v1920, 0.0
        %v2158 = vmax.f32 %v1923, 0.0
        %v2159 = vmax.f32 %v1925, 0.0
        %v2160 = vmax.f32 %v1928, 0.0
        %v2161 = vmax.f32 %v1930, 0.0
        %v2162 = vmax.f32 %v1933, 0.0
        %v2163 = vmax.f32 %v1935, 0.0
        %v2164 = vmax.f32 %v1938, 0.0
        %v2165 = vmax.f32 %v1940, 0.0
        %v2166 = vmax.f32 %v1943, 0.0
        %v2167 = vmax.f32 %v1945, 0.0
        %v2168 = vmax.f32 %v1948, 0.0
        %v2169 = vmax.f32 %v1950, 0.0
        %v2170 = vmax.f32 %v1953, 0.0
        %v2171 = vmax.f32 %v1955, 0.0
        %v2172 = vmax.f32 %v1958, 0.0
        %v2173 = vmax.f32 %v1960, 0.0
        %v2174 = vmax.f32 %v1963, 0.0
        %v2175 = vmax.f32 %v1965, 0.0
        %v2176 = vmax.f32 %v1968, 0.0
        %v2177 = vmax.f32 %v1970, 0.0
        %v2178 = vmax.f32 %v1973, 0.0
        %v2179 = vmax.f32 %v1975, 0.0
        %v2180 = vmax.f32 %v1978, 0.0
        %v2181 = vmax.f32 %v1980, 0.0
        %v2182 = vmax.f32 %v1983, 0.0
        %v2183 = vmax.f32 %v1985, 0.0
        %v2184 = vmax.f32 %v1988, 0.0
        %v2185 = vmax.f32 %v1990, 0.0
        %v2186 = vmax.f32 %v1993, 0.0
        %v2187 = vmax.f32 %v1995, 0.0
        %v2188 = vmax.f32 %v1998, 0.0
        %v2189 = vmax.f32 %v2000, 0.0
        %v2190 = vmax.f32 %v2003, 0.0
        %v2191 = vmax.f32 %v2005, 0.0
        %v2192 = vmax.f32 %v2008, 0.0
        %v2193 = vmax.f32 %v2010, 0.0
        %v2194 = vmax.f32 %v2013, 0.0
        %v2195 = vmax.f32 %v2015, 0.0
        %v2196 = vmax.f32 %v2018, 0.0
        %v2197 = vmax.f32 %v2020, 0.0
        %v2198 = vmax.f32 %v2023, 0.0
        %v2199 = vmax.f32 %v2025, 0.0
        %v2200 = vmax.f32 %v2028, 0.0
        %v2201 = vmax.f32 %v2030, 0.0
        %v2202 = vmax.f32 %v2033, 0.0
        %v2203 = vmax.f32 %v2035, 0.0
        %v2204 = vmax.f32 %v2038, 0.0
        %v2205 = vmax.f32 %v2040, 0.0
        %v2206 = vmax.f32 %v2043, 0.0
        %v2207 = vmax.f32 %v2045, 0.0
        %v2208 = vmax.f32 %v2048, 0.0
        %v2209 = vmax.f32 %v2050, 0.0
        %v2210 = vmax.f32 %v2053, 0.0
        %v2211 = vmax.f32 %v2055, 0.0
        %v2212 = vmax.f32 %v2058, 0.0
        %v2213 = vmax.f32 %v2060, 0.0
        %v2214 = vmax.f32 %v2063, 0.0
        %v2215 = vmax.f32 %v2065, 0.0
        %v2216 = vmax.f32 %v2068, 0.0
        %v2217 = vmax.f32 %v2070, 0.0
        %v2218 = vmax.f32 %v2073, 0.0
        %v2219 = vmax.f32 %v2075, 0.0
        %v2220 = vmax.f32 %v2078, 0.0
        %v2221 = vmax.f32 %v2080, 0.0
        %v2222 = vmax.f32 %v2083, 0.0
        %v2223 = vmax.f32 %v2085, 0.0
        %v2224 = vmax.f32 %v2088, 0.0
        %v2225 = vmax.f32 %v2090, 0.0
        %v2226 = vmax.f32 %v2093, 0.0
        %v2227 = vmax.f32 %v2095, 0.0
        %v2228 = vmax.f32 %v2098, 0.0
        %v2229 = vmax.f32 %v2100, 0.0
        %v2230 = vld [vmem:[#allocation10] sm:$0x1]
        %v2232 = vperm.slane %v2230, 0
        %v2234 = vmul.f32 %v2102, %v2232
        %v2235 = vmul.f32 %v2103, %v2232
        %v2236 = vmul.f32 %v2104, %v2232
        %v2237 = vmul.f32 %v2105, %v2232
        %v2238 = vmul.f32 %v2106, %v2232
        %v2239 = vmul.f32 %v2107, %v2232
        %v2240 = vmul.f32 %v2108, %v2232
        %v2241 = vmul.f32 %v2109, %v2232
        %v2242 = vmul.f32 %v2110, %v2232
        %v2243 = vmul.f32 %v2111, %v2232
        %v2244 = vmul.f32 %v2112, %v2232
        %v2245 = vmul.f32 %v2113, %v2232
        %v2246 = vmul.f32 %v2114, %v2232
        %v2247 = vmul.f32 %v2115, %v2232
        %v2248 = vmul.f32 %v2116, %v2232
        %v2249 = vmul.f32 %v2117, %v2232
        %v2250 = vmul.f32 %v2118, %v2232
        %v2251 = vmul.f32 %v2119, %v2232
        %v2252 = vmul.f32 %v2120, %v2232
        %v2253 = vmul.f32 %v2121, %v2232
        %v2254 = vmul.f32 %v2122, %v2232
        %v2255 = vmul.f32 %v2123, %v2232
        %v2256 = vmul.f32 %v2124, %v2232
        %v2257 = vmul.f32 %v2125, %v2232
        %v2258 = vmul.f32 %v2126, %v2232
        %v2259 = vmul.f32 %v2127, %v2232
        %v2260 = vmul.f32 %v2128, %v2232
        %v2261 = vmul.f32 %v2129, %v2232
        %v2262 = vmul.f32 %v2130, %v2232
        %v2263 = vmul.f32 %v2131, %v2232
        %v2264 = vmul.f32 %v2132, %v2232
        %v2265 = vmul.f32 %v2133, %v2232
        %v2266 = vmul.f32 %v2134, %v2232
        %v2267 = vmul.f32 %v2135, %v2232
        %v2268 = vmul.f32 %v2136, %v2232
        %v2269 = vmul.f32 %v2137, %v2232
        %v2270 = vmul.f32 %v2138, %v2232
        %v2271 = vmul.f32 %v2139, %v2232
        %v2272 = vmul.f32 %v2140, %v2232
        %v2273 = vmul.f32 %v2141, %v2232
        %v2274 = vmul.f32 %v2142, %v2232
        %v2275 = vmul.f32 %v2143, %v2232
        %v2276 = vmul.f32 %v2144, %v2232
        %v2277 = vmul.f32 %v2145, %v2232
        %v2278 = vmul.f32 %v2146, %v2232
        %v2279 = vmul.f32 %v2147, %v2232
        %v2280 = vmul.f32 %v2148, %v2232
        %v2281 = vmul.f32 %v2149, %v2232
        %v2282 = vmul.f32 %v2150, %v2232
        %v2283 = vmul.f32 %v2151, %v2232
        %v2284 = vmul.f32 %v2152, %v2232
        %v2285 = vmul.f32 %v2153, %v2232
        %v2286 = vmul.f32 %v2154, %v2232
        %v2287 = vmul.f32 %v2155, %v2232
        %v2288 = vmul.f32 %v2156, %v2232
        %v2289 = vmul.f32 %v2157, %v2232
        %v2290 = vmul.f32 %v2158, %v2232
        %v2291 = vmul.f32 %v2159, %v2232
        %v2292 = vmul.f32 %v2160, %v2232
        %v2293 = vmul.f32 %v2161, %v2232
        %v2294 = vmul.f32 %v2162, %v2232
        %v2295 = vmul.f32 %v2163, %v2232
        %v2296 = vmul.f32 %v2164, %v2232
        %v2297 = vmul.f32 %v2165, %v2232
        %v2298 = vmul.f32 %v2166, %v2232
        %v2299 = vmul.f32 %v2167, %v2232
        %v2300 = vmul.f32 %v2168, %v2232
        %v2301 = vmul.f32 %v2169, %v2232
        %v2302 = vmul.f32 %v2170, %v2232
        %v2303 = vmul.f32 %v2171, %v2232
        %v2304 = vmul.f32 %v2172, %v2232
        %v2305 = vmul.f32 %v2173, %v2232
        %v2306 = vmul.f32 %v2174, %v2232
        %v2307 = vmul.f32 %v2175, %v2232
        %v2308 = vmul.f32 %v2176, %v2232
        %v2309 = vmul.f32 %v2177, %v2232
        %v2310 = vmul.f32 %v2178, %v2232
        %v2311 = vmul.f32 %v2179, %v2232
        %v2312 = vmul.f32 %v2180, %v2232
        %v2313 = vmul.f32 %v2181, %v2232
        %v2314 = vmul.f32 %v2182, %v2232
        %v2315 = vmul.f32 %v2183, %v2232
        %v2316 = vmul.f32 %v2184, %v2232
        %v2317 = vmul.f32 %v2185, %v2232
        %v2318 = vmul.f32 %v2186, %v2232
        %v2319 = vmul.f32 %v2187, %v2232
        %v2320 = vmul.f32 %v2188, %v2232
        %v2321 = vmul.f32 %v2189, %v2232
        %v2322 = vmul.f32 %v2190, %v2232
        %v2323 = vmul.f32 %v2191, %v2232
        %v2324 = vmul.f32 %v2192, %v2232
        %v2325 = vmul.f32 %v2193, %v2232
        %v2326 = vmul.f32 %v2194, %v2232
        %v2327 = vmul.f32 %v2195, %v2232
        %v2328 = vmul.f32 %v2196, %v2232
        %v2329 = vmul.f32 %v2197, %v2232
        %v2330 = vmul.f32 %v2198, %v2232
        %v2331 = vmul.f32 %v2199, %v2232
        %v2332 = vmul.f32 %v2200, %v2232
        %v2333 = vmul.f32 %v2201, %v2232
        %v2334 = vmul.f32 %v2202, %v2232
        %v2335 = vmul.f32 %v2203, %v2232
        %v2336 = vmul.f32 %v2204, %v2232
        %v2337 = vmul.f32 %v2205, %v2232
        %v2338 = vmul.f32 %v2206, %v2232
        %v2339 = vmul.f32 %v2207, %v2232
        %v2340 = vmul.f32 %v2208, %v2232
        %v2341 = vmul.f32 %v2209, %v2232
        %v2342 = vmul.f32 %v2210, %v2232
        %v2343 = vmul.f32 %v2211, %v2232
        %v2344 = vmul.f32 %v2212, %v2232
        %v2345 = vmul.f32 %v2213, %v2232
        %v2346 = vmul.f32 %v2214, %v2232
        %v2347 = vmul.f32 %v2215, %v2232
        %v2348 = vmul.f32 %v2216, %v2232
        %v2349 = vmul.f32 %v2217, %v2232
        %v2350 = vmul.f32 %v2218, %v2232
        %v2351 = vmul.f32 %v2219, %v2232
        %v2352 = vmul.f32 %v2220, %v2232
        %v2353 = vmul.f32 %v2221, %v2232
        %v2354 = vmul.f32 %v2222, %v2232
        %v2355 = vmul.f32 %v2223, %v2232
        %v2356 = vmul.f32 %v2224, %v2232
        %v2357 = vmul.f32 %v2225, %v2232
        %v2358 = vmul.f32 %v2226, %v2232
        %v2359 = vmul.f32 %v2227, %v2232
        %v2360 = vmul.f32 %v2228, %v2232
        %v2361 = vmul.f32 %v2229, %v2232
        %v2362 = vsel %vm1580, %v2234, 0.0
        %2363 = vadd.xlane.f32.xlu0 %v2362
        %v2364 = vpop.xlane.xlu0 %2363
        %v2365 = vsel %vm1580, %v2235, 0.0
        %2366 = vadd.xlane.f32.xlu0 %v2365
        %v2367 = vpop.xlane.xlu0 %2366
        %v2368 = vsel %vm1580, %v2236, 0.0
        %2369 = vadd.xlane.f32.xlu0 %v2368
        %v2370 = vpop.xlane.xlu0 %2369
        %v2371 = vsel %vm1580, %v2237, 0.0
        %2372 = vadd.xlane.f32.xlu0 %v2371
        %v2373 = vpop.xlane.xlu0 %2372
        %v2374 = vsel %vm1580, %v2238, 0.0
        %2375 = vadd.xlane.f32.xlu0 %v2374
        %v2376 = vpop.xlane.xlu0 %2375
        %v2377 = vsel %vm1580, %v2239, 0.0
        %2378 = vadd.xlane.f32.xlu0 %v2377
        %v2379 = vpop.xlane.xlu0 %2378
        %v2380 = vsel %vm1580, %v2240, 0.0
        %2381 = vadd.xlane.f32.xlu0 %v2380
        %v2382 = vpop.xlane.xlu0 %2381
        %v2383 = vsel %vm1580, %v2241, 0.0
        %2384 = vadd.xlane.f32.xlu0 %v2383
        %v2385 = vpop.xlane.xlu0 %2384
        %v2386 = vsel %vm1580, %v2242, 0.0
        %2387 = vadd.xlane.f32.xlu0 %v2386
        %v2388 = vpop.xlane.xlu0 %2387
        %v2389 = vsel %vm1580, %v2243, 0.0
        %2390 = vadd.xlane.f32.xlu0 %v2389
        %v2391 = vpop.xlane.xlu0 %2390
        %v2392 = vsel %vm1580, %v2244, 0.0
        %2393 = vadd.xlane.f32.xlu0 %v2392
        %v2394 = vpop.xlane.xlu0 %2393
        %v2395 = vsel %vm1580, %v2245, 0.0
        %2396 = vadd.xlane.f32.xlu0 %v2395
        %v2397 = vpop.xlane.xlu0 %2396
        %v2398 = vsel %vm1580, %v2246, 0.0
        %2399 = vadd.xlane.f32.xlu0 %v2398
        %v2400 = vpop.xlane.xlu0 %2399
        %v2401 = vsel %vm1580, %v2247, 0.0
        %2402 = vadd.xlane.f32.xlu0 %v2401
        %v2403 = vpop.xlane.xlu0 %2402
        %v2404 = vsel %vm1580, %v2248, 0.0
        %2405 = vadd.xlane.f32.xlu0 %v2404
        %v2406 = vpop.xlane.xlu0 %2405
        %v2407 = vsel %vm1580, %v2249, 0.0
        %2408 = vadd.xlane.f32.xlu0 %v2407
        %v2409 = vpop.xlane.xlu0 %2408
        %v2410 = vsel %vm1580, %v2250, 0.0
        %2411 = vadd.xlane.f32.xlu0 %v2410
        %v2412 = vpop.xlane.xlu0 %2411
        %v2413 = vsel %vm1580, %v2251, 0.0
        %2414 = vadd.xlane.f32.xlu0 %v2413
        %v2415 = vpop.xlane.xlu0 %2414
        %v2416 = vsel %vm1580, %v2252, 0.0
        %2417 = vadd.xlane.f32.xlu0 %v2416
        %v2418 = vpop.xlane.xlu0 %2417
        %v2419 = vsel %vm1580, %v2253, 0.0
        %2420 = vadd.xlane.f32.xlu0 %v2419
        %v2421 = vpop.xlane.xlu0 %2420
        %v2422 = vsel %vm1580, %v2254, 0.0
        %2423 = vadd.xlane.f32.xlu0 %v2422
        %v2424 = vpop.xlane.xlu0 %2423
        %v2425 = vsel %vm1580, %v2255, 0.0
        %2426 = vadd.xlane.f32.xlu0 %v2425
        %v2427 = vpop.xlane.xlu0 %2426
        %v2428 = vsel %vm1580, %v2256, 0.0
        %2429 = vadd.xlane.f32.xlu0 %v2428
        %v2430 = vpop.xlane.xlu0 %2429
        %v2431 = vsel %vm1580, %v2257, 0.0
        %2432 = vadd.xlane.f32.xlu0 %v2431
        %v2433 = vpop.xlane.xlu0 %2432
        %v2434 = vsel %vm1580, %v2258, 0.0
        %2435 = vadd.xlane.f32.xlu0 %v2434
        %v2436 = vpop.xlane.xlu0 %2435
        %v2437 = vsel %vm1580, %v2259, 0.0
        %2438 = vadd.xlane.f32.xlu0 %v2437
        %v2439 = vpop.xlane.xlu0 %2438
        %v2440 = vsel %vm1580, %v2260, 0.0
        %2441 = vadd.xlane.f32.xlu0 %v2440
        %v2442 = vpop.xlane.xlu0 %2441
        %v2443 = vsel %vm1580, %v2261, 0.0
        %2444 = vadd.xlane.f32.xlu0 %v2443
        %v2445 = vpop.xlane.xlu0 %2444
        %v2446 = vsel %vm1580, %v2262, 0.0
        %2447 = vadd.xlane.f32.xlu0 %v2446
        %v2448 = vpop.xlane.xlu0 %2447
        %v2449 = vsel %vm1580, %v2263, 0.0
        %2450 = vadd.xlane.f32.xlu0 %v2449
        %v2451 = vpop.xlane.xlu0 %2450
        %v2452 = vsel %vm1580, %v2264, 0.0
        %2453 = vadd.xlane.f32.xlu0 %v2452
        %v2454 = vpop.xlane.xlu0 %2453
        %v2455 = vsel %vm1580, %v2265, 0.0
        %2456 = vadd.xlane.f32.xlu0 %v2455
        %v2457 = vpop.xlane.xlu0 %2456
        %v2458 = vsel %vm1580, %v2266, 0.0
        %2459 = vadd.xlane.f32.xlu0 %v2458
        %v2460 = vpop.xlane.xlu0 %2459
        %v2461 = vsel %vm1580, %v2267, 0.0
        %2462 = vadd.xlane.f32.xlu0 %v2461
        %v2463 = vpop.xlane.xlu0 %2462
        %v2464 = vsel %vm1580, %v2268, 0.0
        %2465 = vadd.xlane.f32.xlu0 %v2464
        %v2466 = vpop.xlane.xlu0 %2465
        %v2467 = vsel %vm1580, %v2269, 0.0
        %2468 = vadd.xlane.f32.xlu0 %v2467
        %v2469 = vpop.xlane.xlu0 %2468
        %v2470 = vsel %vm1580, %v2270, 0.0
        %2471 = vadd.xlane.f32.xlu0 %v2470
        %v2472 = vpop.xlane.xlu0 %2471
        %v2473 = vsel %vm1580, %v2271, 0.0
        %2474 = vadd.xlane.f32.xlu0 %v2473
        %v2475 = vpop.xlane.xlu0 %2474
        %v2476 = vsel %vm1580, %v2272, 0.0
        %2477 = vadd.xlane.f32.xlu0 %v2476
        %v2478 = vpop.xlane.xlu0 %2477
        %v2479 = vsel %vm1580, %v2273, 0.0
        %2480 = vadd.xlane.f32.xlu0 %v2479
        %v2481 = vpop.xlane.xlu0 %2480
        %v2482 = vsel %vm1580, %v2274, 0.0
        %2483 = vadd.xlane.f32.xlu0 %v2482
        %v2484 = vpop.xlane.xlu0 %2483
        %v2485 = vsel %vm1580, %v2275, 0.0
        %2486 = vadd.xlane.f32.xlu0 %v2485
        %v2487 = vpop.xlane.xlu0 %2486
        %v2488 = vsel %vm1580, %v2276, 0.0
        %2489 = vadd.xlane.f32.xlu0 %v2488
        %v2490 = vpop.xlane.xlu0 %2489
        %v2491 = vsel %vm1580, %v2277, 0.0
        %2492 = vadd.xlane.f32.xlu0 %v2491
        %v2493 = vpop.xlane.xlu0 %2492
        %v2494 = vsel %vm1580, %v2278, 0.0
        %2495 = vadd.xlane.f32.xlu0 %v2494
        %v2496 = vpop.xlane.xlu0 %2495
        %v2497 = vsel %vm1580, %v2279, 0.0
        %2498 = vadd.xlane.f32.xlu0 %v2497
        %v2499 = vpop.xlane.xlu0 %2498
        %v2500 = vsel %vm1580, %v2280, 0.0
        %2501 = vadd.xlane.f32.xlu0 %v2500
        %v2502 = vpop.xlane.xlu0 %2501
        %v2503 = vsel %vm1580, %v2281, 0.0
        %2504 = vadd.xlane.f32.xlu0 %v2503
        %v2505 = vpop.xlane.xlu0 %2504
        %v2506 = vsel %vm1580, %v2282, 0.0
        %2507 = vadd.xlane.f32.xlu0 %v2506
        %v2508 = vpop.xlane.xlu0 %2507
        %v2509 = vsel %vm1580, %v2283, 0.0
        %2510 = vadd.xlane.f32.xlu0 %v2509
        %v2511 = vpop.xlane.xlu0 %2510
        %v2512 = vsel %vm1580, %v2284, 0.0
        %2513 = vadd.xlane.f32.xlu0 %v2512
        %v2514 = vpop.xlane.xlu0 %2513
        %v2515 = vsel %vm1580, %v2285, 0.0
        %2516 = vadd.xlane.f32.xlu0 %v2515
        %v2517 = vpop.xlane.xlu0 %2516
        %v2518 = vsel %vm1580, %v2286, 0.0
        %2519 = vadd.xlane.f32.xlu0 %v2518
        %v2520 = vpop.xlane.xlu0 %2519
        %v2521 = vsel %vm1580, %v2287, 0.0
        %2522 = vadd.xlane.f32.xlu0 %v2521
        %v2523 = vpop.xlane.xlu0 %2522
        %v2524 = vsel %vm1580, %v2288, 0.0
        %2525 = vadd.xlane.f32.xlu0 %v2524
        %v2526 = vpop.xlane.xlu0 %2525
        %v2527 = vsel %vm1580, %v2289, 0.0
        %2528 = vadd.xlane.f32.xlu0 %v2527
        %v2529 = vpop.xlane.xlu0 %2528
        %v2530 = vsel %vm1580, %v2290, 0.0
        %2531 = vadd.xlane.f32.xlu0 %v2530
        %v2532 = vpop.xlane.xlu0 %2531
        %v2533 = vsel %vm1580, %v2291, 0.0
        %2534 = vadd.xlane.f32.xlu0 %v2533
        %v2535 = vpop.xlane.xlu0 %2534
        %v2536 = vsel %vm1580, %v2292, 0.0
        %2537 = vadd.xlane.f32.xlu0 %v2536
        %v2538 = vpop.xlane.xlu0 %2537
        %v2539 = vsel %vm1580, %v2293, 0.0
        %2540 = vadd.xlane.f32.xlu0 %v2539
        %v2541 = vpop.xlane.xlu0 %2540
        %v2542 = vsel %vm1580, %v2294, 0.0
        %2543 = vadd.xlane.f32.xlu0 %v2542
        %v2544 = vpop.xlane.xlu0 %2543
        %v2545 = vsel %vm1580, %v2295, 0.0
        %2546 = vadd.xlane.f32.xlu0 %v2545
        %v2547 = vpop.xlane.xlu0 %2546
        %v2548 = vsel %vm1580, %v2296, 0.0
        %2549 = vadd.xlane.f32.xlu0 %v2548
        %v2550 = vpop.xlane.xlu0 %2549
        %v2551 = vsel %vm1580, %v2297, 0.0
        %2552 = vadd.xlane.f32.xlu0 %v2551
        %v2553 = vpop.xlane.xlu0 %2552
        %v2554 = vsel %vm1580, %v2298, 0.0
        %2555 = vadd.xlane.f32.xlu0 %v2554
        %v2556 = vpop.xlane.xlu0 %2555
        %v2557 = vsel %vm1580, %v2299, 0.0
        %2558 = vadd.xlane.f32.xlu0 %v2557
        %v2559 = vpop.xlane.xlu0 %2558
        %v2560 = vsel %vm1580, %v2300, 0.0
        %2561 = vadd.xlane.f32.xlu0 %v2560
        %v2562 = vpop.xlane.xlu0 %2561
        %v2563 = vsel %vm1580, %v2301, 0.0
        %2564 = vadd.xlane.f32.xlu0 %v2563
        %v2565 = vpop.xlane.xlu0 %2564
        %v2566 = vsel %vm1580, %v2302, 0.0
        %2567 = vadd.xlane.f32.xlu0 %v2566
        %v2568 = vpop.xlane.xlu0 %2567
        %v2569 = vsel %vm1580, %v2303, 0.0
        %2570 = vadd.xlane.f32.xlu0 %v2569
        %v2571 = vpop.xlane.xlu0 %2570
        %v2572 = vsel %vm1580, %v2304, 0.0
        %2573 = vadd.xlane.f32.xlu0 %v2572
        %v2574 = vpop.xlane.xlu0 %2573
        %v2575 = vsel %vm1580, %v2305, 0.0
        %2576 = vadd.xlane.f32.xlu0 %v2575
        %v2577 = vpop.xlane.xlu0 %2576
        %v2578 = vsel %vm1580, %v2306, 0.0
        %2579 = vadd.xlane.f32.xlu0 %v2578
        %v2580 = vpop.xlane.xlu0 %2579
        %v2581 = vsel %vm1580, %v2307, 0.0
        %2582 = vadd.xlane.f32.xlu0 %v2581
        %v2583 = vpop.xlane.xlu0 %2582
        %v2584 = vsel %vm1580, %v2308, 0.0
        %2585 = vadd.xlane.f32.xlu0 %v2584
        %v2586 = vpop.xlane.xlu0 %2585
        %v2587 = vsel %vm1580, %v2309, 0.0
        %2588 = vadd.xlane.f32.xlu0 %v2587
        %v2589 = vpop.xlane.xlu0 %2588
        %v2590 = vsel %vm1580, %v2310, 0.0
        %2591 = vadd.xlane.f32.xlu0 %v2590
        %v2592 = vpop.xlane.xlu0 %2591
        %v2593 = vsel %vm1580, %v2311, 0.0
        %2594 = vadd.xlane.f32.xlu0 %v2593
        %v2595 = vpop.xlane.xlu0 %2594
        %v2596 = vsel %vm1580, %v2312, 0.0
        %2597 = vadd.xlane.f32.xlu0 %v2596
        %v2598 = vpop.xlane.xlu0 %2597
        %v2599 = vsel %vm1580, %v2313, 0.0
        %2600 = vadd.xlane.f32.xlu0 %v2599
        %v2601 = vpop.xlane.xlu0 %2600
        %v2602 = vsel %vm1580, %v2314, 0.0
        %2603 = vadd.xlane.f32.xlu0 %v2602
        %v2604 = vpop.xlane.xlu0 %2603
        %v2605 = vsel %vm1580, %v2315, 0.0
        %2606 = vadd.xlane.f32.xlu0 %v2605
        %v2607 = vpop.xlane.xlu0 %2606
        %v2608 = vsel %vm1580, %v2316, 0.0
        %2609 = vadd.xlane.f32.xlu0 %v2608
        %v2610 = vpop.xlane.xlu0 %2609
        %v2611 = vsel %vm1580, %v2317, 0.0
        %2612 = vadd.xlane.f32.xlu0 %v2611
        %v2613 = vpop.xlane.xlu0 %2612
        %v2614 = vsel %vm1580, %v2318, 0.0
        %2615 = vadd.xlane.f32.xlu0 %v2614
        %v2616 = vpop.xlane.xlu0 %2615
        %v2617 = vsel %vm1580, %v2319, 0.0
        %2618 = vadd.xlane.f32.xlu0 %v2617
        %v2619 = vpop.xlane.xlu0 %2618
        %v2620 = vsel %vm1580, %v2320, 0.0
        %2621 = vadd.xlane.f32.xlu0 %v2620
        %v2622 = vpop.xlane.xlu0 %2621
        %v2623 = vsel %vm1580, %v2321, 0.0
        %2624 = vadd.xlane.f32.xlu0 %v2623
        %v2625 = vpop.xlane.xlu0 %2624
        %v2626 = vsel %vm1580, %v2322, 0.0
        %2627 = vadd.xlane.f32.xlu0 %v2626
        %v2628 = vpop.xlane.xlu0 %2627
        %v2629 = vsel %vm1580, %v2323, 0.0
        %2630 = vadd.xlane.f32.xlu0 %v2629
        %v2631 = vpop.xlane.xlu0 %2630
        %v2632 = vsel %vm1580, %v2324, 0.0
        %2633 = vadd.xlane.f32.xlu0 %v2632
        %v2634 = vpop.xlane.xlu0 %2633
        %v2635 = vsel %vm1580, %v2325, 0.0
        %2636 = vadd.xlane.f32.xlu0 %v2635
        %v2637 = vpop.xlane.xlu0 %2636
        %v2638 = vsel %vm1580, %v2326, 0.0
        %2639 = vadd.xlane.f32.xlu0 %v2638
        %v2640 = vpop.xlane.xlu0 %2639
        %v2641 = vsel %vm1580, %v2327, 0.0
        %2642 = vadd.xlane.f32.xlu0 %v2641
        %v2643 = vpop.xlane.xlu0 %2642
        %v2644 = vsel %vm1580, %v2328, 0.0
        %2645 = vadd.xlane.f32.xlu0 %v2644
        %v2646 = vpop.xlane.xlu0 %2645
        %v2647 = vsel %vm1580, %v2329, 0.0
        %2648 = vadd.xlane.f32.xlu0 %v2647
        %v2649 = vpop.xlane.xlu0 %2648
        %v2650 = vsel %vm1580, %v2330, 0.0
        %2651 = vadd.xlane.f32.xlu0 %v2650
        %v2652 = vpop.xlane.xlu0 %2651
        %v2653 = vsel %vm1580, %v2331, 0.0
        %2654 = vadd.xlane.f32.xlu0 %v2653
        %v2655 = vpop.xlane.xlu0 %2654
        %v2656 = vsel %vm1580, %v2332, 0.0
        %2657 = vadd.xlane.f32.xlu0 %v2656
        %v2658 = vpop.xlane.xlu0 %2657
        %v2659 = vsel %vm1580, %v2333, 0.0
        %2660 = vadd.xlane.f32.xlu0 %v2659
        %v2661 = vpop.xlane.xlu0 %2660
        %v2662 = vsel %vm1580, %v2334, 0.0
        %2663 = vadd.xlane.f32.xlu0 %v2662
        %v2664 = vpop.xlane.xlu0 %2663
        %v2665 = vsel %vm1580, %v2335, 0.0
        %2666 = vadd.xlane.f32.xlu0 %v2665
        %v2667 = vpop.xlane.xlu0 %2666
        %v2668 = vsel %vm1580, %v2336, 0.0
        %2669 = vadd.xlane.f32.xlu0 %v2668
        %v2670 = vpop.xlane.xlu0 %2669
        %v2671 = vsel %vm1580, %v2337, 0.0
        %2672 = vadd.xlane.f32.xlu0 %v2671
        %v2673 = vpop.xlane.xlu0 %2672
        %v2674 = vsel %vm1580, %v2338, 0.0
        %2675 = vadd.xlane.f32.xlu0 %v2674
        %v2676 = vpop.xlane.xlu0 %2675
        %v2677 = vsel %vm1580, %v2339, 0.0
        %2678 = vadd.xlane.f32.xlu0 %v2677
        %v2679 = vpop.xlane.xlu0 %2678
        %v2680 = vsel %vm1580, %v2340, 0.0
        %2681 = vadd.xlane.f32.xlu0 %v2680
        %v2682 = vpop.xlane.xlu0 %2681
        %v2683 = vsel %vm1580, %v2341, 0.0
        %2684 = vadd.xlane.f32.xlu0 %v2683
        %v2685 = vpop.xlane.xlu0 %2684
        %v2686 = vsel %vm1580, %v2342, 0.0
        %2687 = vadd.xlane.f32.xlu0 %v2686
        %v2688 = vpop.xlane.xlu0 %2687
        %v2689 = vsel %vm1580, %v2343, 0.0
        %2690 = vadd.xlane.f32.xlu0 %v2689
        %v2691 = vpop.xlane.xlu0 %2690
        %v2692 = vsel %vm1580, %v2344, 0.0
        %2693 = vadd.xlane.f32.xlu0 %v2692
        %v2694 = vpop.xlane.xlu0 %2693
        %v2695 = vsel %vm1580, %v2345, 0.0
        %2696 = vadd.xlane.f32.xlu0 %v2695
        %v2697 = vpop.xlane.xlu0 %2696
        %v2698 = vsel %vm1580, %v2346, 0.0
        %2699 = vadd.xlane.f32.xlu0 %v2698
        %v2700 = vpop.xlane.xlu0 %2699
        %v2701 = vsel %vm1580, %v2347, 0.0
        %2702 = vadd.xlane.f32.xlu0 %v2701
        %v2703 = vpop.xlane.xlu0 %2702
        %v2704 = vsel %vm1580, %v2348, 0.0
        %2705 = vadd.xlane.f32.xlu0 %v2704
        %v2706 = vpop.xlane.xlu0 %2705
        %v2707 = vsel %vm1580, %v2349, 0.0
        %2708 = vadd.xlane.f32.xlu0 %v2707
        %v2709 = vpop.xlane.xlu0 %2708
        %v2710 = vsel %vm1580, %v2350, 0.0
        %2711 = vadd.xlane.f32.xlu0 %v2710
        %v2712 = vpop.xlane.xlu0 %2711
        %v2713 = vsel %vm1580, %v2351, 0.0
        %2714 = vadd.xlane.f32.xlu0 %v2713
        %v2715 = vpop.xlane.xlu0 %2714
        %v2716 = vsel %vm1580, %v2352, 0.0
        %2717 = vadd.xlane.f32.xlu0 %v2716
        %v2718 = vpop.xlane.xlu0 %2717
        %v2719 = vsel %vm1580, %v2353, 0.0
        %2720 = vadd.xlane.f32.xlu0 %v2719
        %v2721 = vpop.xlane.xlu0 %2720
        %v2722 = vsel %vm1580, %v2354, 0.0
        %2723 = vadd.xlane.f32.xlu0 %v2722
        %v2724 = vpop.xlane.xlu0 %2723
        %v2725 = vsel %vm1580, %v2355, 0.0
        %2726 = vadd.xlane.f32.xlu0 %v2725
        %v2727 = vpop.xlane.xlu0 %2726
        %v2728 = vsel %vm1580, %v2356, 0.0
        %2729 = vadd.xlane.f32.xlu0 %v2728
        %v2730 = vpop.xlane.xlu0 %2729
        %v2731 = vsel %vm1580, %v2357, 0.0
        %2732 = vadd.xlane.f32.xlu0 %v2731
        %v2733 = vpop.xlane.xlu0 %2732
        %v2734 = vsel %vm1580, %v2358, 0.0
        %2735 = vadd.xlane.f32.xlu0 %v2734
        %v2736 = vpop.xlane.xlu0 %2735
        %v2737 = vsel %vm1580, %v2359, 0.0
        %2738 = vadd.xlane.f32.xlu0 %v2737
        %v2739 = vpop.xlane.xlu0 %2738
        %v2740 = vsel %vm1580, %v2360, 0.0
        %2741 = vadd.xlane.f32.xlu0 %v2740
        %v2742 = vpop.xlane.xlu0 %2741
        %v2743 = vsel %vm1580, %v2361, 0.0
        %2744 = vadd.xlane.f32.xlu0 %v2743
        %v2745 = vpop.xlane.xlu0 %2744
        %v2746 = vld [vmem:[#allocation2] sm:$0x1]
        %v2748 = vperm.slane %v2746, 0
        %v2750 = vadd.f32 %v2364, %v2748
        %v2751 = vadd.f32 %v2367, %v2748
        %v2752 = vadd.f32 %v2370, %v2748
        %v2753 = vadd.f32 %v2373, %v2748
        %v2754 = vadd.f32 %v2376, %v2748
        %v2755 = vadd.f32 %v2379, %v2748
        %v2756 = vadd.f32 %v2382, %v2748
        %v2757 = vadd.f32 %v2385, %v2748
        %v2758 = vadd.f32 %v2388, %v2748
        %v2759 = vadd.f32 %v2391, %v2748
        %v2760 = vadd.f32 %v2394, %v2748
        %v2761 = vadd.f32 %v2397, %v2748
        %v2762 = vadd.f32 %v2400, %v2748
        %v2763 = vadd.f32 %v2403, %v2748
        %v2764 = vadd.f32 %v2406, %v2748
        %v2765 = vadd.f32 %v2409, %v2748
        %v2766 = vadd.f32 %v2412, %v2748
        %v2767 = vadd.f32 %v2415, %v2748
        %v2768 = vadd.f32 %v2418, %v2748
        %v2769 = vadd.f32 %v2421, %v2748
        %v2770 = vadd.f32 %v2424, %v2748
        %v2771 = vadd.f32 %v2427, %v2748
        %v2772 = vadd.f32 %v2430, %v2748
        %v2773 = vadd.f32 %v2433, %v2748
        %v2774 = vadd.f32 %v2436, %v2748
        %v2775 = vadd.f32 %v2439, %v2748
        %v2776 = vadd.f32 %v2442, %v2748
        %v2777 = vadd.f32 %v2445, %v2748
        %v2778 = vadd.f32 %v2448, %v2748
        %v2779 = vadd.f32 %v2451, %v2748
        %v2780 = vadd.f32 %v2454, %v2748
        %v2781 = vadd.f32 %v2457, %v2748
        %v2782 = vadd.f32 %v2460, %v2748
        %v2783 = vadd.f32 %v2463, %v2748
        %v2784 = vadd.f32 %v2466, %v2748
        %v2785 = vadd.f32 %v2469, %v2748
        %v2786 = vadd.f32 %v2472, %v2748
        %v2787 = vadd.f32 %v2475, %v2748
        %v2788 = vadd.f32 %v2478, %v2748
        %v2789 = vadd.f32 %v2481, %v2748
        %v2790 = vadd.f32 %v2484, %v2748
        %v2791 = vadd.f32 %v2487, %v2748
        %v2792 = vadd.f32 %v2490, %v2748
        %v2793 = vadd.f32 %v2493, %v2748
        %v2794 = vadd.f32 %v2496, %v2748
        %v2795 = vadd.f32 %v2499, %v2748
        %v2796 = vadd.f32 %v2502, %v2748
        %v2797 = vadd.f32 %v2505, %v2748
        %v2798 = vadd.f32 %v2508, %v2748
        %v2799 = vadd.f32 %v2511, %v2748
        %v2800 = vadd.f32 %v2514, %v2748
        %v2801 = vadd.f32 %v2517, %v2748
        %v2802 = vadd.f32 %v2520, %v2748
        %v2803 = vadd.f32 %v2523, %v2748
        %v2804 = vadd.f32 %v2526, %v2748
        %v2805 = vadd.f32 %v2529, %v2748
        %v2806 = vadd.f32 %v2532, %v2748
        %v2807 = vadd.f32 %v2535, %v2748
        %v2808 = vadd.f32 %v2538, %v2748
        %v2809 = vadd.f32 %v2541, %v2748
        %v2810 = vadd.f32 %v2544, %v2748
        %v2811 = vadd.f32 %v2547, %v2748
        %v2812 = vadd.f32 %v2550, %v2748
        %v2813 = vadd.f32 %v2553, %v2748
        %v2814 = vadd.f32 %v2556, %v2748
        %v2815 = vadd.f32 %v2559, %v2748
        %v2816 = vadd.f32 %v2562, %v2748
        %v2817 = vadd.f32 %v2565, %v2748
        %v2818 = vadd.f32 %v2568, %v2748
        %v2819 = vadd.f32 %v2571, %v2748
        %v2820 = vadd.f32 %v2574, %v2748
        %v2821 = vadd.f32 %v2577, %v2748
        %v2822 = vadd.f32 %v2580, %v2748
        %v2823 = vadd.f32 %v2583, %v2748
        %v2824 = vadd.f32 %v2586, %v2748
        %v2825 = vadd.f32 %v2589, %v2748
        %v2826 = vadd.f32 %v2592, %v2748
        %v2827 = vadd.f32 %v2595, %v2748
        %v2828 = vadd.f32 %v2598, %v2748
        %v2829 = vadd.f32 %v2601, %v2748
        %v2830 = vadd.f32 %v2604, %v2748
        %v2831 = vadd.f32 %v2607, %v2748
        %v2832 = vadd.f32 %v2610, %v2748
        %v2833 = vadd.f32 %v2613, %v2748
        %v2834 = vadd.f32 %v2616, %v2748
        %v2835 = vadd.f32 %v2619, %v2748
        %v2836 = vadd.f32 %v2622, %v2748
        %v2837 = vadd.f32 %v2625, %v2748
        %v2838 = vadd.f32 %v2628, %v2748
        %v2839 = vadd.f32 %v2631, %v2748
        %v2840 = vadd.f32 %v2634, %v2748
        %v2841 = vadd.f32 %v2637, %v2748
        %v2842 = vadd.f32 %v2640, %v2748
        %v2843 = vadd.f32 %v2643, %v2748
        %v2844 = vadd.f32 %v2646, %v2748
        %v2845 = vadd.f32 %v2649, %v2748
        %v2846 = vadd.f32 %v2652, %v2748
        %v2847 = vadd.f32 %v2655, %v2748
        %v2848 = vadd.f32 %v2658, %v2748
        %v2849 = vadd.f32 %v2661, %v2748
        %v2850 = vadd.f32 %v2664, %v2748
        %v2851 = vadd.f32 %v2667, %v2748
        %v2852 = vadd.f32 %v2670, %v2748
        %v2853 = vadd.f32 %v2673, %v2748
        %v2854 = vadd.f32 %v2676, %v2748
        %v2855 = vadd.f32 %v2679, %v2748
        %v2856 = vadd.f32 %v2682, %v2748
        %v2857 = vadd.f32 %v2685, %v2748
        %v2858 = vadd.f32 %v2688, %v2748
        %v2859 = vadd.f32 %v2691, %v2748
        %v2860 = vadd.f32 %v2694, %v2748
        %v2861 = vadd.f32 %v2697, %v2748
        %v2862 = vadd.f32 %v2700, %v2748
        %v2863 = vadd.f32 %v2703, %v2748
        %v2864 = vadd.f32 %v2706, %v2748
        %v2865 = vadd.f32 %v2709, %v2748
        %v2866 = vadd.f32 %v2712, %v2748
        %v2867 = vadd.f32 %v2715, %v2748
        %v2868 = vadd.f32 %v2718, %v2748
        %v2869 = vadd.f32 %v2721, %v2748
        %v2870 = vadd.f32 %v2724, %v2748
        %v2871 = vadd.f32 %v2727, %v2748
        %v2872 = vadd.f32 %v2730, %v2748
        %v2873 = vadd.f32 %v2733, %v2748
        %v2874 = vadd.f32 %v2736, %v2748
        %v2875 = vadd.f32 %v2739, %v2748
        %v2876 = vadd.f32 %v2742, %v2748
        %v2877 = vadd.f32 %v2745, %v2748
        %v2878 = vxor.u32 %v2750, 2147483648
        %v2879 = vxor.u32 %v2751, 2147483648
        %v2880 = vxor.u32 %v2752, 2147483648
        %v2881 = vxor.u32 %v2753, 2147483648
        %v2882 = vxor.u32 %v2754, 2147483648
        %v2883 = vxor.u32 %v2755, 2147483648
        %v2884 = vxor.u32 %v2756, 2147483648
        %v2885 = vxor.u32 %v2757, 2147483648
        %v2886 = vxor.u32 %v2758, 2147483648
        %v2887 = vxor.u32 %v2759, 2147483648
        %v2888 = vxor.u32 %v2760, 2147483648
        %v2889 = vxor.u32 %v2761, 2147483648
        %v2890 = vxor.u32 %v2762, 2147483648
        %v2891 = vxor.u32 %v2763, 2147483648
        %v2892 = vxor.u32 %v2764, 2147483648
        %v2893 = vxor.u32 %v2765, 2147483648
        %v2894 = vxor.u32 %v2766, 2147483648
        %v2895 = vxor.u32 %v2767, 2147483648
        %v2896 = vxor.u32 %v2768, 2147483648
        %v2897 = vxor.u32 %v2769, 2147483648
        %v2898 = vxor.u32 %v2770, 2147483648
        %v2899 = vxor.u32 %v2771, 2147483648
        %v2900 = vxor.u32 %v2772, 2147483648
        %v2901 = vxor.u32 %v2773, 2147483648
        %v2902 = vxor.u32 %v2774, 2147483648
        %v2903 = vxor.u32 %v2775, 2147483648
        %v2904 = vxor.u32 %v2776, 2147483648
        %v2905 = vxor.u32 %v2777, 2147483648
        %v2906 = vxor.u32 %v2778, 2147483648
        %v2907 = vxor.u32 %v2779, 2147483648
        %v2908 = vxor.u32 %v2780, 2147483648
        %v2909 = vxor.u32 %v2781, 2147483648
        %v2910 = vxor.u32 %v2782, 2147483648
        %v2911 = vxor.u32 %v2783, 2147483648
        %v2912 = vxor.u32 %v2784, 2147483648
        %v2913 = vxor.u32 %v2785, 2147483648
        %v2914 = vxor.u32 %v2786, 2147483648
        %v2915 = vxor.u32 %v2787, 2147483648
        %v2916 = vxor.u32 %v2788, 2147483648
        %v2917 = vxor.u32 %v2789, 2147483648
        %v2918 = vxor.u32 %v2790, 2147483648
        %v2919 = vxor.u32 %v2791, 2147483648
        %v2920 = vxor.u32 %v2792, 2147483648
        %v2921 = vxor.u32 %v2793, 2147483648
        %v2922 = vxor.u32 %v2794, 2147483648
        %v2923 = vxor.u32 %v2795, 2147483648
        %v2924 = vxor.u32 %v2796, 2147483648
        %v2925 = vxor.u32 %v2797, 2147483648
        %v2926 = vxor.u32 %v2798, 2147483648
        %v2927 = vxor.u32 %v2799, 2147483648
        %v2928 = vxor.u32 %v2800, 2147483648
        %v2929 = vxor.u32 %v2801, 2147483648
        %v2930 = vxor.u32 %v2802, 2147483648
        %v2931 = vxor.u32 %v2803, 2147483648
        %v2932 = vxor.u32 %v2804, 2147483648
        %v2933 = vxor.u32 %v2805, 2147483648
        %v2934 = vxor.u32 %v2806, 2147483648
        %v2935 = vxor.u32 %v2807, 2147483648
        %v2936 = vxor.u32 %v2808, 2147483648
        %v2937 = vxor.u32 %v2809, 2147483648
        %v2938 = vxor.u32 %v2810, 2147483648
        %v2939 = vxor.u32 %v2811, 2147483648
        %v2940 = vxor.u32 %v2812, 2147483648
        %v2941 = vxor.u32 %v2813, 2147483648
        %v2942 = vxor.u32 %v2814, 2147483648
        %v2943 = vxor.u32 %v2815, 2147483648
        %v2944 = vxor.u32 %v2816, 2147483648
        %v2945 = vxor.u32 %v2817, 2147483648
        %v2946 = vxor.u32 %v2818, 2147483648
        %v2947 = vxor.u32 %v2819, 2147483648
        %v2948 = vxor.u32 %v2820, 2147483648
        %v2949 = vxor.u32 %v2821, 2147483648
        %v2950 = vxor.u32 %v2822, 2147483648
        %v2951 = vxor.u32 %v2823, 2147483648
        %v2952 = vxor.u32 %v2824, 2147483648
        %v2953 = vxor.u32 %v2825, 2147483648
        %v2954 = vxor.u32 %v2826, 2147483648
        %v2955 = vxor.u32 %v2827, 2147483648
        %v2956 = vxor.u32 %v2828, 2147483648
        %v2957 = vxor.u32 %v2829, 2147483648
        %v2958 = vxor.u32 %v2830, 2147483648
        %v2959 = vxor.u32 %v2831, 2147483648
        %v2960 = vxor.u32 %v2832, 2147483648
        %v2961 = vxor.u32 %v2833, 2147483648
        %v2962 = vxor.u32 %v2834, 2147483648
        %v2963 = vxor.u32 %v2835, 2147483648
        %v2964 = vxor.u32 %v2836, 2147483648
        %v2965 = vxor.u32 %v2837, 2147483648
        %v2966 = vxor.u32 %v2838, 2147483648
        %v2967 = vxor.u32 %v2839, 2147483648
        %v2968 = vxor.u32 %v2840, 2147483648
        %v2969 = vxor.u32 %v2841, 2147483648
        %v2970 = vxor.u32 %v2842, 2147483648
        %v2971 = vxor.u32 %v2843, 2147483648
        %v2972 = vxor.u32 %v2844, 2147483648
        %v2973 = vxor.u32 %v2845, 2147483648
        %v2974 = vxor.u32 %v2846, 2147483648
        %v2975 = vxor.u32 %v2847, 2147483648
        %v2976 = vxor.u32 %v2848, 2147483648
        %v2977 = vxor.u32 %v2849, 2147483648
        %v2978 = vxor.u32 %v2850, 2147483648
        %v2979 = vxor.u32 %v2851, 2147483648
        %v2980 = vxor.u32 %v2852, 2147483648
        %v2981 = vxor.u32 %v2853, 2147483648
        %v2982 = vxor.u32 %v2854, 2147483648
        %v2983 = vxor.u32 %v2855, 2147483648
        %v2984 = vxor.u32 %v2856, 2147483648
        %v2985 = vxor.u32 %v2857, 2147483648
        %v2986 = vxor.u32 %v2858, 2147483648
        %v2987 = vxor.u32 %v2859, 2147483648
        %v2988 = vxor.u32 %v2860, 2147483648
        %v2989 = vxor.u32 %v2861, 2147483648
        %v2990 = vxor.u32 %v2862, 2147483648
        %v2991 = vxor.u32 %v2863, 2147483648
        %v2992 = vxor.u32 %v2864, 2147483648
        %v2993 = vxor.u32 %v2865, 2147483648
        %v2994 = vxor.u32 %v2866, 2147483648
        %v2995 = vxor.u32 %v2867, 2147483648
        %v2996 = vxor.u32 %v2868, 2147483648
        %v2997 = vxor.u32 %v2869, 2147483648
        %v2998 = vxor.u32 %v2870, 2147483648
        %v2999 = vxor.u32 %v2871, 2147483648
        %v3000 = vxor.u32 %v2872, 2147483648
        %v3001 = vxor.u32 %v2873, 2147483648
        %v3002 = vxor.u32 %v2874, 2147483648
        %v3003 = vxor.u32 %v2875, 2147483648
        %v3004 = vxor.u32 %v2876, 2147483648
        %v3005 = vxor.u32 %v2877, 2147483648
        %v3006 = vmul.f32 %v2878, 1.442695
        %v3007 = vpow.pop %v3006
        %v3008 = vmul.f32 %v2879, 1.442695
        %v3009 = vpow.pop %v3008
        %v3010 = vmul.f32 %v2880, 1.442695
        %v3011 = vpow.pop %v3010
        %v3012 = vmul.f32 %v2881, 1.442695
        %v3013 = vpow.pop %v3012
        %v3014 = vmul.f32 %v2882, 1.442695
        %v3015 = vpow.pop %v3014
        %v3016 = vmul.f32 %v2883, 1.442695
        %v3017 = vpow.pop %v3016
        %v3018 = vmul.f32 %v2884, 1.442695
        %v3019 = vpow.pop %v3018
        %v3020 = vmul.f32 %v2885, 1.442695
        %v3021 = vpow.pop %v3020
        %v3022 = vmul.f32 %v2886, 1.442695
        %v3023 = vpow.pop %v3022
        %v3024 = vmul.f32 %v2887, 1.442695
        %v3025 = vpow.pop %v3024
        %v3026 = vmul.f32 %v2888, 1.442695
        %v3027 = vpow.pop %v3026
        %v3028 = vmul.f32 %v2889, 1.442695
        %v3029 = vpow.pop %v3028
        %v3030 = vmul.f32 %v2890, 1.442695
        %v3031 = vpow.pop %v3030
        %v3032 = vmul.f32 %v2891, 1.442695
        %v3033 = vpow.pop %v3032
        %v3034 = vmul.f32 %v2892, 1.442695
        %v3035 = vpow.pop %v3034
        %v3036 = vmul.f32 %v2893, 1.442695
        %v3037 = vpow.pop %v3036
        %v3038 = vmul.f32 %v2894, 1.442695
        %v3039 = vpow.pop %v3038
        %v3040 = vmul.f32 %v2895, 1.442695
        %v3041 = vpow.pop %v3040
        %v3042 = vmul.f32 %v2896, 1.442695
        %v3043 = vpow.pop %v3042
        %v3044 = vmul.f32 %v2897, 1.442695
        %v3045 = vpow.pop %v3044
        %v3046 = vmul.f32 %v2898, 1.442695
        %v3047 = vpow.pop %v3046
        %v3048 = vmul.f32 %v2899, 1.442695
        %v3049 = vpow.pop %v3048
        %v3050 = vmul.f32 %v2900, 1.442695
        %v3051 = vpow.pop %v3050
        %v3052 = vmul.f32 %v2901, 1.442695
        %v3053 = vpow.pop %v3052
        %v3054 = vmul.f32 %v2902, 1.442695
        %v3055 = vpow.pop %v3054
        %v3056 = vmul.f32 %v2903, 1.442695
        %v3057 = vpow.pop %v3056
        %v3058 = vmul.f32 %v2904, 1.442695
        %v3059 = vpow.pop %v3058
        %v3060 = vmul.f32 %v2905, 1.442695
        %v3061 = vpow.pop %v3060
        %v3062 = vmul.f32 %v2906, 1.442695
        %v3063 = vpow.pop %v3062
        %v3064 = vmul.f32 %v2907, 1.442695
        %v3065 = vpow.pop %v3064
        %v3066 = vmul.f32 %v2908, 1.442695
        %v3067 = vpow.pop %v3066
        %v3068 = vmul.f32 %v2909, 1.442695
        %v3069 = vpow.pop %v3068
        %v3070 = vmul.f32 %v2910, 1.442695
        %v3071 = vpow.pop %v3070
        %v3072 = vmul.f32 %v2911, 1.442695
        %v3073 = vpow.pop %v3072
        %v3074 = vmul.f32 %v2912, 1.442695
        %v3075 = vpow.pop %v3074
        %v3076 = vmul.f32 %v2913, 1.442695
        %v3077 = vpow.pop %v3076
        %v3078 = vmul.f32 %v2914, 1.442695
        %v3079 = vpow.pop %v3078
        %v3080 = vmul.f32 %v2915, 1.442695
        %v3081 = vpow.pop %v3080
        %v3082 = vmul.f32 %v2916, 1.442695
        %v3083 = vpow.pop %v3082
        %v3084 = vmul.f32 %v2917, 1.442695
        %v3085 = vpow.pop %v3084
        %v3086 = vmul.f32 %v2918, 1.442695
        %v3087 = vpow.pop %v3086
        %v3088 = vmul.f32 %v2919, 1.442695
        %v3089 = vpow.pop %v3088
        %v3090 = vmul.f32 %v2920, 1.442695
        %v3091 = vpow.pop %v3090
        %v3092 = vmul.f32 %v2921, 1.442695
        %v3093 = vpow.pop %v3092
        %v3094 = vmul.f32 %v2922, 1.442695
        %v3095 = vpow.pop %v3094
        %v3096 = vmul.f32 %v2923, 1.442695
        %v3097 = vpow.pop %v3096
        %v3098 = vmul.f32 %v2924, 1.442695
        %v3099 = vpow.pop %v3098
        %v3100 = vmul.f32 %v2925, 1.442695
        %v3101 = vpow.pop %v3100
        %v3102 = vmul.f32 %v2926, 1.442695
        %v3103 = vpow.pop %v3102
        %v3104 = vmul.f32 %v2927, 1.442695
        %v3105 = vpow.pop %v3104
        %v3106 = vmul.f32 %v2928, 1.442695
        %v3107 = vpow.pop %v3106
        %v3108 = vmul.f32 %v2929, 1.442695
        %v3109 = vpow.pop %v3108
        %v3110 = vmul.f32 %v2930, 1.442695
        %v3111 = vpow.pop %v3110
        %v3112 = vmul.f32 %v2931, 1.442695
        %v3113 = vpow.pop %v3112
        %v3114 = vmul.f32 %v2932, 1.442695
        %v3115 = vpow.pop %v3114
        %v3116 = vmul.f32 %v2933, 1.442695
        %v3117 = vpow.pop %v3116
        %v3118 = vmul.f32 %v2934, 1.442695
        %v3119 = vpow.pop %v3118
        %v3120 = vmul.f32 %v2935, 1.442695
        %v3121 = vpow.pop %v3120
        %v3122 = vmul.f32 %v2936, 1.442695
        %v3123 = vpow.pop %v3122
        %v3124 = vmul.f32 %v2937, 1.442695
        %v3125 = vpow.pop %v3124
        %v3126 = vmul.f32 %v2938, 1.442695
        %v3127 = vpow.pop %v3126
        %v3128 = vmul.f32 %v2939, 1.442695
        %v3129 = vpow.pop %v3128
        %v3130 = vmul.f32 %v2940, 1.442695
        %v3131 = vpow.pop %v3130
        %v3132 = vmul.f32 %v2941, 1.442695
        %v3133 = vpow.pop %v3132
        %v3134 = vmul.f32 %v2942, 1.442695
        %v3135 = vpow.pop %v3134
        %v3136 = vmul.f32 %v2943, 1.442695
        %v3137 = vpow.pop %v3136
        %v3138 = vmul.f32 %v2944, 1.442695
        %v3139 = vpow.pop %v3138
        %v3140 = vmul.f32 %v2945, 1.442695
        %v3141 = vpow.pop %v3140
        %v3142 = vmul.f32 %v2946, 1.442695
        %v3143 = vpow.pop %v3142
        %v3144 = vmul.f32 %v2947, 1.442695
        %v3145 = vpow.pop %v3144
        %v3146 = vmul.f32 %v2948, 1.442695
        %v3147 = vpow.pop %v3146
        %v3148 = vmul.f32 %v2949, 1.442695
        %v3149 = vpow.pop %v3148
        %v3150 = vmul.f32 %v2950, 1.442695
        %v3151 = vpow.pop %v3150
        %v3152 = vmul.f32 %v2951, 1.442695
        %v3153 = vpow.pop %v3152
        %v3154 = vmul.f32 %v2952, 1.442695
        %v3155 = vpow.pop %v3154
        %v3156 = vmul.f32 %v2953, 1.442695
        %v3157 = vpow.pop %v3156
        %v3158 = vmul.f32 %v2954, 1.442695
        %v3159 = vpow.pop %v3158
        %v3160 = vmul.f32 %v2955, 1.442695
        %v3161 = vpow.pop %v3160
        %v3162 = vmul.f32 %v2956, 1.442695
        %v3163 = vpow.pop %v3162
        %v3164 = vmul.f32 %v2957, 1.442695
        %v3165 = vpow.pop %v3164
        %v3166 = vmul.f32 %v2958, 1.442695
        %v3167 = vpow.pop %v3166
        %v3168 = vmul.f32 %v2959, 1.442695
        %v3169 = vpow.pop %v3168
        %v3170 = vmul.f32 %v2960, 1.442695
        %v3171 = vpow.pop %v3170
        %v3172 = vmul.f32 %v2961, 1.442695
        %v3173 = vpow.pop %v3172
        %v3174 = vmul.f32 %v2962, 1.442695
        %v3175 = vpow.pop %v3174
        %v3176 = vmul.f32 %v2963, 1.442695
        %v3177 = vpow.pop %v3176
        %v3178 = vmul.f32 %v2964, 1.442695
        %v3179 = vpow.pop %v3178
        %v3180 = vmul.f32 %v2965, 1.442695
        %v3181 = vpow.pop %v3180
        %v3182 = vmul.f32 %v2966, 1.442695
        %v3183 = vpow.pop %v3182
        %v3184 = vmul.f32 %v2967, 1.442695
        %v3185 = vpow.pop %v3184
        %v3186 = vmul.f32 %v2968, 1.442695
        %v3187 = vpow.pop %v3186
        %v3188 = vmul.f32 %v2969, 1.442695
        %v3189 = vpow.pop %v3188
        %v3190 = vmul.f32 %v2970, 1.442695
        %v3191 = vpow.pop %v3190
        %v3192 = vmul.f32 %v2971, 1.442695
        %v3193 = vpow.pop %v3192
        %v3194 = vmul.f32 %v2972, 1.442695
        %v3195 = vpow.pop %v3194
        %v3196 = vmul.f32 %v2973, 1.442695
        %v3197 = vpow.pop %v3196
        %v3198 = vmul.f32 %v2974, 1.442695
        %v3199 = vpow.pop %v3198
        %v3200 = vmul.f32 %v2975, 1.442695
        %v3201 = vpow.pop %v3200
        %v3202 = vmul.f32 %v2976, 1.442695
        %v3203 = vpow.pop %v3202
        %v3204 = vmul.f32 %v2977, 1.442695
        %v3205 = vpow.pop %v3204
        %v3206 = vmul.f32 %v2978, 1.442695
        %v3207 = vpow.pop %v3206
        %v3208 = vmul.f32 %v2979, 1.442695
        %v3209 = vpow.pop %v3208
        %v3210 = vmul.f32 %v2980, 1.442695
        %v3211 = vpow.pop %v3210
        %v3212 = vmul.f32 %v2981, 1.442695
        %v3213 = vpow.pop %v3212
        %v3214 = vmul.f32 %v2982, 1.442695
        %v3215 = vpow.pop %v3214
        %v3216 = vmul.f32 %v2983, 1.442695
        %v3217 = vpow.pop %v3216
        %v3218 = vmul.f32 %v2984, 1.442695
        %v3219 = vpow.pop %v3218
        %v3220 = vmul.f32 %v2985, 1.442695
        %v3221 = vpow.pop %v3220
        %v3222 = vmul.f32 %v2986, 1.442695
        %v3223 = vpow.pop %v3222
        %v3224 = vmul.f32 %v2987, 1.442695
        %v3225 = vpow.pop %v3224
        %v3226 = vmul.f32 %v2988, 1.442695
        %v3227 = vpow.pop %v3226
        %v3228 = vmul.f32 %v2989, 1.442695
        %v3229 = vpow.pop %v3228
        %v3230 = vmul.f32 %v2990, 1.442695
        %v3231 = vpow.pop %v3230
        %v3232 = vmul.f32 %v2991, 1.442695
        %v3233 = vpow.pop %v3232
        %v3234 = vmul.f32 %v2992, 1.442695
        %v3235 = vpow.pop %v3234
        %v3236 = vmul.f32 %v2993, 1.442695
        %v3237 = vpow.pop %v3236
        %v3238 = vmul.f32 %v2994, 1.442695
        %v3239 = vpow.pop %v3238
        %v3240 = vmul.f32 %v2995, 1.442695
        %v3241 = vpow.pop %v3240
        %v3242 = vmul.f32 %v2996, 1.442695
        %v3243 = vpow.pop %v3242
        %v3244 = vmul.f32 %v2997, 1.442695
        %v3245 = vpow.pop %v3244
        %v3246 = vmul.f32 %v2998, 1.442695
        %v3247 = vpow.pop %v3246
        %v3248 = vmul.f32 %v2999, 1.442695
        %v3249 = vpow.pop %v3248
        %v3250 = vmul.f32 %v3000, 1.442695
        %v3251 = vpow.pop %v3250
        %v3252 = vmul.f32 %v3001, 1.442695
        %v3253 = vpow.pop %v3252
        %v3254 = vmul.f32 %v3002, 1.442695
        %v3255 = vpow.pop %v3254
        %v3256 = vmul.f32 %v3003, 1.442695
        %v3257 = vpow.pop %v3256
        %v3258 = vmul.f32 %v3004, 1.442695
        %v3259 = vpow.pop %v3258
        %v3260 = vmul.f32 %v3005, 1.442695
        %v3261 = vpow.pop %v3260
        %v3262 = vadd.f32 %v3007, 1.0
        %v3263 = vadd.f32 %v3009, 1.0
        %v3264 = vadd.f32 %v3011, 1.0
        %v3265 = vadd.f32 %v3013, 1.0
        %v3266 = vadd.f32 %v3015, 1.0
        %v3267 = vadd.f32 %v3017, 1.0
        %v3268 = vadd.f32 %v3019, 1.0
        %v3269 = vadd.f32 %v3021, 1.0
        %v3270 = vadd.f32 %v3023, 1.0
        %v3271 = vadd.f32 %v3025, 1.0
        %v3272 = vadd.f32 %v3027, 1.0
        %v3273 = vadd.f32 %v3029, 1.0
        %v3274 = vadd.f32 %v3031, 1.0
        %v3275 = vadd.f32 %v3033, 1.0
        %v3276 = vadd.f32 %v3035, 1.0
        %v3277 = vadd.f32 %v3037, 1.0
        %v3278 = vadd.f32 %v3039, 1.0
        %v3279 = vadd.f32 %v3041, 1.0
        %v3280 = vadd.f32 %v3043, 1.0
        %v3281 = vadd.f32 %v3045, 1.0
        %v3282 = vadd.f32 %v3047, 1.0
        %v3283 = vadd.f32 %v3049, 1.0
        %v3284 = vadd.f32 %v3051, 1.0
        %v3285 = vadd.f32 %v3053, 1.0
        %v3286 = vadd.f32 %v3055, 1.0
        %v3287 = vadd.f32 %v3057, 1.0
        %v3288 = vadd.f32 %v3059, 1.0
        %v3289 = vadd.f32 %v3061, 1.0
        %v3290 = vadd.f32 %v3063, 1.0
        %v3291 = vadd.f32 %v3065, 1.0
        %v3292 = vadd.f32 %v3067, 1.0
        %v3293 = vadd.f32 %v3069, 1.0
        %v3294 = vadd.f32 %v3071, 1.0
        %v3295 = vadd.f32 %v3073, 1.0
        %v3296 = vadd.f32 %v3075, 1.0
        %v3297 = vadd.f32 %v3077, 1.0
        %v3298 = vadd.f32 %v3079, 1.0
        %v3299 = vadd.f32 %v3081, 1.0
        %v3300 = vadd.f32 %v3083, 1.0
        %v3301 = vadd.f32 %v3085, 1.0
        %v3302 = vadd.f32 %v3087, 1.0
        %v3303 = vadd.f32 %v3089, 1.0
        %v3304 = vadd.f32 %v3091, 1.0
        %v3305 = vadd.f32 %v3093, 1.0
        %v3306 = vadd.f32 %v3095, 1.0
        %v3307 = vadd.f32 %v3097, 1.0
        %v3308 = vadd.f32 %v3099, 1.0
        %v3309 = vadd.f32 %v3101, 1.0
        %v3310 = vadd.f32 %v3103, 1.0
        %v3311 = vadd.f32 %v3105, 1.0
        %v3312 = vadd.f32 %v3107, 1.0
        %v3313 = vadd.f32 %v3109, 1.0
        %v3314 = vadd.f32 %v3111, 1.0
        %v3315 = vadd.f32 %v3113, 1.0
        %v3316 = vadd.f32 %v3115, 1.0
        %v3317 = vadd.f32 %v3117, 1.0
        %v3318 = vadd.f32 %v3119, 1.0
        %v3319 = vadd.f32 %v3121, 1.0
        %v3320 = vadd.f32 %v3123, 1.0
        %v3321 = vadd.f32 %v3125, 1.0
        %v3322 = vadd.f32 %v3127, 1.0
        %v3323 = vadd.f32 %v3129, 1.0
        %v3324 = vadd.f32 %v3131, 1.0
        %v3325 = vadd.f32 %v3133, 1.0
        %v3326 = vadd.f32 %v3135, 1.0
        %v3327 = vadd.f32 %v3137, 1.0
        %v3328 = vadd.f32 %v3139, 1.0
        %v3329 = vadd.f32 %v3141, 1.0
        %v3330 = vadd.f32 %v3143, 1.0
        %v3331 = vadd.f32 %v3145, 1.0
        %v3332 = vadd.f32 %v3147, 1.0
        %v3333 = vadd.f32 %v3149, 1.0
        %v3334 = vadd.f32 %v3151, 1.0
        %v3335 = vadd.f32 %v3153, 1.0
        %v3336 = vadd.f32 %v3155, 1.0
        %v3337 = vadd.f32 %v3157, 1.0
        %v3338 = vadd.f32 %v3159, 1.0
        %v3339 = vadd.f32 %v3161, 1.0
        %v3340 = vadd.f32 %v3163, 1.0
        %v3341 = vadd.f32 %v3165, 1.0
        %v3342 = vadd.f32 %v3167, 1.0
        %v3343 = vadd.f32 %v3169, 1.0
        %v3344 = vadd.f32 %v3171, 1.0
        %v3345 = vadd.f32 %v3173, 1.0
        %v3346 = vadd.f32 %v3175, 1.0
        %v3347 = vadd.f32 %v3177, 1.0
        %v3348 = vadd.f32 %v3179, 1.0
        %v3349 = vadd.f32 %v3181, 1.0
        %v3350 = vadd.f32 %v3183, 1.0
        %v3351 = vadd.f32 %v3185, 1.0
        %v3352 = vadd.f32 %v3187, 1.0
        %v3353 = vadd.f32 %v3189, 1.0
        %v3354 = vadd.f32 %v3191, 1.0
        %v3355 = vadd.f32 %v3193, 1.0
        %v3356 = vadd.f32 %v3195, 1.0
        %v3357 = vadd.f32 %v3197, 1.0
        %v3358 = vadd.f32 %v3199, 1.0
        %v3359 = vadd.f32 %v3201, 1.0
        %v3360 = vadd.f32 %v3203, 1.0
        %v3361 = vadd.f32 %v3205, 1.0
        %v3362 = vadd.f32 %v3207, 1.0
        %v3363 = vadd.f32 %v3209, 1.0
        %v3364 = vadd.f32 %v3211, 1.0
        %v3365 = vadd.f32 %v3213, 1.0
        %v3366 = vadd.f32 %v3215, 1.0
        %v3367 = vadd.f32 %v3217, 1.0
        %v3368 = vadd.f32 %v3219, 1.0
        %v3369 = vadd.f32 %v3221, 1.0
        %v3370 = vadd.f32 %v3223, 1.0
        %v3371 = vadd.f32 %v3225, 1.0
        %v3372 = vadd.f32 %v3227, 1.0
        %v3373 = vadd.f32 %v3229, 1.0
        %v3374 = vadd.f32 %v3231, 1.0
        %v3375 = vadd.f32 %v3233, 1.0
        %v3376 = vadd.f32 %v3235, 1.0
        %v3377 = vadd.f32 %v3237, 1.0
        %v3378 = vadd.f32 %v3239, 1.0
        %v3379 = vadd.f32 %v3241, 1.0
        %v3380 = vadd.f32 %v3243, 1.0
        %v3381 = vadd.f32 %v3245, 1.0
        %v3382 = vadd.f32 %v3247, 1.0
        %v3383 = vadd.f32 %v3249, 1.0
        %v3384 = vadd.f32 %v3251, 1.0
        %v3385 = vadd.f32 %v3253, 1.0
        %v3386 = vadd.f32 %v3255, 1.0
        %v3387 = vadd.f32 %v3257, 1.0
        %v3388 = vadd.f32 %v3259, 1.0
        %v3389 = vadd.f32 %v3261, 1.0
        %v3390 = vrcp.pop %v3262
        %v3391 = vmul.f32 %v3262, %v3390
        %v3392 = vsub.f32 1.0, %v3391
        %v3393 = vmul.f32 %v3390, %v3392
        %v3394 = vadd.f32 %v3390, %v3393
        %vm3395 = vweird.f32 %v3262
        %vm3396 = vweird.f32 %v3390
        %vm3397 = vmor %vm3395, %vm3396
        %v3398 = vsel %vm3397, %v3390, %v3394
        %v3399 = vand.u32 2147483647, %v3262
        %vm3400 = vcmp.eq.f32.partialorder %v3399, 8.507059e+37
        %v3401 = vand.u32 %v3262, 2147483648
        %v3402 = vor.u32 1.1754944e-38, %v3401
        %v3403 = vsel %vm3400, %v3402, %v3398
        %v3404 = vmul.f32 1.0, %v3403
        %v3405 = vrcp.pop %v3263
        %v3406 = vmul.f32 %v3263, %v3405
        %v3407 = vsub.f32 1.0, %v3406
        %v3408 = vmul.f32 %v3405, %v3407
        %v3409 = vadd.f32 %v3405, %v3408
        %vm3410 = vweird.f32 %v3263
        %vm3411 = vweird.f32 %v3405
        %vm3412 = vmor %vm3410, %vm3411
        %v3413 = vsel %vm3412, %v3405, %v3409
        %v3414 = vand.u32 2147483647, %v3263
        %vm3415 = vcmp.eq.f32.partialorder %v3414, 8.507059e+37
        %v3416 = vand.u32 %v3263, 2147483648
        %v3417 = vor.u32 1.1754944e-38, %v3416
        %v3418 = vsel %vm3415, %v3417, %v3413
        %v3419 = vmul.f32 1.0, %v3418
        %v3420 = vrcp.pop %v3264
        %v3421 = vmul.f32 %v3264, %v3420
        %v3422 = vsub.f32 1.0, %v3421
        %v3423 = vmul.f32 %v3420, %v3422
        %v3424 = vadd.f32 %v3420, %v3423
        %vm3425 = vweird.f32 %v3264
        %vm3426 = vweird.f32 %v3420
        %vm3427 = vmor %vm3425, %vm3426
        %v3428 = vsel %vm3427, %v3420, %v3424
        %v3429 = vand.u32 2147483647, %v3264
        %vm3430 = vcmp.eq.f32.partialorder %v3429, 8.507059e+37
        %v3431 = vand.u32 %v3264, 2147483648
        %v3432 = vor.u32 1.1754944e-38, %v3431
        %v3433 = vsel %vm3430, %v3432, %v3428
        %v3434 = vmul.f32 1.0, %v3433
        %v3435 = vrcp.pop %v3265
        %v3436 = vmul.f32 %v3265, %v3435
        %v3437 = vsub.f32 1.0, %v3436
        %v3438 = vmul.f32 %v3435, %v3437
        %v3439 = vadd.f32 %v3435, %v3438
        %vm3440 = vweird.f32 %v3265
        %vm3441 = vweird.f32 %v3435
        %vm3442 = vmor %vm3440, %vm3441
        %v3443 = vsel %vm3442, %v3435, %v3439
        %v3444 = vand.u32 2147483647, %v3265
        %vm3445 = vcmp.eq.f32.partialorder %v3444, 8.507059e+37
        %v3446 = vand.u32 %v3265, 2147483648
        %v3447 = vor.u32 1.1754944e-38, %v3446
        %v3448 = vsel %vm3445, %v3447, %v3443
        %v3449 = vmul.f32 1.0, %v3448
        %v3450 = vrcp.pop %v3266
        %v3451 = vmul.f32 %v3266, %v3450
        %v3452 = vsub.f32 1.0, %v3451
        %v3453 = vmul.f32 %v3450, %v3452
        %v3454 = vadd.f32 %v3450, %v3453
        %vm3455 = vweird.f32 %v3266
        %vm3456 = vweird.f32 %v3450
        %vm3457 = vmor %vm3455, %vm3456
        %v3458 = vsel %vm3457, %v3450, %v3454
        %v3459 = vand.u32 2147483647, %v3266
        %vm3460 = vcmp.eq.f32.partialorder %v3459, 8.507059e+37
        %v3461 = vand.u32 %v3266, 2147483648
        %v3462 = vor.u32 1.1754944e-38, %v3461
        %v3463 = vsel %vm3460, %v3462, %v3458
        %v3464 = vmul.f32 1.0, %v3463
        %v3465 = vrcp.pop %v3267
        %v3466 = vmul.f32 %v3267, %v3465
        %v3467 = vsub.f32 1.0, %v3466
        %v3468 = vmul.f32 %v3465, %v3467
        %v3469 = vadd.f32 %v3465, %v3468
        %vm3470 = vweird.f32 %v3267
        %vm3471 = vweird.f32 %v3465
        %vm3472 = vmor %vm3470, %vm3471
        %v3473 = vsel %vm3472, %v3465, %v3469
        %v3474 = vand.u32 2147483647, %v3267
        %vm3475 = vcmp.eq.f32.partialorder %v3474, 8.507059e+37
        %v3476 = vand.u32 %v3267, 2147483648
        %v3477 = vor.u32 1.1754944e-38, %v3476
        %v3478 = vsel %vm3475, %v3477, %v3473
        %v3479 = vmul.f32 1.0, %v3478
        %v3480 = vrcp.pop %v3268
        %v3481 = vmul.f32 %v3268, %v3480
        %v3482 = vsub.f32 1.0, %v3481
        %v3483 = vmul.f32 %v3480, %v3482
        %v3484 = vadd.f32 %v3480, %v3483
        %vm3485 = vweird.f32 %v3268
        %vm3486 = vweird.f32 %v3480
        %vm3487 = vmor %vm3485, %vm3486
        %v3488 = vsel %vm3487, %v3480, %v3484
        %v3489 = vand.u32 2147483647, %v3268
        %vm3490 = vcmp.eq.f32.partialorder %v3489, 8.507059e+37
        %v3491 = vand.u32 %v3268, 2147483648
        %v3492 = vor.u32 1.1754944e-38, %v3491
        %v3493 = vsel %vm3490, %v3492, %v3488
        %v3494 = vmul.f32 1.0, %v3493
        %v3495 = vrcp.pop %v3269
        %v3496 = vmul.f32 %v3269, %v3495
        %v3497 = vsub.f32 1.0, %v3496
        %v3498 = vmul.f32 %v3495, %v3497
        %v3499 = vadd.f32 %v3495, %v3498
        %vm3500 = vweird.f32 %v3269
        %vm3501 = vweird.f32 %v3495
        %vm3502 = vmor %vm3500, %vm3501
        %v3503 = vsel %vm3502, %v3495, %v3499
        %v3504 = vand.u32 2147483647, %v3269
        %vm3505 = vcmp.eq.f32.partialorder %v3504, 8.507059e+37
        %v3506 = vand.u32 %v3269, 2147483648
        %v3507 = vor.u32 1.1754944e-38, %v3506
        %v3508 = vsel %vm3505, %v3507, %v3503
        %v3509 = vmul.f32 1.0, %v3508
        %v3510 = vrcp.pop %v3270
        %v3511 = vmul.f32 %v3270, %v3510
        %v3512 = vsub.f32 1.0, %v3511
        %v3513 = vmul.f32 %v3510, %v3512
        %v3514 = vadd.f32 %v3510, %v3513
        %vm3515 = vweird.f32 %v3270
        %vm3516 = vweird.f32 %v3510
        %vm3517 = vmor %vm3515, %vm3516
        %v3518 = vsel %vm3517, %v3510, %v3514
        %v3519 = vand.u32 2147483647, %v3270
        %vm3520 = vcmp.eq.f32.partialorder %v3519, 8.507059e+37
        %v3521 = vand.u32 %v3270, 2147483648
        %v3522 = vor.u32 1.1754944e-38, %v3521
        %v3523 = vsel %vm3520, %v3522, %v3518
        %v3524 = vmul.f32 1.0, %v3523
        %v3525 = vrcp.pop %v3271
        %v3526 = vmul.f32 %v3271, %v3525
        %v3527 = vsub.f32 1.0, %v3526
        %v3528 = vmul.f32 %v3525, %v3527
        %v3529 = vadd.f32 %v3525, %v3528
        %vm3530 = vweird.f32 %v3271
        %vm3531 = vweird.f32 %v3525
        %vm3532 = vmor %vm3530, %vm3531
        %v3533 = vsel %vm3532, %v3525, %v3529
        %v3534 = vand.u32 2147483647, %v3271
        %vm3535 = vcmp.eq.f32.partialorder %v3534, 8.507059e+37
        %v3536 = vand.u32 %v3271, 2147483648
        %v3537 = vor.u32 1.1754944e-38, %v3536
        %v3538 = vsel %vm3535, %v3537, %v3533
        %v3539 = vmul.f32 1.0, %v3538
        %v3540 = vrcp.pop %v3272
        %v3541 = vmul.f32 %v3272, %v3540
        %v3542 = vsub.f32 1.0, %v3541
        %v3543 = vmul.f32 %v3540, %v3542
        %v3544 = vadd.f32 %v3540, %v3543
        %vm3545 = vweird.f32 %v3272
        %vm3546 = vweird.f32 %v3540
        %vm3547 = vmor %vm3545, %vm3546
        %v3548 = vsel %vm3547, %v3540, %v3544
        %v3549 = vand.u32 2147483647, %v3272
        %vm3550 = vcmp.eq.f32.partialorder %v3549, 8.507059e+37
        %v3551 = vand.u32 %v3272, 2147483648
        %v3552 = vor.u32 1.1754944e-38, %v3551
        %v3553 = vsel %vm3550, %v3552, %v3548
        %v3554 = vmul.f32 1.0, %v3553
        %v3555 = vrcp.pop %v3273
        %v3556 = vmul.f32 %v3273, %v3555
        %v3557 = vsub.f32 1.0, %v3556
        %v3558 = vmul.f32 %v3555, %v3557
        %v3559 = vadd.f32 %v3555, %v3558
        %vm3560 = vweird.f32 %v3273
        %vm3561 = vweird.f32 %v3555
        %vm3562 = vmor %vm3560, %vm3561
        %v3563 = vsel %vm3562, %v3555, %v3559
        %v3564 = vand.u32 2147483647, %v3273
        %vm3565 = vcmp.eq.f32.partialorder %v3564, 8.507059e+37
        %v3566 = vand.u32 %v3273, 2147483648
        %v3567 = vor.u32 1.1754944e-38, %v3566
        %v3568 = vsel %vm3565, %v3567, %v3563
        %v3569 = vmul.f32 1.0, %v3568
        %v3570 = vrcp.pop %v3274
        %v3571 = vmul.f32 %v3274, %v3570
        %v3572 = vsub.f32 1.0, %v3571
        %v3573 = vmul.f32 %v3570, %v3572
        %v3574 = vadd.f32 %v3570, %v3573
        %vm3575 = vweird.f32 %v3274
        %vm3576 = vweird.f32 %v3570
        %vm3577 = vmor %vm3575, %vm3576
        %v3578 = vsel %vm3577, %v3570, %v3574
        %v3579 = vand.u32 2147483647, %v3274
        %vm3580 = vcmp.eq.f32.partialorder %v3579, 8.507059e+37
        %v3581 = vand.u32 %v3274, 2147483648
        %v3582 = vor.u32 1.1754944e-38, %v3581
        %v3583 = vsel %vm3580, %v3582, %v3578
        %v3584 = vmul.f32 1.0, %v3583
        %v3585 = vrcp.pop %v3275
        %v3586 = vmul.f32 %v3275, %v3585
        %v3587 = vsub.f32 1.0, %v3586
        %v3588 = vmul.f32 %v3585, %v3587
        %v3589 = vadd.f32 %v3585, %v3588
        %vm3590 = vweird.f32 %v3275
        %vm3591 = vweird.f32 %v3585
        %vm3592 = vmor %vm3590, %vm3591
        %v3593 = vsel %vm3592, %v3585, %v3589
        %v3594 = vand.u32 2147483647, %v3275
        %vm3595 = vcmp.eq.f32.partialorder %v3594, 8.507059e+37
        %v3596 = vand.u32 %v3275, 2147483648
        %v3597 = vor.u32 1.1754944e-38, %v3596
        %v3598 = vsel %vm3595, %v3597, %v3593
        %v3599 = vmul.f32 1.0, %v3598
        %v3600 = vrcp.pop %v3276
        %v3601 = vmul.f32 %v3276, %v3600
        %v3602 = vsub.f32 1.0, %v3601
        %v3603 = vmul.f32 %v3600, %v3602
        %v3604 = vadd.f32 %v3600, %v3603
        %vm3605 = vweird.f32 %v3276
        %vm3606 = vweird.f32 %v3600
        %vm3607 = vmor %vm3605, %vm3606
        %v3608 = vsel %vm3607, %v3600, %v3604
        %v3609 = vand.u32 2147483647, %v3276
        %vm3610 = vcmp.eq.f32.partialorder %v3609, 8.507059e+37
        %v3611 = vand.u32 %v3276, 2147483648
        %v3612 = vor.u32 1.1754944e-38, %v3611
        %v3613 = vsel %vm3610, %v3612, %v3608
        %v3614 = vmul.f32 1.0, %v3613
        %v3615 = vrcp.pop %v3277
        %v3616 = vmul.f32 %v3277, %v3615
        %v3617 = vsub.f32 1.0, %v3616
        %v3618 = vmul.f32 %v3615, %v3617
        %v3619 = vadd.f32 %v3615, %v3618
        %vm3620 = vweird.f32 %v3277
        %vm3621 = vweird.f32 %v3615
        %vm3622 = vmor %vm3620, %vm3621
        %v3623 = vsel %vm3622, %v3615, %v3619
        %v3624 = vand.u32 2147483647, %v3277
        %vm3625 = vcmp.eq.f32.partialorder %v3624, 8.507059e+37
        %v3626 = vand.u32 %v3277, 2147483648
        %v3627 = vor.u32 1.1754944e-38, %v3626
        %v3628 = vsel %vm3625, %v3627, %v3623
        %v3629 = vmul.f32 1.0, %v3628
        %v3630 = vrcp.pop %v3278
        %v3631 = vmul.f32 %v3278, %v3630
        %v3632 = vsub.f32 1.0, %v3631
        %v3633 = vmul.f32 %v3630, %v3632
        %v3634 = vadd.f32 %v3630, %v3633
        %vm3635 = vweird.f32 %v3278
        %vm3636 = vweird.f32 %v3630
        %vm3637 = vmor %vm3635, %vm3636
        %v3638 = vsel %vm3637, %v3630, %v3634
        %v3639 = vand.u32 2147483647, %v3278
        %vm3640 = vcmp.eq.f32.partialorder %v3639, 8.507059e+37
        %v3641 = vand.u32 %v3278, 2147483648
        %v3642 = vor.u32 1.1754944e-38, %v3641
        %v3643 = vsel %vm3640, %v3642, %v3638
        %v3644 = vmul.f32 1.0, %v3643
        %v3645 = vrcp.pop %v3279
        %v3646 = vmul.f32 %v3279, %v3645
        %v3647 = vsub.f32 1.0, %v3646
        %v3648 = vmul.f32 %v3645, %v3647
        %v3649 = vadd.f32 %v3645, %v3648
        %vm3650 = vweird.f32 %v3279
        %vm3651 = vweird.f32 %v3645
        %vm3652 = vmor %vm3650, %vm3651
        %v3653 = vsel %vm3652, %v3645, %v3649
        %v3654 = vand.u32 2147483647, %v3279
        %vm3655 = vcmp.eq.f32.partialorder %v3654, 8.507059e+37
        %v3656 = vand.u32 %v3279, 2147483648
        %v3657 = vor.u32 1.1754944e-38, %v3656
        %v3658 = vsel %vm3655, %v3657, %v3653
        %v3659 = vmul.f32 1.0, %v3658
        %v3660 = vrcp.pop %v3280
        %v3661 = vmul.f32 %v3280, %v3660
        %v3662 = vsub.f32 1.0, %v3661
        %v3663 = vmul.f32 %v3660, %v3662
        %v3664 = vadd.f32 %v3660, %v3663
        %vm3665 = vweird.f32 %v3280
        %vm3666 = vweird.f32 %v3660
        %vm3667 = vmor %vm3665, %vm3666
        %v3668 = vsel %vm3667, %v3660, %v3664
        %v3669 = vand.u32 2147483647, %v3280
        %vm3670 = vcmp.eq.f32.partialorder %v3669, 8.507059e+37
        %v3671 = vand.u32 %v3280, 2147483648
        %v3672 = vor.u32 1.1754944e-38, %v3671
        %v3673 = vsel %vm3670, %v3672, %v3668
        %v3674 = vmul.f32 1.0, %v3673
        %v3675 = vrcp.pop %v3281
        %v3676 = vmul.f32 %v3281, %v3675
        %v3677 = vsub.f32 1.0, %v3676
        %v3678 = vmul.f32 %v3675, %v3677
        %v3679 = vadd.f32 %v3675, %v3678
        %vm3680 = vweird.f32 %v3281
        %vm3681 = vweird.f32 %v3675
        %vm3682 = vmor %vm3680, %vm3681
        %v3683 = vsel %vm3682, %v3675, %v3679
        %v3684 = vand.u32 2147483647, %v3281
        %vm3685 = vcmp.eq.f32.partialorder %v3684, 8.507059e+37
        %v3686 = vand.u32 %v3281, 2147483648
        %v3687 = vor.u32 1.1754944e-38, %v3686
        %v3688 = vsel %vm3685, %v3687, %v3683
        %v3689 = vmul.f32 1.0, %v3688
        %v3690 = vrcp.pop %v3282
        %v3691 = vmul.f32 %v3282, %v3690
        %v3692 = vsub.f32 1.0, %v3691
        %v3693 = vmul.f32 %v3690, %v3692
        %v3694 = vadd.f32 %v3690, %v3693
        %vm3695 = vweird.f32 %v3282
        %vm3696 = vweird.f32 %v3690
        %vm3697 = vmor %vm3695, %vm3696
        %v3698 = vsel %vm3697, %v3690, %v3694
        %v3699 = vand.u32 2147483647, %v3282
        %vm3700 = vcmp.eq.f32.partialorder %v3699, 8.507059e+37
        %v3701 = vand.u32 %v3282, 2147483648
        %v3702 = vor.u32 1.1754944e-38, %v3701
        %v3703 = vsel %vm3700, %v3702, %v3698
        %v3704 = vmul.f32 1.0, %v3703
        %v3705 = vrcp.pop %v3283
        %v3706 = vmul.f32 %v3283, %v3705
        %v3707 = vsub.f32 1.0, %v3706
        %v3708 = vmul.f32 %v3705, %v3707
        %v3709 = vadd.f32 %v3705, %v3708
        %vm3710 = vweird.f32 %v3283
        %vm3711 = vweird.f32 %v3705
        %vm3712 = vmor %vm3710, %vm3711
        %v3713 = vsel %vm3712, %v3705, %v3709
        %v3714 = vand.u32 2147483647, %v3283
        %vm3715 = vcmp.eq.f32.partialorder %v3714, 8.507059e+37
        %v3716 = vand.u32 %v3283, 2147483648
        %v3717 = vor.u32 1.1754944e-38, %v3716
        %v3718 = vsel %vm3715, %v3717, %v3713
        %v3719 = vmul.f32 1.0, %v3718
        %v3720 = vrcp.pop %v3284
        %v3721 = vmul.f32 %v3284, %v3720
        %v3722 = vsub.f32 1.0, %v3721
        %v3723 = vmul.f32 %v3720, %v3722
        %v3724 = vadd.f32 %v3720, %v3723
        %vm3725 = vweird.f32 %v3284
        %vm3726 = vweird.f32 %v3720
        %vm3727 = vmor %vm3725, %vm3726
        %v3728 = vsel %vm3727, %v3720, %v3724
        %v3729 = vand.u32 2147483647, %v3284
        %vm3730 = vcmp.eq.f32.partialorder %v3729, 8.507059e+37
        %v3731 = vand.u32 %v3284, 2147483648
        %v3732 = vor.u32 1.1754944e-38, %v3731
        %v3733 = vsel %vm3730, %v3732, %v3728
        %v3734 = vmul.f32 1.0, %v3733
        %v3735 = vrcp.pop %v3285
        %v3736 = vmul.f32 %v3285, %v3735
        %v3737 = vsub.f32 1.0, %v3736
        %v3738 = vmul.f32 %v3735, %v3737
        %v3739 = vadd.f32 %v3735, %v3738
        %vm3740 = vweird.f32 %v3285
        %vm3741 = vweird.f32 %v3735
        %vm3742 = vmor %vm3740, %vm3741
        %v3743 = vsel %vm3742, %v3735, %v3739
        %v3744 = vand.u32 2147483647, %v3285
        %vm3745 = vcmp.eq.f32.partialorder %v3744, 8.507059e+37
        %v3746 = vand.u32 %v3285, 2147483648
        %v3747 = vor.u32 1.1754944e-38, %v3746
        %v3748 = vsel %vm3745, %v3747, %v3743
        %v3749 = vmul.f32 1.0, %v3748
        %v3750 = vrcp.pop %v3286
        %v3751 = vmul.f32 %v3286, %v3750
        %v3752 = vsub.f32 1.0, %v3751
        %v3753 = vmul.f32 %v3750, %v3752
        %v3754 = vadd.f32 %v3750, %v3753
        %vm3755 = vweird.f32 %v3286
        %vm3756 = vweird.f32 %v3750
        %vm3757 = vmor %vm3755, %vm3756
        %v3758 = vsel %vm3757, %v3750, %v3754
        %v3759 = vand.u32 2147483647, %v3286
        %vm3760 = vcmp.eq.f32.partialorder %v3759, 8.507059e+37
        %v3761 = vand.u32 %v3286, 2147483648
        %v3762 = vor.u32 1.1754944e-38, %v3761
        %v3763 = vsel %vm3760, %v3762, %v3758
        %v3764 = vmul.f32 1.0, %v3763
        %v3765 = vrcp.pop %v3287
        %v3766 = vmul.f32 %v3287, %v3765
        %v3767 = vsub.f32 1.0, %v3766
        %v3768 = vmul.f32 %v3765, %v3767
        %v3769 = vadd.f32 %v3765, %v3768
        %vm3770 = vweird.f32 %v3287
        %vm3771 = vweird.f32 %v3765
        %vm3772 = vmor %vm3770, %vm3771
        %v3773 = vsel %vm3772, %v3765, %v3769
        %v3774 = vand.u32 2147483647, %v3287
        %vm3775 = vcmp.eq.f32.partialorder %v3774, 8.507059e+37
        %v3776 = vand.u32 %v3287, 2147483648
        %v3777 = vor.u32 1.1754944e-38, %v3776
        %v3778 = vsel %vm3775, %v3777, %v3773
        %v3779 = vmul.f32 1.0, %v3778
        %v3780 = vrcp.pop %v3288
        %v3781 = vmul.f32 %v3288, %v3780
        %v3782 = vsub.f32 1.0, %v3781
        %v3783 = vmul.f32 %v3780, %v3782
        %v3784 = vadd.f32 %v3780, %v3783
        %vm3785 = vweird.f32 %v3288
        %vm3786 = vweird.f32 %v3780
        %vm3787 = vmor %vm3785, %vm3786
        %v3788 = vsel %vm3787, %v3780, %v3784
        %v3789 = vand.u32 2147483647, %v3288
        %vm3790 = vcmp.eq.f32.partialorder %v3789, 8.507059e+37
        %v3791 = vand.u32 %v3288, 2147483648
        %v3792 = vor.u32 1.1754944e-38, %v3791
        %v3793 = vsel %vm3790, %v3792, %v3788
        %v3794 = vmul.f32 1.0, %v3793
        %v3795 = vrcp.pop %v3289
        %v3796 = vmul.f32 %v3289, %v3795
        %v3797 = vsub.f32 1.0, %v3796
        %v3798 = vmul.f32 %v3795, %v3797
        %v3799 = vadd.f32 %v3795, %v3798
        %vm3800 = vweird.f32 %v3289
        %vm3801 = vweird.f32 %v3795
        %vm3802 = vmor %vm3800, %vm3801
        %v3803 = vsel %vm3802, %v3795, %v3799
        %v3804 = vand.u32 2147483647, %v3289
        %vm3805 = vcmp.eq.f32.partialorder %v3804, 8.507059e+37
        %v3806 = vand.u32 %v3289, 2147483648
        %v3807 = vor.u32 1.1754944e-38, %v3806
        %v3808 = vsel %vm3805, %v3807, %v3803
        %v3809 = vmul.f32 1.0, %v3808
        %v3810 = vrcp.pop %v3290
        %v3811 = vmul.f32 %v3290, %v3810
        %v3812 = vsub.f32 1.0, %v3811
        %v3813 = vmul.f32 %v3810, %v3812
        %v3814 = vadd.f32 %v3810, %v3813
        %vm3815 = vweird.f32 %v3290
        %vm3816 = vweird.f32 %v3810
        %vm3817 = vmor %vm3815, %vm3816
        %v3818 = vsel %vm3817, %v3810, %v3814
        %v3819 = vand.u32 2147483647, %v3290
        %vm3820 = vcmp.eq.f32.partialorder %v3819, 8.507059e+37
        %v3821 = vand.u32 %v3290, 2147483648
        %v3822 = vor.u32 1.1754944e-38, %v3821
        %v3823 = vsel %vm3820, %v3822, %v3818
        %v3824 = vmul.f32 1.0, %v3823
        %v3825 = vrcp.pop %v3291
        %v3826 = vmul.f32 %v3291, %v3825
        %v3827 = vsub.f32 1.0, %v3826
        %v3828 = vmul.f32 %v3825, %v3827
        %v3829 = vadd.f32 %v3825, %v3828
        %vm3830 = vweird.f32 %v3291
        %vm3831 = vweird.f32 %v3825
        %vm3832 = vmor %vm3830, %vm3831
        %v3833 = vsel %vm3832, %v3825, %v3829
        %v3834 = vand.u32 2147483647, %v3291
        %vm3835 = vcmp.eq.f32.partialorder %v3834, 8.507059e+37
        %v3836 = vand.u32 %v3291, 2147483648
        %v3837 = vor.u32 1.1754944e-38, %v3836
        %v3838 = vsel %vm3835, %v3837, %v3833
        %v3839 = vmul.f32 1.0, %v3838
        %v3840 = vrcp.pop %v3292
        %v3841 = vmul.f32 %v3292, %v3840
        %v3842 = vsub.f32 1.0, %v3841
        %v3843 = vmul.f32 %v3840, %v3842
        %v3844 = vadd.f32 %v3840, %v3843
        %vm3845 = vweird.f32 %v3292
        %vm3846 = vweird.f32 %v3840
        %vm3847 = vmor %vm3845, %vm3846
        %v3848 = vsel %vm3847, %v3840, %v3844
        %v3849 = vand.u32 2147483647, %v3292
        %vm3850 = vcmp.eq.f32.partialorder %v3849, 8.507059e+37
        %v3851 = vand.u32 %v3292, 2147483648
        %v3852 = vor.u32 1.1754944e-38, %v3851
        %v3853 = vsel %vm3850, %v3852, %v3848
        %v3854 = vmul.f32 1.0, %v3853
        %v3855 = vrcp.pop %v3293
        %v3856 = vmul.f32 %v3293, %v3855
        %v3857 = vsub.f32 1.0, %v3856
        %v3858 = vmul.f32 %v3855, %v3857
        %v3859 = vadd.f32 %v3855, %v3858
        %vm3860 = vweird.f32 %v3293
        %vm3861 = vweird.f32 %v3855
        %vm3862 = vmor %vm3860, %vm3861
        %v3863 = vsel %vm3862, %v3855, %v3859
        %v3864 = vand.u32 2147483647, %v3293
        %vm3865 = vcmp.eq.f32.partialorder %v3864, 8.507059e+37
        %v3866 = vand.u32 %v3293, 2147483648
        %v3867 = vor.u32 1.1754944e-38, %v3866
        %v3868 = vsel %vm3865, %v3867, %v3863
        %v3869 = vmul.f32 1.0, %v3868
        %v3870 = vrcp.pop %v3294
        %v3871 = vmul.f32 %v3294, %v3870
        %v3872 = vsub.f32 1.0, %v3871
        %v3873 = vmul.f32 %v3870, %v3872
        %v3874 = vadd.f32 %v3870, %v3873
        %vm3875 = vweird.f32 %v3294
        %vm3876 = vweird.f32 %v3870
        %vm3877 = vmor %vm3875, %vm3876
        %v3878 = vsel %vm3877, %v3870, %v3874
        %v3879 = vand.u32 2147483647, %v3294
        %vm3880 = vcmp.eq.f32.partialorder %v3879, 8.507059e+37
        %v3881 = vand.u32 %v3294, 2147483648
        %v3882 = vor.u32 1.1754944e-38, %v3881
        %v3883 = vsel %vm3880, %v3882, %v3878
        %v3884 = vmul.f32 1.0, %v3883
        %v3885 = vrcp.pop %v3295
        %v3886 = vmul.f32 %v3295, %v3885
        %v3887 = vsub.f32 1.0, %v3886
        %v3888 = vmul.f32 %v3885, %v3887
        %v3889 = vadd.f32 %v3885, %v3888
        %vm3890 = vweird.f32 %v3295
        %vm3891 = vweird.f32 %v3885
        %vm3892 = vmor %vm3890, %vm3891
        %v3893 = vsel %vm3892, %v3885, %v3889
        %v3894 = vand.u32 2147483647, %v3295
        %vm3895 = vcmp.eq.f32.partialorder %v3894, 8.507059e+37
        %v3896 = vand.u32 %v3295, 2147483648
        %v3897 = vor.u32 1.1754944e-38, %v3896
        %v3898 = vsel %vm3895, %v3897, %v3893
        %v3899 = vmul.f32 1.0, %v3898
        %v3900 = vrcp.pop %v3296
        %v3901 = vmul.f32 %v3296, %v3900
        %v3902 = vsub.f32 1.0, %v3901
        %v3903 = vmul.f32 %v3900, %v3902
        %v3904 = vadd.f32 %v3900, %v3903
        %vm3905 = vweird.f32 %v3296
        %vm3906 = vweird.f32 %v3900
        %vm3907 = vmor %vm3905, %vm3906
        %v3908 = vsel %vm3907, %v3900, %v3904
        %v3909 = vand.u32 2147483647, %v3296
        %vm3910 = vcmp.eq.f32.partialorder %v3909, 8.507059e+37
        %v3911 = vand.u32 %v3296, 2147483648
        %v3912 = vor.u32 1.1754944e-38, %v3911
        %v3913 = vsel %vm3910, %v3912, %v3908
        %v3914 = vmul.f32 1.0, %v3913
        %v3915 = vrcp.pop %v3297
        %v3916 = vmul.f32 %v3297, %v3915
        %v3917 = vsub.f32 1.0, %v3916
        %v3918 = vmul.f32 %v3915, %v3917
        %v3919 = vadd.f32 %v3915, %v3918
        %vm3920 = vweird.f32 %v3297
        %vm3921 = vweird.f32 %v3915
        %vm3922 = vmor %vm3920, %vm3921
        %v3923 = vsel %vm3922, %v3915, %v3919
        %v3924 = vand.u32 2147483647, %v3297
        %vm3925 = vcmp.eq.f32.partialorder %v3924, 8.507059e+37
        %v3926 = vand.u32 %v3297, 2147483648
        %v3927 = vor.u32 1.1754944e-38, %v3926
        %v3928 = vsel %vm3925, %v3927, %v3923
        %v3929 = vmul.f32 1.0, %v3928
        %v3930 = vrcp.pop %v3298
        %v3931 = vmul.f32 %v3298, %v3930
        %v3932 = vsub.f32 1.0, %v3931
        %v3933 = vmul.f32 %v3930, %v3932
        %v3934 = vadd.f32 %v3930, %v3933
        %vm3935 = vweird.f32 %v3298
        %vm3936 = vweird.f32 %v3930
        %vm3937 = vmor %vm3935, %vm3936
        %v3938 = vsel %vm3937, %v3930, %v3934
        %v3939 = vand.u32 2147483647, %v3298
        %vm3940 = vcmp.eq.f32.partialorder %v3939, 8.507059e+37
        %v3941 = vand.u32 %v3298, 2147483648
        %v3942 = vor.u32 1.1754944e-38, %v3941
        %v3943 = vsel %vm3940, %v3942, %v3938
        %v3944 = vmul.f32 1.0, %v3943
        %v3945 = vrcp.pop %v3299
        %v3946 = vmul.f32 %v3299, %v3945
        %v3947 = vsub.f32 1.0, %v3946
        %v3948 = vmul.f32 %v3945, %v3947
        %v3949 = vadd.f32 %v3945, %v3948
        %vm3950 = vweird.f32 %v3299
        %vm3951 = vweird.f32 %v3945
        %vm3952 = vmor %vm3950, %vm3951
        %v3953 = vsel %vm3952, %v3945, %v3949
        %v3954 = vand.u32 2147483647, %v3299
        %vm3955 = vcmp.eq.f32.partialorder %v3954, 8.507059e+37
        %v3956 = vand.u32 %v3299, 2147483648
        %v3957 = vor.u32 1.1754944e-38, %v3956
        %v3958 = vsel %vm3955, %v3957, %v3953
        %v3959 = vmul.f32 1.0, %v3958
        %v3960 = vrcp.pop %v3300
        %v3961 = vmul.f32 %v3300, %v3960
        %v3962 = vsub.f32 1.0, %v3961
        %v3963 = vmul.f32 %v3960, %v3962
        %v3964 = vadd.f32 %v3960, %v3963
        %vm3965 = vweird.f32 %v3300
        %vm3966 = vweird.f32 %v3960
        %vm3967 = vmor %vm3965, %vm3966
        %v3968 = vsel %vm3967, %v3960, %v3964
        %v3969 = vand.u32 2147483647, %v3300
        %vm3970 = vcmp.eq.f32.partialorder %v3969, 8.507059e+37
        %v3971 = vand.u32 %v3300, 2147483648
        %v3972 = vor.u32 1.1754944e-38, %v3971
        %v3973 = vsel %vm3970, %v3972, %v3968
        %v3974 = vmul.f32 1.0, %v3973
        %v3975 = vrcp.pop %v3301
        %v3976 = vmul.f32 %v3301, %v3975
        %v3977 = vsub.f32 1.0, %v3976
        %v3978 = vmul.f32 %v3975, %v3977
        %v3979 = vadd.f32 %v3975, %v3978
        %vm3980 = vweird.f32 %v3301
        %vm3981 = vweird.f32 %v3975
        %vm3982 = vmor %vm3980, %vm3981
        %v3983 = vsel %vm3982, %v3975, %v3979
        %v3984 = vand.u32 2147483647, %v3301
        %vm3985 = vcmp.eq.f32.partialorder %v3984, 8.507059e+37
        %v3986 = vand.u32 %v3301, 2147483648
        %v3987 = vor.u32 1.1754944e-38, %v3986
        %v3988 = vsel %vm3985, %v3987, %v3983
        %v3989 = vmul.f32 1.0, %v3988
        %v3990 = vrcp.pop %v3302
        %v3991 = vmul.f32 %v3302, %v3990
        %v3992 = vsub.f32 1.0, %v3991
        %v3993 = vmul.f32 %v3990, %v3992
        %v3994 = vadd.f32 %v3990, %v3993
        %vm3995 = vweird.f32 %v3302
        %vm3996 = vweird.f32 %v3990
        %vm3997 = vmor %vm3995, %vm3996
        %v3998 = vsel %vm3997, %v3990, %v3994
        %v3999 = vand.u32 2147483647, %v3302
        %vm4000 = vcmp.eq.f32.partialorder %v3999, 8.507059e+37
        %v4001 = vand.u32 %v3302, 2147483648
        %v4002 = vor.u32 1.1754944e-38, %v4001
        %v4003 = vsel %vm4000, %v4002, %v3998
        %v4004 = vmul.f32 1.0, %v4003
        %v4005 = vrcp.pop %v3303
        %v4006 = vmul.f32 %v3303, %v4005
        %v4007 = vsub.f32 1.0, %v4006
        %v4008 = vmul.f32 %v4005, %v4007
        %v4009 = vadd.f32 %v4005, %v4008
        %vm4010 = vweird.f32 %v3303
        %vm4011 = vweird.f32 %v4005
        %vm4012 = vmor %vm4010, %vm4011
        %v4013 = vsel %vm4012, %v4005, %v4009
        %v4014 = vand.u32 2147483647, %v3303
        %vm4015 = vcmp.eq.f32.partialorder %v4014, 8.507059e+37
        %v4016 = vand.u32 %v3303, 2147483648
        %v4017 = vor.u32 1.1754944e-38, %v4016
        %v4018 = vsel %vm4015, %v4017, %v4013
        %v4019 = vmul.f32 1.0, %v4018
        %v4020 = vrcp.pop %v3304
        %v4021 = vmul.f32 %v3304, %v4020
        %v4022 = vsub.f32 1.0, %v4021
        %v4023 = vmul.f32 %v4020, %v4022
        %v4024 = vadd.f32 %v4020, %v4023
        %vm4025 = vweird.f32 %v3304
        %vm4026 = vweird.f32 %v4020
        %vm4027 = vmor %vm4025, %vm4026
        %v4028 = vsel %vm4027, %v4020, %v4024
        %v4029 = vand.u32 2147483647, %v3304
        %vm4030 = vcmp.eq.f32.partialorder %v4029, 8.507059e+37
        %v4031 = vand.u32 %v3304, 2147483648
        %v4032 = vor.u32 1.1754944e-38, %v4031
        %v4033 = vsel %vm4030, %v4032, %v4028
        %v4034 = vmul.f32 1.0, %v4033
        %v4035 = vrcp.pop %v3305
        %v4036 = vmul.f32 %v3305, %v4035
        %v4037 = vsub.f32 1.0, %v4036
        %v4038 = vmul.f32 %v4035, %v4037
        %v4039 = vadd.f32 %v4035, %v4038
        %vm4040 = vweird.f32 %v3305
        %vm4041 = vweird.f32 %v4035
        %vm4042 = vmor %vm4040, %vm4041
        %v4043 = vsel %vm4042, %v4035, %v4039
        %v4044 = vand.u32 2147483647, %v3305
        %vm4045 = vcmp.eq.f32.partialorder %v4044, 8.507059e+37
        %v4046 = vand.u32 %v3305, 2147483648
        %v4047 = vor.u32 1.1754944e-38, %v4046
        %v4048 = vsel %vm4045, %v4047, %v4043
        %v4049 = vmul.f32 1.0, %v4048
        %v4050 = vrcp.pop %v3306
        %v4051 = vmul.f32 %v3306, %v4050
        %v4052 = vsub.f32 1.0, %v4051
        %v4053 = vmul.f32 %v4050, %v4052
        %v4054 = vadd.f32 %v4050, %v4053
        %vm4055 = vweird.f32 %v3306
        %vm4056 = vweird.f32 %v4050
        %vm4057 = vmor %vm4055, %vm4056
        %v4058 = vsel %vm4057, %v4050, %v4054
        %v4059 = vand.u32 2147483647, %v3306
        %vm4060 = vcmp.eq.f32.partialorder %v4059, 8.507059e+37
        %v4061 = vand.u32 %v3306, 2147483648
        %v4062 = vor.u32 1.1754944e-38, %v4061
        %v4063 = vsel %vm4060, %v4062, %v4058
        %v4064 = vmul.f32 1.0, %v4063
        %v4065 = vrcp.pop %v3307
        %v4066 = vmul.f32 %v3307, %v4065
        %v4067 = vsub.f32 1.0, %v4066
        %v4068 = vmul.f32 %v4065, %v4067
        %v4069 = vadd.f32 %v4065, %v4068
        %vm4070 = vweird.f32 %v3307
        %vm4071 = vweird.f32 %v4065
        %vm4072 = vmor %vm4070, %vm4071
        %v4073 = vsel %vm4072, %v4065, %v4069
        %v4074 = vand.u32 2147483647, %v3307
        %vm4075 = vcmp.eq.f32.partialorder %v4074, 8.507059e+37
        %v4076 = vand.u32 %v3307, 2147483648
        %v4077 = vor.u32 1.1754944e-38, %v4076
        %v4078 = vsel %vm4075, %v4077, %v4073
        %v4079 = vmul.f32 1.0, %v4078
        %v4080 = vrcp.pop %v3308
        %v4081 = vmul.f32 %v3308, %v4080
        %v4082 = vsub.f32 1.0, %v4081
        %v4083 = vmul.f32 %v4080, %v4082
        %v4084 = vadd.f32 %v4080, %v4083
        %vm4085 = vweird.f32 %v3308
        %vm4086 = vweird.f32 %v4080
        %vm4087 = vmor %vm4085, %vm4086
        %v4088 = vsel %vm4087, %v4080, %v4084
        %v4089 = vand.u32 2147483647, %v3308
        %vm4090 = vcmp.eq.f32.partialorder %v4089, 8.507059e+37
        %v4091 = vand.u32 %v3308, 2147483648
        %v4092 = vor.u32 1.1754944e-38, %v4091
        %v4093 = vsel %vm4090, %v4092, %v4088
        %v4094 = vmul.f32 1.0, %v4093
        %v4095 = vrcp.pop %v3309
        %v4096 = vmul.f32 %v3309, %v4095
        %v4097 = vsub.f32 1.0, %v4096
        %v4098 = vmul.f32 %v4095, %v4097
        %v4099 = vadd.f32 %v4095, %v4098
        %vm4100 = vweird.f32 %v3309
        %vm4101 = vweird.f32 %v4095
        %vm4102 = vmor %vm4100, %vm4101
        %v4103 = vsel %vm4102, %v4095, %v4099
        %v4104 = vand.u32 2147483647, %v3309
        %vm4105 = vcmp.eq.f32.partialorder %v4104, 8.507059e+37
        %v4106 = vand.u32 %v3309, 2147483648
        %v4107 = vor.u32 1.1754944e-38, %v4106
        %v4108 = vsel %vm4105, %v4107, %v4103
        %v4109 = vmul.f32 1.0, %v4108
        %v4110 = vrcp.pop %v3310
        %v4111 = vmul.f32 %v3310, %v4110
        %v4112 = vsub.f32 1.0, %v4111
        %v4113 = vmul.f32 %v4110, %v4112
        %v4114 = vadd.f32 %v4110, %v4113
        %vm4115 = vweird.f32 %v3310
        %vm4116 = vweird.f32 %v4110
        %vm4117 = vmor %vm4115, %vm4116
        %v4118 = vsel %vm4117, %v4110, %v4114
        %v4119 = vand.u32 2147483647, %v3310
        %vm4120 = vcmp.eq.f32.partialorder %v4119, 8.507059e+37
        %v4121 = vand.u32 %v3310, 2147483648
        %v4122 = vor.u32 1.1754944e-38, %v4121
        %v4123 = vsel %vm4120, %v4122, %v4118
        %v4124 = vmul.f32 1.0, %v4123
        %v4125 = vrcp.pop %v3311
        %v4126 = vmul.f32 %v3311, %v4125
        %v4127 = vsub.f32 1.0, %v4126
        %v4128 = vmul.f32 %v4125, %v4127
        %v4129 = vadd.f32 %v4125, %v4128
        %vm4130 = vweird.f32 %v3311
        %vm4131 = vweird.f32 %v4125
        %vm4132 = vmor %vm4130, %vm4131
        %v4133 = vsel %vm4132, %v4125, %v4129
        %v4134 = vand.u32 2147483647, %v3311
        %vm4135 = vcmp.eq.f32.partialorder %v4134, 8.507059e+37
        %v4136 = vand.u32 %v3311, 2147483648
        %v4137 = vor.u32 1.1754944e-38, %v4136
        %v4138 = vsel %vm4135, %v4137, %v4133
        %v4139 = vmul.f32 1.0, %v4138
        %v4140 = vrcp.pop %v3312
        %v4141 = vmul.f32 %v3312, %v4140
        %v4142 = vsub.f32 1.0, %v4141
        %v4143 = vmul.f32 %v4140, %v4142
        %v4144 = vadd.f32 %v4140, %v4143
        %vm4145 = vweird.f32 %v3312
        %vm4146 = vweird.f32 %v4140
        %vm4147 = vmor %vm4145, %vm4146
        %v4148 = vsel %vm4147, %v4140, %v4144
        %v4149 = vand.u32 2147483647, %v3312
        %vm4150 = vcmp.eq.f32.partialorder %v4149, 8.507059e+37
        %v4151 = vand.u32 %v3312, 2147483648
        %v4152 = vor.u32 1.1754944e-38, %v4151
        %v4153 = vsel %vm4150, %v4152, %v4148
        %v4154 = vmul.f32 1.0, %v4153
        %v4155 = vrcp.pop %v3313
        %v4156 = vmul.f32 %v3313, %v4155
        %v4157 = vsub.f32 1.0, %v4156
        %v4158 = vmul.f32 %v4155, %v4157
        %v4159 = vadd.f32 %v4155, %v4158
        %vm4160 = vweird.f32 %v3313
        %vm4161 = vweird.f32 %v4155
        %vm4162 = vmor %vm4160, %vm4161
        %v4163 = vsel %vm4162, %v4155, %v4159
        %v4164 = vand.u32 2147483647, %v3313
        %vm4165 = vcmp.eq.f32.partialorder %v4164, 8.507059e+37
        %v4166 = vand.u32 %v3313, 2147483648
        %v4167 = vor.u32 1.1754944e-38, %v4166
        %v4168 = vsel %vm4165, %v4167, %v4163
        %v4169 = vmul.f32 1.0, %v4168
        %v4170 = vrcp.pop %v3314
        %v4171 = vmul.f32 %v3314, %v4170
        %v4172 = vsub.f32 1.0, %v4171
        %v4173 = vmul.f32 %v4170, %v4172
        %v4174 = vadd.f32 %v4170, %v4173
        %vm4175 = vweird.f32 %v3314
        %vm4176 = vweird.f32 %v4170
        %vm4177 = vmor %vm4175, %vm4176
        %v4178 = vsel %vm4177, %v4170, %v4174
        %v4179 = vand.u32 2147483647, %v3314
        %vm4180 = vcmp.eq.f32.partialorder %v4179, 8.507059e+37
        %v4181 = vand.u32 %v3314, 2147483648
        %v4182 = vor.u32 1.1754944e-38, %v4181
        %v4183 = vsel %vm4180, %v4182, %v4178
        %v4184 = vmul.f32 1.0, %v4183
        %v4185 = vrcp.pop %v3315
        %v4186 = vmul.f32 %v3315, %v4185
        %v4187 = vsub.f32 1.0, %v4186
        %v4188 = vmul.f32 %v4185, %v4187
        %v4189 = vadd.f32 %v4185, %v4188
        %vm4190 = vweird.f32 %v3315
        %vm4191 = vweird.f32 %v4185
        %vm4192 = vmor %vm4190, %vm4191
        %v4193 = vsel %vm4192, %v4185, %v4189
        %v4194 = vand.u32 2147483647, %v3315
        %vm4195 = vcmp.eq.f32.partialorder %v4194, 8.507059e+37
        %v4196 = vand.u32 %v3315, 2147483648
        %v4197 = vor.u32 1.1754944e-38, %v4196
        %v4198 = vsel %vm4195, %v4197, %v4193
        %v4199 = vmul.f32 1.0, %v4198
        %v4200 = vrcp.pop %v3316
        %v4201 = vmul.f32 %v3316, %v4200
        %v4202 = vsub.f32 1.0, %v4201
        %v4203 = vmul.f32 %v4200, %v4202
        %v4204 = vadd.f32 %v4200, %v4203
        %vm4205 = vweird.f32 %v3316
        %vm4206 = vweird.f32 %v4200
        %vm4207 = vmor %vm4205, %vm4206
        %v4208 = vsel %vm4207, %v4200, %v4204
        %v4209 = vand.u32 2147483647, %v3316
        %vm4210 = vcmp.eq.f32.partialorder %v4209, 8.507059e+37
        %v4211 = vand.u32 %v3316, 2147483648
        %v4212 = vor.u32 1.1754944e-38, %v4211
        %v4213 = vsel %vm4210, %v4212, %v4208
        %v4214 = vmul.f32 1.0, %v4213
        %v4215 = vrcp.pop %v3317
        %v4216 = vmul.f32 %v3317, %v4215
        %v4217 = vsub.f32 1.0, %v4216
        %v4218 = vmul.f32 %v4215, %v4217
        %v4219 = vadd.f32 %v4215, %v4218
        %vm4220 = vweird.f32 %v3317
        %vm4221 = vweird.f32 %v4215
        %vm4222 = vmor %vm4220, %vm4221
        %v4223 = vsel %vm4222, %v4215, %v4219
        %v4224 = vand.u32 2147483647, %v3317
        %vm4225 = vcmp.eq.f32.partialorder %v4224, 8.507059e+37
        %v4226 = vand.u32 %v3317, 2147483648
        %v4227 = vor.u32 1.1754944e-38, %v4226
        %v4228 = vsel %vm4225, %v4227, %v4223
        %v4229 = vmul.f32 1.0, %v4228
        %v4230 = vrcp.pop %v3318
        %v4231 = vmul.f32 %v3318, %v4230
        %v4232 = vsub.f32 1.0, %v4231
        %v4233 = vmul.f32 %v4230, %v4232
        %v4234 = vadd.f32 %v4230, %v4233
        %vm4235 = vweird.f32 %v3318
        %vm4236 = vweird.f32 %v4230
        %vm4237 = vmor %vm4235, %vm4236
        %v4238 = vsel %vm4237, %v4230, %v4234
        %v4239 = vand.u32 2147483647, %v3318
        %vm4240 = vcmp.eq.f32.partialorder %v4239, 8.507059e+37
        %v4241 = vand.u32 %v3318, 2147483648
        %v4242 = vor.u32 1.1754944e-38, %v4241
        %v4243 = vsel %vm4240, %v4242, %v4238
        %v4244 = vmul.f32 1.0, %v4243
        %v4245 = vrcp.pop %v3319
        %v4246 = vmul.f32 %v3319, %v4245
        %v4247 = vsub.f32 1.0, %v4246
        %v4248 = vmul.f32 %v4245, %v4247
        %v4249 = vadd.f32 %v4245, %v4248
        %vm4250 = vweird.f32 %v3319
        %vm4251 = vweird.f32 %v4245
        %vm4252 = vmor %vm4250, %vm4251
        %v4253 = vsel %vm4252, %v4245, %v4249
        %v4254 = vand.u32 2147483647, %v3319
        %vm4255 = vcmp.eq.f32.partialorder %v4254, 8.507059e+37
        %v4256 = vand.u32 %v3319, 2147483648
        %v4257 = vor.u32 1.1754944e-38, %v4256
        %v4258 = vsel %vm4255, %v4257, %v4253
        %v4259 = vmul.f32 1.0, %v4258
        %v4260 = vrcp.pop %v3320
        %v4261 = vmul.f32 %v3320, %v4260
        %v4262 = vsub.f32 1.0, %v4261
        %v4263 = vmul.f32 %v4260, %v4262
        %v4264 = vadd.f32 %v4260, %v4263
        %vm4265 = vweird.f32 %v3320
        %vm4266 = vweird.f32 %v4260
        %vm4267 = vmor %vm4265, %vm4266
        %v4268 = vsel %vm4267, %v4260, %v4264
        %v4269 = vand.u32 2147483647, %v3320
        %vm4270 = vcmp.eq.f32.partialorder %v4269, 8.507059e+37
        %v4271 = vand.u32 %v3320, 2147483648
        %v4272 = vor.u32 1.1754944e-38, %v4271
        %v4273 = vsel %vm4270, %v4272, %v4268
        %v4274 = vmul.f32 1.0, %v4273
        %v4275 = vrcp.pop %v3321
        %v4276 = vmul.f32 %v3321, %v4275
        %v4277 = vsub.f32 1.0, %v4276
        %v4278 = vmul.f32 %v4275, %v4277
        %v4279 = vadd.f32 %v4275, %v4278
        %vm4280 = vweird.f32 %v3321
        %vm4281 = vweird.f32 %v4275
        %vm4282 = vmor %vm4280, %vm4281
        %v4283 = vsel %vm4282, %v4275, %v4279
        %v4284 = vand.u32 2147483647, %v3321
        %vm4285 = vcmp.eq.f32.partialorder %v4284, 8.507059e+37
        %v4286 = vand.u32 %v3321, 2147483648
        %v4287 = vor.u32 1.1754944e-38, %v4286
        %v4288 = vsel %vm4285, %v4287, %v4283
        %v4289 = vmul.f32 1.0, %v4288
        %v4290 = vrcp.pop %v3322
        %v4291 = vmul.f32 %v3322, %v4290
        %v4292 = vsub.f32 1.0, %v4291
        %v4293 = vmul.f32 %v4290, %v4292
        %v4294 = vadd.f32 %v4290, %v4293
        %vm4295 = vweird.f32 %v3322
        %vm4296 = vweird.f32 %v4290
        %vm4297 = vmor %vm4295, %vm4296
        %v4298 = vsel %vm4297, %v4290, %v4294
        %v4299 = vand.u32 2147483647, %v3322
        %vm4300 = vcmp.eq.f32.partialorder %v4299, 8.507059e+37
        %v4301 = vand.u32 %v3322, 2147483648
        %v4302 = vor.u32 1.1754944e-38, %v4301
        %v4303 = vsel %vm4300, %v4302, %v4298
        %v4304 = vmul.f32 1.0, %v4303
        %v4305 = vrcp.pop %v3323
        %v4306 = vmul.f32 %v3323, %v4305
        %v4307 = vsub.f32 1.0, %v4306
        %v4308 = vmul.f32 %v4305, %v4307
        %v4309 = vadd.f32 %v4305, %v4308
        %vm4310 = vweird.f32 %v3323
        %vm4311 = vweird.f32 %v4305
        %vm4312 = vmor %vm4310, %vm4311
        %v4313 = vsel %vm4312, %v4305, %v4309
        %v4314 = vand.u32 2147483647, %v3323
        %vm4315 = vcmp.eq.f32.partialorder %v4314, 8.507059e+37
        %v4316 = vand.u32 %v3323, 2147483648
        %v4317 = vor.u32 1.1754944e-38, %v4316
        %v4318 = vsel %vm4315, %v4317, %v4313
        %v4319 = vmul.f32 1.0, %v4318
        %v4320 = vrcp.pop %v3324
        %v4321 = vmul.f32 %v3324, %v4320
        %v4322 = vsub.f32 1.0, %v4321
        %v4323 = vmul.f32 %v4320, %v4322
        %v4324 = vadd.f32 %v4320, %v4323
        %vm4325 = vweird.f32 %v3324
        %vm4326 = vweird.f32 %v4320
        %vm4327 = vmor %vm4325, %vm4326
        %v4328 = vsel %vm4327, %v4320, %v4324
        %v4329 = vand.u32 2147483647, %v3324
        %vm4330 = vcmp.eq.f32.partialorder %v4329, 8.507059e+37
        %v4331 = vand.u32 %v3324, 2147483648
        %v4332 = vor.u32 1.1754944e-38, %v4331
        %v4333 = vsel %vm4330, %v4332, %v4328
        %v4334 = vmul.f32 1.0, %v4333
        %v4335 = vrcp.pop %v3325
        %v4336 = vmul.f32 %v3325, %v4335
        %v4337 = vsub.f32 1.0, %v4336
        %v4338 = vmul.f32 %v4335, %v4337
        %v4339 = vadd.f32 %v4335, %v4338
        %vm4340 = vweird.f32 %v3325
        %vm4341 = vweird.f32 %v4335
        %vm4342 = vmor %vm4340, %vm4341
        %v4343 = vsel %vm4342, %v4335, %v4339
        %v4344 = vand.u32 2147483647, %v3325
        %vm4345 = vcmp.eq.f32.partialorder %v4344, 8.507059e+37
        %v4346 = vand.u32 %v3325, 2147483648
        %v4347 = vor.u32 1.1754944e-38, %v4346
        %v4348 = vsel %vm4345, %v4347, %v4343
        %v4349 = vmul.f32 1.0, %v4348
        %v4350 = vrcp.pop %v3326
        %v4351 = vmul.f32 %v3326, %v4350
        %v4352 = vsub.f32 1.0, %v4351
        %v4353 = vmul.f32 %v4350, %v4352
        %v4354 = vadd.f32 %v4350, %v4353
        %vm4355 = vweird.f32 %v3326
        %vm4356 = vweird.f32 %v4350
        %vm4357 = vmor %vm4355, %vm4356
        %v4358 = vsel %vm4357, %v4350, %v4354
        %v4359 = vand.u32 2147483647, %v3326
        %vm4360 = vcmp.eq.f32.partialorder %v4359, 8.507059e+37
        %v4361 = vand.u32 %v3326, 2147483648
        %v4362 = vor.u32 1.1754944e-38, %v4361
        %v4363 = vsel %vm4360, %v4362, %v4358
        %v4364 = vmul.f32 1.0, %v4363
        %v4365 = vrcp.pop %v3327
        %v4366 = vmul.f32 %v3327, %v4365
        %v4367 = vsub.f32 1.0, %v4366
        %v4368 = vmul.f32 %v4365, %v4367
        %v4369 = vadd.f32 %v4365, %v4368
        %vm4370 = vweird.f32 %v3327
        %vm4371 = vweird.f32 %v4365
        %vm4372 = vmor %vm4370, %vm4371
        %v4373 = vsel %vm4372, %v4365, %v4369
        %v4374 = vand.u32 2147483647, %v3327
        %vm4375 = vcmp.eq.f32.partialorder %v4374, 8.507059e+37
        %v4376 = vand.u32 %v3327, 2147483648
        %v4377 = vor.u32 1.1754944e-38, %v4376
        %v4378 = vsel %vm4375, %v4377, %v4373
        %v4379 = vmul.f32 1.0, %v4378
        %v4380 = vrcp.pop %v3328
        %v4381 = vmul.f32 %v3328, %v4380
        %v4382 = vsub.f32 1.0, %v4381
        %v4383 = vmul.f32 %v4380, %v4382
        %v4384 = vadd.f32 %v4380, %v4383
        %vm4385 = vweird.f32 %v3328
        %vm4386 = vweird.f32 %v4380
        %vm4387 = vmor %vm4385, %vm4386
        %v4388 = vsel %vm4387, %v4380, %v4384
        %v4389 = vand.u32 2147483647, %v3328
        %vm4390 = vcmp.eq.f32.partialorder %v4389, 8.507059e+37
        %v4391 = vand.u32 %v3328, 2147483648
        %v4392 = vor.u32 1.1754944e-38, %v4391
        %v4393 = vsel %vm4390, %v4392, %v4388
        %v4394 = vmul.f32 1.0, %v4393
        %v4395 = vrcp.pop %v3329
        %v4396 = vmul.f32 %v3329, %v4395
        %v4397 = vsub.f32 1.0, %v4396
        %v4398 = vmul.f32 %v4395, %v4397
        %v4399 = vadd.f32 %v4395, %v4398
        %vm4400 = vweird.f32 %v3329
        %vm4401 = vweird.f32 %v4395
        %vm4402 = vmor %vm4400, %vm4401
        %v4403 = vsel %vm4402, %v4395, %v4399
        %v4404 = vand.u32 2147483647, %v3329
        %vm4405 = vcmp.eq.f32.partialorder %v4404, 8.507059e+37
        %v4406 = vand.u32 %v3329, 2147483648
        %v4407 = vor.u32 1.1754944e-38, %v4406
        %v4408 = vsel %vm4405, %v4407, %v4403
        %v4409 = vmul.f32 1.0, %v4408
        %v4410 = vrcp.pop %v3330
        %v4411 = vmul.f32 %v3330, %v4410
        %v4412 = vsub.f32 1.0, %v4411
        %v4413 = vmul.f32 %v4410, %v4412
        %v4414 = vadd.f32 %v4410, %v4413
        %vm4415 = vweird.f32 %v3330
        %vm4416 = vweird.f32 %v4410
        %vm4417 = vmor %vm4415, %vm4416
        %v4418 = vsel %vm4417, %v4410, %v4414
        %v4419 = vand.u32 2147483647, %v3330
        %vm4420 = vcmp.eq.f32.partialorder %v4419, 8.507059e+37
        %v4421 = vand.u32 %v3330, 2147483648
        %v4422 = vor.u32 1.1754944e-38, %v4421
        %v4423 = vsel %vm4420, %v4422, %v4418
        %v4424 = vmul.f32 1.0, %v4423
        %v4425 = vrcp.pop %v3331
        %v4426 = vmul.f32 %v3331, %v4425
        %v4427 = vsub.f32 1.0, %v4426
        %v4428 = vmul.f32 %v4425, %v4427
        %v4429 = vadd.f32 %v4425, %v4428
        %vm4430 = vweird.f32 %v3331
        %vm4431 = vweird.f32 %v4425
        %vm4432 = vmor %vm4430, %vm4431
        %v4433 = vsel %vm4432, %v4425, %v4429
        %v4434 = vand.u32 2147483647, %v3331
        %vm4435 = vcmp.eq.f32.partialorder %v4434, 8.507059e+37
        %v4436 = vand.u32 %v3331, 2147483648
        %v4437 = vor.u32 1.1754944e-38, %v4436
        %v4438 = vsel %vm4435, %v4437, %v4433
        %v4439 = vmul.f32 1.0, %v4438
        %v4440 = vrcp.pop %v3332
        %v4441 = vmul.f32 %v3332, %v4440
        %v4442 = vsub.f32 1.0, %v4441
        %v4443 = vmul.f32 %v4440, %v4442
        %v4444 = vadd.f32 %v4440, %v4443
        %vm4445 = vweird.f32 %v3332
        %vm4446 = vweird.f32 %v4440
        %vm4447 = vmor %vm4445, %vm4446
        %v4448 = vsel %vm4447, %v4440, %v4444
        %v4449 = vand.u32 2147483647, %v3332
        %vm4450 = vcmp.eq.f32.partialorder %v4449, 8.507059e+37
        %v4451 = vand.u32 %v3332, 2147483648
        %v4452 = vor.u32 1.1754944e-38, %v4451
        %v4453 = vsel %vm4450, %v4452, %v4448
        %v4454 = vmul.f32 1.0, %v4453
        %v4455 = vrcp.pop %v3333
        %v4456 = vmul.f32 %v3333, %v4455
        %v4457 = vsub.f32 1.0, %v4456
        %v4458 = vmul.f32 %v4455, %v4457
        %v4459 = vadd.f32 %v4455, %v4458
        %vm4460 = vweird.f32 %v3333
        %vm4461 = vweird.f32 %v4455
        %vm4462 = vmor %vm4460, %vm4461
        %v4463 = vsel %vm4462, %v4455, %v4459
        %v4464 = vand.u32 2147483647, %v3333
        %vm4465 = vcmp.eq.f32.partialorder %v4464, 8.507059e+37
        %v4466 = vand.u32 %v3333, 2147483648
        %v4467 = vor.u32 1.1754944e-38, %v4466
        %v4468 = vsel %vm4465, %v4467, %v4463
        %v4469 = vmul.f32 1.0, %v4468
        %v4470 = vrcp.pop %v3334
        %v4471 = vmul.f32 %v3334, %v4470
        %v4472 = vsub.f32 1.0, %v4471
        %v4473 = vmul.f32 %v4470, %v4472
        %v4474 = vadd.f32 %v4470, %v4473
        %vm4475 = vweird.f32 %v3334
        %vm4476 = vweird.f32 %v4470
        %vm4477 = vmor %vm4475, %vm4476
        %v4478 = vsel %vm4477, %v4470, %v4474
        %v4479 = vand.u32 2147483647, %v3334
        %vm4480 = vcmp.eq.f32.partialorder %v4479, 8.507059e+37
        %v4481 = vand.u32 %v3334, 2147483648
        %v4482 = vor.u32 1.1754944e-38, %v4481
        %v4483 = vsel %vm4480, %v4482, %v4478
        %v4484 = vmul.f32 1.0, %v4483
        %v4485 = vrcp.pop %v3335
        %v4486 = vmul.f32 %v3335, %v4485
        %v4487 = vsub.f32 1.0, %v4486
        %v4488 = vmul.f32 %v4485, %v4487
        %v4489 = vadd.f32 %v4485, %v4488
        %vm4490 = vweird.f32 %v3335
        %vm4491 = vweird.f32 %v4485
        %vm4492 = vmor %vm4490, %vm4491
        %v4493 = vsel %vm4492, %v4485, %v4489
        %v4494 = vand.u32 2147483647, %v3335
        %vm4495 = vcmp.eq.f32.partialorder %v4494, 8.507059e+37
        %v4496 = vand.u32 %v3335, 2147483648
        %v4497 = vor.u32 1.1754944e-38, %v4496
        %v4498 = vsel %vm4495, %v4497, %v4493
        %v4499 = vmul.f32 1.0, %v4498
        %v4500 = vrcp.pop %v3336
        %v4501 = vmul.f32 %v3336, %v4500
        %v4502 = vsub.f32 1.0, %v4501
        %v4503 = vmul.f32 %v4500, %v4502
        %v4504 = vadd.f32 %v4500, %v4503
        %vm4505 = vweird.f32 %v3336
        %vm4506 = vweird.f32 %v4500
        %vm4507 = vmor %vm4505, %vm4506
        %v4508 = vsel %vm4507, %v4500, %v4504
        %v4509 = vand.u32 2147483647, %v3336
        %vm4510 = vcmp.eq.f32.partialorder %v4509, 8.507059e+37
        %v4511 = vand.u32 %v3336, 2147483648
        %v4512 = vor.u32 1.1754944e-38, %v4511
        %v4513 = vsel %vm4510, %v4512, %v4508
        %v4514 = vmul.f32 1.0, %v4513
        %v4515 = vrcp.pop %v3337
        %v4516 = vmul.f32 %v3337, %v4515
        %v4517 = vsub.f32 1.0, %v4516
        %v4518 = vmul.f32 %v4515, %v4517
        %v4519 = vadd.f32 %v4515, %v4518
        %vm4520 = vweird.f32 %v3337
        %vm4521 = vweird.f32 %v4515
        %vm4522 = vmor %vm4520, %vm4521
        %v4523 = vsel %vm4522, %v4515, %v4519
        %v4524 = vand.u32 2147483647, %v3337
        %vm4525 = vcmp.eq.f32.partialorder %v4524, 8.507059e+37
        %v4526 = vand.u32 %v3337, 2147483648
        %v4527 = vor.u32 1.1754944e-38, %v4526
        %v4528 = vsel %vm4525, %v4527, %v4523
        %v4529 = vmul.f32 1.0, %v4528
        %v4530 = vrcp.pop %v3338
        %v4531 = vmul.f32 %v3338, %v4530
        %v4532 = vsub.f32 1.0, %v4531
        %v4533 = vmul.f32 %v4530, %v4532
        %v4534 = vadd.f32 %v4530, %v4533
        %vm4535 = vweird.f32 %v3338
        %vm4536 = vweird.f32 %v4530
        %vm4537 = vmor %vm4535, %vm4536
        %v4538 = vsel %vm4537, %v4530, %v4534
        %v4539 = vand.u32 2147483647, %v3338
        %vm4540 = vcmp.eq.f32.partialorder %v4539, 8.507059e+37
        %v4541 = vand.u32 %v3338, 2147483648
        %v4542 = vor.u32 1.1754944e-38, %v4541
        %v4543 = vsel %vm4540, %v4542, %v4538
        %v4544 = vmul.f32 1.0, %v4543
        %v4545 = vrcp.pop %v3339
        %v4546 = vmul.f32 %v3339, %v4545
        %v4547 = vsub.f32 1.0, %v4546
        %v4548 = vmul.f32 %v4545, %v4547
        %v4549 = vadd.f32 %v4545, %v4548
        %vm4550 = vweird.f32 %v3339
        %vm4551 = vweird.f32 %v4545
        %vm4552 = vmor %vm4550, %vm4551
        %v4553 = vsel %vm4552, %v4545, %v4549
        %v4554 = vand.u32 2147483647, %v3339
        %vm4555 = vcmp.eq.f32.partialorder %v4554, 8.507059e+37
        %v4556 = vand.u32 %v3339, 2147483648
        %v4557 = vor.u32 1.1754944e-38, %v4556
        %v4558 = vsel %vm4555, %v4557, %v4553
        %v4559 = vmul.f32 1.0, %v4558
        %v4560 = vrcp.pop %v3340
        %v4561 = vmul.f32 %v3340, %v4560
        %v4562 = vsub.f32 1.0, %v4561
        %v4563 = vmul.f32 %v4560, %v4562
        %v4564 = vadd.f32 %v4560, %v4563
        %vm4565 = vweird.f32 %v3340
        %vm4566 = vweird.f32 %v4560
        %vm4567 = vmor %vm4565, %vm4566
        %v4568 = vsel %vm4567, %v4560, %v4564
        %v4569 = vand.u32 2147483647, %v3340
        %vm4570 = vcmp.eq.f32.partialorder %v4569, 8.507059e+37
        %v4571 = vand.u32 %v3340, 2147483648
        %v4572 = vor.u32 1.1754944e-38, %v4571
        %v4573 = vsel %vm4570, %v4572, %v4568
        %v4574 = vmul.f32 1.0, %v4573
        %v4575 = vrcp.pop %v3341
        %v4576 = vmul.f32 %v3341, %v4575
        %v4577 = vsub.f32 1.0, %v4576
        %v4578 = vmul.f32 %v4575, %v4577
        %v4579 = vadd.f32 %v4575, %v4578
        %vm4580 = vweird.f32 %v3341
        %vm4581 = vweird.f32 %v4575
        %vm4582 = vmor %vm4580, %vm4581
        %v4583 = vsel %vm4582, %v4575, %v4579
        %v4584 = vand.u32 2147483647, %v3341
        %vm4585 = vcmp.eq.f32.partialorder %v4584, 8.507059e+37
        %v4586 = vand.u32 %v3341, 2147483648
        %v4587 = vor.u32 1.1754944e-38, %v4586
        %v4588 = vsel %vm4585, %v4587, %v4583
        %v4589 = vmul.f32 1.0, %v4588
        %v4590 = vrcp.pop %v3342
        %v4591 = vmul.f32 %v3342, %v4590
        %v4592 = vsub.f32 1.0, %v4591
        %v4593 = vmul.f32 %v4590, %v4592
        %v4594 = vadd.f32 %v4590, %v4593
        %vm4595 = vweird.f32 %v3342
        %vm4596 = vweird.f32 %v4590
        %vm4597 = vmor %vm4595, %vm4596
        %v4598 = vsel %vm4597, %v4590, %v4594
        %v4599 = vand.u32 2147483647, %v3342
        %vm4600 = vcmp.eq.f32.partialorder %v4599, 8.507059e+37
        %v4601 = vand.u32 %v3342, 2147483648
        %v4602 = vor.u32 1.1754944e-38, %v4601
        %v4603 = vsel %vm4600, %v4602, %v4598
        %v4604 = vmul.f32 1.0, %v4603
        %v4605 = vrcp.pop %v3343
        %v4606 = vmul.f32 %v3343, %v4605
        %v4607 = vsub.f32 1.0, %v4606
        %v4608 = vmul.f32 %v4605, %v4607
        %v4609 = vadd.f32 %v4605, %v4608
        %vm4610 = vweird.f32 %v3343
        %vm4611 = vweird.f32 %v4605
        %vm4612 = vmor %vm4610, %vm4611
        %v4613 = vsel %vm4612, %v4605, %v4609
        %v4614 = vand.u32 2147483647, %v3343
        %vm4615 = vcmp.eq.f32.partialorder %v4614, 8.507059e+37
        %v4616 = vand.u32 %v3343, 2147483648
        %v4617 = vor.u32 1.1754944e-38, %v4616
        %v4618 = vsel %vm4615, %v4617, %v4613
        %v4619 = vmul.f32 1.0, %v4618
        %v4620 = vrcp.pop %v3344
        %v4621 = vmul.f32 %v3344, %v4620
        %v4622 = vsub.f32 1.0, %v4621
        %v4623 = vmul.f32 %v4620, %v4622
        %v4624 = vadd.f32 %v4620, %v4623
        %vm4625 = vweird.f32 %v3344
        %vm4626 = vweird.f32 %v4620
        %vm4627 = vmor %vm4625, %vm4626
        %v4628 = vsel %vm4627, %v4620, %v4624
        %v4629 = vand.u32 2147483647, %v3344
        %vm4630 = vcmp.eq.f32.partialorder %v4629, 8.507059e+37
        %v4631 = vand.u32 %v3344, 2147483648
        %v4632 = vor.u32 1.1754944e-38, %v4631
        %v4633 = vsel %vm4630, %v4632, %v4628
        %v4634 = vmul.f32 1.0, %v4633
        %v4635 = vrcp.pop %v3345
        %v4636 = vmul.f32 %v3345, %v4635
        %v4637 = vsub.f32 1.0, %v4636
        %v4638 = vmul.f32 %v4635, %v4637
        %v4639 = vadd.f32 %v4635, %v4638
        %vm4640 = vweird.f32 %v3345
        %vm4641 = vweird.f32 %v4635
        %vm4642 = vmor %vm4640, %vm4641
        %v4643 = vsel %vm4642, %v4635, %v4639
        %v4644 = vand.u32 2147483647, %v3345
        %vm4645 = vcmp.eq.f32.partialorder %v4644, 8.507059e+37
        %v4646 = vand.u32 %v3345, 2147483648
        %v4647 = vor.u32 1.1754944e-38, %v4646
        %v4648 = vsel %vm4645, %v4647, %v4643
        %v4649 = vmul.f32 1.0, %v4648
        %v4650 = vrcp.pop %v3346
        %v4651 = vmul.f32 %v3346, %v4650
        %v4652 = vsub.f32 1.0, %v4651
        %v4653 = vmul.f32 %v4650, %v4652
        %v4654 = vadd.f32 %v4650, %v4653
        %vm4655 = vweird.f32 %v3346
        %vm4656 = vweird.f32 %v4650
        %vm4657 = vmor %vm4655, %vm4656
        %v4658 = vsel %vm4657, %v4650, %v4654
        %v4659 = vand.u32 2147483647, %v3346
        %vm4660 = vcmp.eq.f32.partialorder %v4659, 8.507059e+37
        %v4661 = vand.u32 %v3346, 2147483648
        %v4662 = vor.u32 1.1754944e-38, %v4661
        %v4663 = vsel %vm4660, %v4662, %v4658
        %v4664 = vmul.f32 1.0, %v4663
        %v4665 = vrcp.pop %v3347
        %v4666 = vmul.f32 %v3347, %v4665
        %v4667 = vsub.f32 1.0, %v4666
        %v4668 = vmul.f32 %v4665, %v4667
        %v4669 = vadd.f32 %v4665, %v4668
        %vm4670 = vweird.f32 %v3347
        %vm4671 = vweird.f32 %v4665
        %vm4672 = vmor %vm4670, %vm4671
        %v4673 = vsel %vm4672, %v4665, %v4669
        %v4674 = vand.u32 2147483647, %v3347
        %vm4675 = vcmp.eq.f32.partialorder %v4674, 8.507059e+37
        %v4676 = vand.u32 %v3347, 2147483648
        %v4677 = vor.u32 1.1754944e-38, %v4676
        %v4678 = vsel %vm4675, %v4677, %v4673
        %v4679 = vmul.f32 1.0, %v4678
        %v4680 = vrcp.pop %v3348
        %v4681 = vmul.f32 %v3348, %v4680
        %v4682 = vsub.f32 1.0, %v4681
        %v4683 = vmul.f32 %v4680, %v4682
        %v4684 = vadd.f32 %v4680, %v4683
        %vm4685 = vweird.f32 %v3348
        %vm4686 = vweird.f32 %v4680
        %vm4687 = vmor %vm4685, %vm4686
        %v4688 = vsel %vm4687, %v4680, %v4684
        %v4689 = vand.u32 2147483647, %v3348
        %vm4690 = vcmp.eq.f32.partialorder %v4689, 8.507059e+37
        %v4691 = vand.u32 %v3348, 2147483648
        %v4692 = vor.u32 1.1754944e-38, %v4691
        %v4693 = vsel %vm4690, %v4692, %v4688
        %v4694 = vmul.f32 1.0, %v4693
        %v4695 = vrcp.pop %v3349
        %v4696 = vmul.f32 %v3349, %v4695
        %v4697 = vsub.f32 1.0, %v4696
        %v4698 = vmul.f32 %v4695, %v4697
        %v4699 = vadd.f32 %v4695, %v4698
        %vm4700 = vweird.f32 %v3349
        %vm4701 = vweird.f32 %v4695
        %vm4702 = vmor %vm4700, %vm4701
        %v4703 = vsel %vm4702, %v4695, %v4699
        %v4704 = vand.u32 2147483647, %v3349
        %vm4705 = vcmp.eq.f32.partialorder %v4704, 8.507059e+37
        %v4706 = vand.u32 %v3349, 2147483648
        %v4707 = vor.u32 1.1754944e-38, %v4706
        %v4708 = vsel %vm4705, %v4707, %v4703
        %v4709 = vmul.f32 1.0, %v4708
        %v4710 = vrcp.pop %v3350
        %v4711 = vmul.f32 %v3350, %v4710
        %v4712 = vsub.f32 1.0, %v4711
        %v4713 = vmul.f32 %v4710, %v4712
        %v4714 = vadd.f32 %v4710, %v4713
        %vm4715 = vweird.f32 %v3350
        %vm4716 = vweird.f32 %v4710
        %vm4717 = vmor %vm4715, %vm4716
        %v4718 = vsel %vm4717, %v4710, %v4714
        %v4719 = vand.u32 2147483647, %v3350
        %vm4720 = vcmp.eq.f32.partialorder %v4719, 8.507059e+37
        %v4721 = vand.u32 %v3350, 2147483648
        %v4722 = vor.u32 1.1754944e-38, %v4721
        %v4723 = vsel %vm4720, %v4722, %v4718
        %v4724 = vmul.f32 1.0, %v4723
        %v4725 = vrcp.pop %v3351
        %v4726 = vmul.f32 %v3351, %v4725
        %v4727 = vsub.f32 1.0, %v4726
        %v4728 = vmul.f32 %v4725, %v4727
        %v4729 = vadd.f32 %v4725, %v4728
        %vm4730 = vweird.f32 %v3351
        %vm4731 = vweird.f32 %v4725
        %vm4732 = vmor %vm4730, %vm4731
        %v4733 = vsel %vm4732, %v4725, %v4729
        %v4734 = vand.u32 2147483647, %v3351
        %vm4735 = vcmp.eq.f32.partialorder %v4734, 8.507059e+37
        %v4736 = vand.u32 %v3351, 2147483648
        %v4737 = vor.u32 1.1754944e-38, %v4736
        %v4738 = vsel %vm4735, %v4737, %v4733
        %v4739 = vmul.f32 1.0, %v4738
        %v4740 = vrcp.pop %v3352
        %v4741 = vmul.f32 %v3352, %v4740
        %v4742 = vsub.f32 1.0, %v4741
        %v4743 = vmul.f32 %v4740, %v4742
        %v4744 = vadd.f32 %v4740, %v4743
        %vm4745 = vweird.f32 %v3352
        %vm4746 = vweird.f32 %v4740
        %vm4747 = vmor %vm4745, %vm4746
        %v4748 = vsel %vm4747, %v4740, %v4744
        %v4749 = vand.u32 2147483647, %v3352
        %vm4750 = vcmp.eq.f32.partialorder %v4749, 8.507059e+37
        %v4751 = vand.u32 %v3352, 2147483648
        %v4752 = vor.u32 1.1754944e-38, %v4751
        %v4753 = vsel %vm4750, %v4752, %v4748
        %v4754 = vmul.f32 1.0, %v4753
        %v4755 = vrcp.pop %v3353
        %v4756 = vmul.f32 %v3353, %v4755
        %v4757 = vsub.f32 1.0, %v4756
        %v4758 = vmul.f32 %v4755, %v4757
        %v4759 = vadd.f32 %v4755, %v4758
        %vm4760 = vweird.f32 %v3353
        %vm4761 = vweird.f32 %v4755
        %vm4762 = vmor %vm4760, %vm4761
        %v4763 = vsel %vm4762, %v4755, %v4759
        %v4764 = vand.u32 2147483647, %v3353
        %vm4765 = vcmp.eq.f32.partialorder %v4764, 8.507059e+37
        %v4766 = vand.u32 %v3353, 2147483648
        %v4767 = vor.u32 1.1754944e-38, %v4766
        %v4768 = vsel %vm4765, %v4767, %v4763
        %v4769 = vmul.f32 1.0, %v4768
        %v4770 = vrcp.pop %v3354
        %v4771 = vmul.f32 %v3354, %v4770
        %v4772 = vsub.f32 1.0, %v4771
        %v4773 = vmul.f32 %v4770, %v4772
        %v4774 = vadd.f32 %v4770, %v4773
        %vm4775 = vweird.f32 %v3354
        %vm4776 = vweird.f32 %v4770
        %vm4777 = vmor %vm4775, %vm4776
        %v4778 = vsel %vm4777, %v4770, %v4774
        %v4779 = vand.u32 2147483647, %v3354
        %vm4780 = vcmp.eq.f32.partialorder %v4779, 8.507059e+37
        %v4781 = vand.u32 %v3354, 2147483648
        %v4782 = vor.u32 1.1754944e-38, %v4781
        %v4783 = vsel %vm4780, %v4782, %v4778
        %v4784 = vmul.f32 1.0, %v4783
        %v4785 = vrcp.pop %v3355
        %v4786 = vmul.f32 %v3355, %v4785
        %v4787 = vsub.f32 1.0, %v4786
        %v4788 = vmul.f32 %v4785, %v4787
        %v4789 = vadd.f32 %v4785, %v4788
        %vm4790 = vweird.f32 %v3355
        %vm4791 = vweird.f32 %v4785
        %vm4792 = vmor %vm4790, %vm4791
        %v4793 = vsel %vm4792, %v4785, %v4789
        %v4794 = vand.u32 2147483647, %v3355
        %vm4795 = vcmp.eq.f32.partialorder %v4794, 8.507059e+37
        %v4796 = vand.u32 %v3355, 2147483648
        %v4797 = vor.u32 1.1754944e-38, %v4796
        %v4798 = vsel %vm4795, %v4797, %v4793
        %v4799 = vmul.f32 1.0, %v4798
        %v4800 = vrcp.pop %v3356
        %v4801 = vmul.f32 %v3356, %v4800
        %v4802 = vsub.f32 1.0, %v4801
        %v4803 = vmul.f32 %v4800, %v4802
        %v4804 = vadd.f32 %v4800, %v4803
        %vm4805 = vweird.f32 %v3356
        %vm4806 = vweird.f32 %v4800
        %vm4807 = vmor %vm4805, %vm4806
        %v4808 = vsel %vm4807, %v4800, %v4804
        %v4809 = vand.u32 2147483647, %v3356
        %vm4810 = vcmp.eq.f32.partialorder %v4809, 8.507059e+37
        %v4811 = vand.u32 %v3356, 2147483648
        %v4812 = vor.u32 1.1754944e-38, %v4811
        %v4813 = vsel %vm4810, %v4812, %v4808
        %v4814 = vmul.f32 1.0, %v4813
        %v4815 = vrcp.pop %v3357
        %v4816 = vmul.f32 %v3357, %v4815
        %v4817 = vsub.f32 1.0, %v4816
        %v4818 = vmul.f32 %v4815, %v4817
        %v4819 = vadd.f32 %v4815, %v4818
        %vm4820 = vweird.f32 %v3357
        %vm4821 = vweird.f32 %v4815
        %vm4822 = vmor %vm4820, %vm4821
        %v4823 = vsel %vm4822, %v4815, %v4819
        %v4824 = vand.u32 2147483647, %v3357
        %vm4825 = vcmp.eq.f32.partialorder %v4824, 8.507059e+37
        %v4826 = vand.u32 %v3357, 2147483648
        %v4827 = vor.u32 1.1754944e-38, %v4826
        %v4828 = vsel %vm4825, %v4827, %v4823
        %v4829 = vmul.f32 1.0, %v4828
        %v4830 = vrcp.pop %v3358
        %v4831 = vmul.f32 %v3358, %v4830
        %v4832 = vsub.f32 1.0, %v4831
        %v4833 = vmul.f32 %v4830, %v4832
        %v4834 = vadd.f32 %v4830, %v4833
        %vm4835 = vweird.f32 %v3358
        %vm4836 = vweird.f32 %v4830
        %vm4837 = vmor %vm4835, %vm4836
        %v4838 = vsel %vm4837, %v4830, %v4834
        %v4839 = vand.u32 2147483647, %v3358
        %vm4840 = vcmp.eq.f32.partialorder %v4839, 8.507059e+37
        %v4841 = vand.u32 %v3358, 2147483648
        %v4842 = vor.u32 1.1754944e-38, %v4841
        %v4843 = vsel %vm4840, %v4842, %v4838
        %v4844 = vmul.f32 1.0, %v4843
        %v4845 = vrcp.pop %v3359
        %v4846 = vmul.f32 %v3359, %v4845
        %v4847 = vsub.f32 1.0, %v4846
        %v4848 = vmul.f32 %v4845, %v4847
        %v4849 = vadd.f32 %v4845, %v4848
        %vm4850 = vweird.f32 %v3359
        %vm4851 = vweird.f32 %v4845
        %vm4852 = vmor %vm4850, %vm4851
        %v4853 = vsel %vm4852, %v4845, %v4849
        %v4854 = vand.u32 2147483647, %v3359
        %vm4855 = vcmp.eq.f32.partialorder %v4854, 8.507059e+37
        %v4856 = vand.u32 %v3359, 2147483648
        %v4857 = vor.u32 1.1754944e-38, %v4856
        %v4858 = vsel %vm4855, %v4857, %v4853
        %v4859 = vmul.f32 1.0, %v4858
        %v4860 = vrcp.pop %v3360
        %v4861 = vmul.f32 %v3360, %v4860
        %v4862 = vsub.f32 1.0, %v4861
        %v4863 = vmul.f32 %v4860, %v4862
        %v4864 = vadd.f32 %v4860, %v4863
        %vm4865 = vweird.f32 %v3360
        %vm4866 = vweird.f32 %v4860
        %vm4867 = vmor %vm4865, %vm4866
        %v4868 = vsel %vm4867, %v4860, %v4864
        %v4869 = vand.u32 2147483647, %v3360
        %vm4870 = vcmp.eq.f32.partialorder %v4869, 8.507059e+37
        %v4871 = vand.u32 %v3360, 2147483648
        %v4872 = vor.u32 1.1754944e-38, %v4871
        %v4873 = vsel %vm4870, %v4872, %v4868
        %v4874 = vmul.f32 1.0, %v4873
        %v4875 = vrcp.pop %v3361
        %v4876 = vmul.f32 %v3361, %v4875
        %v4877 = vsub.f32 1.0, %v4876
        %v4878 = vmul.f32 %v4875, %v4877
        %v4879 = vadd.f32 %v4875, %v4878
        %vm4880 = vweird.f32 %v3361
        %vm4881 = vweird.f32 %v4875
        %vm4882 = vmor %vm4880, %vm4881
        %v4883 = vsel %vm4882, %v4875, %v4879
        %v4884 = vand.u32 2147483647, %v3361
        %vm4885 = vcmp.eq.f32.partialorder %v4884, 8.507059e+37
        %v4886 = vand.u32 %v3361, 2147483648
        %v4887 = vor.u32 1.1754944e-38, %v4886
        %v4888 = vsel %vm4885, %v4887, %v4883
        %v4889 = vmul.f32 1.0, %v4888
        %v4890 = vrcp.pop %v3362
        %v4891 = vmul.f32 %v3362, %v4890
        %v4892 = vsub.f32 1.0, %v4891
        %v4893 = vmul.f32 %v4890, %v4892
        %v4894 = vadd.f32 %v4890, %v4893
        %vm4895 = vweird.f32 %v3362
        %vm4896 = vweird.f32 %v4890
        %vm4897 = vmor %vm4895, %vm4896
        %v4898 = vsel %vm4897, %v4890, %v4894
        %v4899 = vand.u32 2147483647, %v3362
        %vm4900 = vcmp.eq.f32.partialorder %v4899, 8.507059e+37
        %v4901 = vand.u32 %v3362, 2147483648
        %v4902 = vor.u32 1.1754944e-38, %v4901
        %v4903 = vsel %vm4900, %v4902, %v4898
        %v4904 = vmul.f32 1.0, %v4903
        %v4905 = vrcp.pop %v3363
        %v4906 = vmul.f32 %v3363, %v4905
        %v4907 = vsub.f32 1.0, %v4906
        %v4908 = vmul.f32 %v4905, %v4907
        %v4909 = vadd.f32 %v4905, %v4908
        %vm4910 = vweird.f32 %v3363
        %vm4911 = vweird.f32 %v4905
        %vm4912 = vmor %vm4910, %vm4911
        %v4913 = vsel %vm4912, %v4905, %v4909
        %v4914 = vand.u32 2147483647, %v3363
        %vm4915 = vcmp.eq.f32.partialorder %v4914, 8.507059e+37
        %v4916 = vand.u32 %v3363, 2147483648
        %v4917 = vor.u32 1.1754944e-38, %v4916
        %v4918 = vsel %vm4915, %v4917, %v4913
        %v4919 = vmul.f32 1.0, %v4918
        %v4920 = vrcp.pop %v3364
        %v4921 = vmul.f32 %v3364, %v4920
        %v4922 = vsub.f32 1.0, %v4921
        %v4923 = vmul.f32 %v4920, %v4922
        %v4924 = vadd.f32 %v4920, %v4923
        %vm4925 = vweird.f32 %v3364
        %vm4926 = vweird.f32 %v4920
        %vm4927 = vmor %vm4925, %vm4926
        %v4928 = vsel %vm4927, %v4920, %v4924
        %v4929 = vand.u32 2147483647, %v3364
        %vm4930 = vcmp.eq.f32.partialorder %v4929, 8.507059e+37
        %v4931 = vand.u32 %v3364, 2147483648
        %v4932 = vor.u32 1.1754944e-38, %v4931
        %v4933 = vsel %vm4930, %v4932, %v4928
        %v4934 = vmul.f32 1.0, %v4933
        %v4935 = vrcp.pop %v3365
        %v4936 = vmul.f32 %v3365, %v4935
        %v4937 = vsub.f32 1.0, %v4936
        %v4938 = vmul.f32 %v4935, %v4937
        %v4939 = vadd.f32 %v4935, %v4938
        %vm4940 = vweird.f32 %v3365
        %vm4941 = vweird.f32 %v4935
        %vm4942 = vmor %vm4940, %vm4941
        %v4943 = vsel %vm4942, %v4935, %v4939
        %v4944 = vand.u32 2147483647, %v3365
        %vm4945 = vcmp.eq.f32.partialorder %v4944, 8.507059e+37
        %v4946 = vand.u32 %v3365, 2147483648
        %v4947 = vor.u32 1.1754944e-38, %v4946
        %v4948 = vsel %vm4945, %v4947, %v4943
        %v4949 = vmul.f32 1.0, %v4948
        %v4950 = vrcp.pop %v3366
        %v4951 = vmul.f32 %v3366, %v4950
        %v4952 = vsub.f32 1.0, %v4951
        %v4953 = vmul.f32 %v4950, %v4952
        %v4954 = vadd.f32 %v4950, %v4953
        %vm4955 = vweird.f32 %v3366
        %vm4956 = vweird.f32 %v4950
        %vm4957 = vmor %vm4955, %vm4956
        %v4958 = vsel %vm4957, %v4950, %v4954
        %v4959 = vand.u32 2147483647, %v3366
        %vm4960 = vcmp.eq.f32.partialorder %v4959, 8.507059e+37
        %v4961 = vand.u32 %v3366, 2147483648
        %v4962 = vor.u32 1.1754944e-38, %v4961
        %v4963 = vsel %vm4960, %v4962, %v4958
        %v4964 = vmul.f32 1.0, %v4963
        %v4965 = vrcp.pop %v3367
        %v4966 = vmul.f32 %v3367, %v4965
        %v4967 = vsub.f32 1.0, %v4966
        %v4968 = vmul.f32 %v4965, %v4967
        %v4969 = vadd.f32 %v4965, %v4968
        %vm4970 = vweird.f32 %v3367
        %vm4971 = vweird.f32 %v4965
        %vm4972 = vmor %vm4970, %vm4971
        %v4973 = vsel %vm4972, %v4965, %v4969
        %v4974 = vand.u32 2147483647, %v3367
        %vm4975 = vcmp.eq.f32.partialorder %v4974, 8.507059e+37
        %v4976 = vand.u32 %v3367, 2147483648
        %v4977 = vor.u32 1.1754944e-38, %v4976
        %v4978 = vsel %vm4975, %v4977, %v4973
        %v4979 = vmul.f32 1.0, %v4978
        %v4980 = vrcp.pop %v3368
        %v4981 = vmul.f32 %v3368, %v4980
        %v4982 = vsub.f32 1.0, %v4981
        %v4983 = vmul.f32 %v4980, %v4982
        %v4984 = vadd.f32 %v4980, %v4983
        %vm4985 = vweird.f32 %v3368
        %vm4986 = vweird.f32 %v4980
        %vm4987 = vmor %vm4985, %vm4986
        %v4988 = vsel %vm4987, %v4980, %v4984
        %v4989 = vand.u32 2147483647, %v3368
        %vm4990 = vcmp.eq.f32.partialorder %v4989, 8.507059e+37
        %v4991 = vand.u32 %v3368, 2147483648
        %v4992 = vor.u32 1.1754944e-38, %v4991
        %v4993 = vsel %vm4990, %v4992, %v4988
        %v4994 = vmul.f32 1.0, %v4993
        %v4995 = vrcp.pop %v3369
        %v4996 = vmul.f32 %v3369, %v4995
        %v4997 = vsub.f32 1.0, %v4996
        %v4998 = vmul.f32 %v4995, %v4997
        %v4999 = vadd.f32 %v4995, %v4998
        %vm5000 = vweird.f32 %v3369
        %vm5001 = vweird.f32 %v4995
        %vm5002 = vmor %vm5000, %vm5001
        %v5003 = vsel %vm5002, %v4995, %v4999
        %v5004 = vand.u32 2147483647, %v3369
        %vm5005 = vcmp.eq.f32.partialorder %v5004, 8.507059e+37
        %v5006 = vand.u32 %v3369, 2147483648
        %v5007 = vor.u32 1.1754944e-38, %v5006
        %v5008 = vsel %vm5005, %v5007, %v5003
        %v5009 = vmul.f32 1.0, %v5008
        %v5010 = vrcp.pop %v3370
        %v5011 = vmul.f32 %v3370, %v5010
        %v5012 = vsub.f32 1.0, %v5011
        %v5013 = vmul.f32 %v5010, %v5012
        %v5014 = vadd.f32 %v5010, %v5013
        %vm5015 = vweird.f32 %v3370
        %vm5016 = vweird.f32 %v5010
        %vm5017 = vmor %vm5015, %vm5016
        %v5018 = vsel %vm5017, %v5010, %v5014
        %v5019 = vand.u32 2147483647, %v3370
        %vm5020 = vcmp.eq.f32.partialorder %v5019, 8.507059e+37
        %v5021 = vand.u32 %v3370, 2147483648
        %v5022 = vor.u32 1.1754944e-38, %v5021
        %v5023 = vsel %vm5020, %v5022, %v5018
        %v5024 = vmul.f32 1.0, %v5023
        %v5025 = vrcp.pop %v3371
        %v5026 = vmul.f32 %v3371, %v5025
        %v5027 = vsub.f32 1.0, %v5026
        %v5028 = vmul.f32 %v5025, %v5027
        %v5029 = vadd.f32 %v5025, %v5028
        %vm5030 = vweird.f32 %v3371
        %vm5031 = vweird.f32 %v5025
        %vm5032 = vmor %vm5030, %vm5031
        %v5033 = vsel %vm5032, %v5025, %v5029
        %v5034 = vand.u32 2147483647, %v3371
        %vm5035 = vcmp.eq.f32.partialorder %v5034, 8.507059e+37
        %v5036 = vand.u32 %v3371, 2147483648
        %v5037 = vor.u32 1.1754944e-38, %v5036
        %v5038 = vsel %vm5035, %v5037, %v5033
        %v5039 = vmul.f32 1.0, %v5038
        %v5040 = vrcp.pop %v3372
        %v5041 = vmul.f32 %v3372, %v5040
        %v5042 = vsub.f32 1.0, %v5041
        %v5043 = vmul.f32 %v5040, %v5042
        %v5044 = vadd.f32 %v5040, %v5043
        %vm5045 = vweird.f32 %v3372
        %vm5046 = vweird.f32 %v5040
        %vm5047 = vmor %vm5045, %vm5046
        %v5048 = vsel %vm5047, %v5040, %v5044
        %v5049 = vand.u32 2147483647, %v3372
        %vm5050 = vcmp.eq.f32.partialorder %v5049, 8.507059e+37
        %v5051 = vand.u32 %v3372, 2147483648
        %v5052 = vor.u32 1.1754944e-38, %v5051
        %v5053 = vsel %vm5050, %v5052, %v5048
        %v5054 = vmul.f32 1.0, %v5053
        %v5055 = vrcp.pop %v3373
        %v5056 = vmul.f32 %v3373, %v5055
        %v5057 = vsub.f32 1.0, %v5056
        %v5058 = vmul.f32 %v5055, %v5057
        %v5059 = vadd.f32 %v5055, %v5058
        %vm5060 = vweird.f32 %v3373
        %vm5061 = vweird.f32 %v5055
        %vm5062 = vmor %vm5060, %vm5061
        %v5063 = vsel %vm5062, %v5055, %v5059
        %v5064 = vand.u32 2147483647, %v3373
        %vm5065 = vcmp.eq.f32.partialorder %v5064, 8.507059e+37
        %v5066 = vand.u32 %v3373, 2147483648
        %v5067 = vor.u32 1.1754944e-38, %v5066
        %v5068 = vsel %vm5065, %v5067, %v5063
        %v5069 = vmul.f32 1.0, %v5068
        %v5070 = vrcp.pop %v3374
        %v5071 = vmul.f32 %v3374, %v5070
        %v5072 = vsub.f32 1.0, %v5071
        %v5073 = vmul.f32 %v5070, %v5072
        %v5074 = vadd.f32 %v5070, %v5073
        %vm5075 = vweird.f32 %v3374
        %vm5076 = vweird.f32 %v5070
        %vm5077 = vmor %vm5075, %vm5076
        %v5078 = vsel %vm5077, %v5070, %v5074
        %v5079 = vand.u32 2147483647, %v3374
        %vm5080 = vcmp.eq.f32.partialorder %v5079, 8.507059e+37
        %v5081 = vand.u32 %v3374, 2147483648
        %v5082 = vor.u32 1.1754944e-38, %v5081
        %v5083 = vsel %vm5080, %v5082, %v5078
        %v5084 = vmul.f32 1.0, %v5083
        %v5085 = vrcp.pop %v3375
        %v5086 = vmul.f32 %v3375, %v5085
        %v5087 = vsub.f32 1.0, %v5086
        %v5088 = vmul.f32 %v5085, %v5087
        %v5089 = vadd.f32 %v5085, %v5088
        %vm5090 = vweird.f32 %v3375
        %vm5091 = vweird.f32 %v5085
        %vm5092 = vmor %vm5090, %vm5091
        %v5093 = vsel %vm5092, %v5085, %v5089
        %v5094 = vand.u32 2147483647, %v3375
        %vm5095 = vcmp.eq.f32.partialorder %v5094, 8.507059e+37
        %v5096 = vand.u32 %v3375, 2147483648
        %v5097 = vor.u32 1.1754944e-38, %v5096
        %v5098 = vsel %vm5095, %v5097, %v5093
        %v5099 = vmul.f32 1.0, %v5098
        %v5100 = vrcp.pop %v3376
        %v5101 = vmul.f32 %v3376, %v5100
        %v5102 = vsub.f32 1.0, %v5101
        %v5103 = vmul.f32 %v5100, %v5102
        %v5104 = vadd.f32 %v5100, %v5103
        %vm5105 = vweird.f32 %v3376
        %vm5106 = vweird.f32 %v5100
        %vm5107 = vmor %vm5105, %vm5106
        %v5108 = vsel %vm5107, %v5100, %v5104
        %v5109 = vand.u32 2147483647, %v3376
        %vm5110 = vcmp.eq.f32.partialorder %v5109, 8.507059e+37
        %v5111 = vand.u32 %v3376, 2147483648
        %v5112 = vor.u32 1.1754944e-38, %v5111
        %v5113 = vsel %vm5110, %v5112, %v5108
        %v5114 = vmul.f32 1.0, %v5113
        %v5115 = vrcp.pop %v3377
        %v5116 = vmul.f32 %v3377, %v5115
        %v5117 = vsub.f32 1.0, %v5116
        %v5118 = vmul.f32 %v5115, %v5117
        %v5119 = vadd.f32 %v5115, %v5118
        %vm5120 = vweird.f32 %v3377
        %vm5121 = vweird.f32 %v5115
        %vm5122 = vmor %vm5120, %vm5121
        %v5123 = vsel %vm5122, %v5115, %v5119
        %v5124 = vand.u32 2147483647, %v3377
        %vm5125 = vcmp.eq.f32.partialorder %v5124, 8.507059e+37
        %v5126 = vand.u32 %v3377, 2147483648
        %v5127 = vor.u32 1.1754944e-38, %v5126
        %v5128 = vsel %vm5125, %v5127, %v5123
        %v5129 = vmul.f32 1.0, %v5128
        %v5130 = vrcp.pop %v3378
        %v5131 = vmul.f32 %v3378, %v5130
        %v5132 = vsub.f32 1.0, %v5131
        %v5133 = vmul.f32 %v5130, %v5132
        %v5134 = vadd.f32 %v5130, %v5133
        %vm5135 = vweird.f32 %v3378
        %vm5136 = vweird.f32 %v5130
        %vm5137 = vmor %vm5135, %vm5136
        %v5138 = vsel %vm5137, %v5130, %v5134
        %v5139 = vand.u32 2147483647, %v3378
        %vm5140 = vcmp.eq.f32.partialorder %v5139, 8.507059e+37
        %v5141 = vand.u32 %v3378, 2147483648
        %v5142 = vor.u32 1.1754944e-38, %v5141
        %v5143 = vsel %vm5140, %v5142, %v5138
        %v5144 = vmul.f32 1.0, %v5143
        %v5145 = vrcp.pop %v3379
        %v5146 = vmul.f32 %v3379, %v5145
        %v5147 = vsub.f32 1.0, %v5146
        %v5148 = vmul.f32 %v5145, %v5147
        %v5149 = vadd.f32 %v5145, %v5148
        %vm5150 = vweird.f32 %v3379
        %vm5151 = vweird.f32 %v5145
        %vm5152 = vmor %vm5150, %vm5151
        %v5153 = vsel %vm5152, %v5145, %v5149
        %v5154 = vand.u32 2147483647, %v3379
        %vm5155 = vcmp.eq.f32.partialorder %v5154, 8.507059e+37
        %v5156 = vand.u32 %v3379, 2147483648
        %v5157 = vor.u32 1.1754944e-38, %v5156
        %v5158 = vsel %vm5155, %v5157, %v5153
        %v5159 = vmul.f32 1.0, %v5158
        %v5160 = vrcp.pop %v3380
        %v5161 = vmul.f32 %v3380, %v5160
        %v5162 = vsub.f32 1.0, %v5161
        %v5163 = vmul.f32 %v5160, %v5162
        %v5164 = vadd.f32 %v5160, %v5163
        %vm5165 = vweird.f32 %v3380
        %vm5166 = vweird.f32 %v5160
        %vm5167 = vmor %vm5165, %vm5166
        %v5168 = vsel %vm5167, %v5160, %v5164
        %v5169 = vand.u32 2147483647, %v3380
        %vm5170 = vcmp.eq.f32.partialorder %v5169, 8.507059e+37
        %v5171 = vand.u32 %v3380, 2147483648
        %v5172 = vor.u32 1.1754944e-38, %v5171
        %v5173 = vsel %vm5170, %v5172, %v5168
        %v5174 = vmul.f32 1.0, %v5173
        %v5175 = vrcp.pop %v3381
        %v5176 = vmul.f32 %v3381, %v5175
        %v5177 = vsub.f32 1.0, %v5176
        %v5178 = vmul.f32 %v5175, %v5177
        %v5179 = vadd.f32 %v5175, %v5178
        %vm5180 = vweird.f32 %v3381
        %vm5181 = vweird.f32 %v5175
        %vm5182 = vmor %vm5180, %vm5181
        %v5183 = vsel %vm5182, %v5175, %v5179
        %v5184 = vand.u32 2147483647, %v3381
        %vm5185 = vcmp.eq.f32.partialorder %v5184, 8.507059e+37
        %v5186 = vand.u32 %v3381, 2147483648
        %v5187 = vor.u32 1.1754944e-38, %v5186
        %v5188 = vsel %vm5185, %v5187, %v5183
        %v5189 = vmul.f32 1.0, %v5188
        %v5190 = vrcp.pop %v3382
        %v5191 = vmul.f32 %v3382, %v5190
        %v5192 = vsub.f32 1.0, %v5191
        %v5193 = vmul.f32 %v5190, %v5192
        %v5194 = vadd.f32 %v5190, %v5193
        %vm5195 = vweird.f32 %v3382
        %vm5196 = vweird.f32 %v5190
        %vm5197 = vmor %vm5195, %vm5196
        %v5198 = vsel %vm5197, %v5190, %v5194
        %v5199 = vand.u32 2147483647, %v3382
        %vm5200 = vcmp.eq.f32.partialorder %v5199, 8.507059e+37
        %v5201 = vand.u32 %v3382, 2147483648
        %v5202 = vor.u32 1.1754944e-38, %v5201
        %v5203 = vsel %vm5200, %v5202, %v5198
        %v5204 = vmul.f32 1.0, %v5203
        %v5205 = vrcp.pop %v3383
        %v5206 = vmul.f32 %v3383, %v5205
        %v5207 = vsub.f32 1.0, %v5206
        %v5208 = vmul.f32 %v5205, %v5207
        %v5209 = vadd.f32 %v5205, %v5208
        %vm5210 = vweird.f32 %v3383
        %vm5211 = vweird.f32 %v5205
        %vm5212 = vmor %vm5210, %vm5211
        %v5213 = vsel %vm5212, %v5205, %v5209
        %v5214 = vand.u32 2147483647, %v3383
        %vm5215 = vcmp.eq.f32.partialorder %v5214, 8.507059e+37
        %v5216 = vand.u32 %v3383, 2147483648
        %v5217 = vor.u32 1.1754944e-38, %v5216
        %v5218 = vsel %vm5215, %v5217, %v5213
        %v5219 = vmul.f32 1.0, %v5218
        %v5220 = vrcp.pop %v3384
        %v5221 = vmul.f32 %v3384, %v5220
        %v5222 = vsub.f32 1.0, %v5221
        %v5223 = vmul.f32 %v5220, %v5222
        %v5224 = vadd.f32 %v5220, %v5223
        %vm5225 = vweird.f32 %v3384
        %vm5226 = vweird.f32 %v5220
        %vm5227 = vmor %vm5225, %vm5226
        %v5228 = vsel %vm5227, %v5220, %v5224
        %v5229 = vand.u32 2147483647, %v3384
        %vm5230 = vcmp.eq.f32.partialorder %v5229, 8.507059e+37
        %v5231 = vand.u32 %v3384, 2147483648
        %v5232 = vor.u32 1.1754944e-38, %v5231
        %v5233 = vsel %vm5230, %v5232, %v5228
        %v5234 = vmul.f32 1.0, %v5233
        %v5235 = vrcp.pop %v3385
        %v5236 = vmul.f32 %v3385, %v5235
        %v5237 = vsub.f32 1.0, %v5236
        %v5238 = vmul.f32 %v5235, %v5237
        %v5239 = vadd.f32 %v5235, %v5238
        %vm5240 = vweird.f32 %v3385
        %vm5241 = vweird.f32 %v5235
        %vm5242 = vmor %vm5240, %vm5241
        %v5243 = vsel %vm5242, %v5235, %v5239
        %v5244 = vand.u32 2147483647, %v3385
        %vm5245 = vcmp.eq.f32.partialorder %v5244, 8.507059e+37
        %v5246 = vand.u32 %v3385, 2147483648
        %v5247 = vor.u32 1.1754944e-38, %v5246
        %v5248 = vsel %vm5245, %v5247, %v5243
        %v5249 = vmul.f32 1.0, %v5248
        %v5250 = vrcp.pop %v3386
        %v5251 = vmul.f32 %v3386, %v5250
        %v5252 = vsub.f32 1.0, %v5251
        %v5253 = vmul.f32 %v5250, %v5252
        %v5254 = vadd.f32 %v5250, %v5253
        %vm5255 = vweird.f32 %v3386
        %vm5256 = vweird.f32 %v5250
        %vm5257 = vmor %vm5255, %vm5256
        %v5258 = vsel %vm5257, %v5250, %v5254
        %v5259 = vand.u32 2147483647, %v3386
        %vm5260 = vcmp.eq.f32.partialorder %v5259, 8.507059e+37
        %v5261 = vand.u32 %v3386, 2147483648
        %v5262 = vor.u32 1.1754944e-38, %v5261
        %v5263 = vsel %vm5260, %v5262, %v5258
        %v5264 = vmul.f32 1.0, %v5263
        %v5265 = vrcp.pop %v3387
        %v5266 = vmul.f32 %v3387, %v5265
        %v5267 = vsub.f32 1.0, %v5266
        %v5268 = vmul.f32 %v5265, %v5267
        %v5269 = vadd.f32 %v5265, %v5268
        %vm5270 = vweird.f32 %v3387
        %vm5271 = vweird.f32 %v5265
        %vm5272 = vmor %vm5270, %vm5271
        %v5273 = vsel %vm5272, %v5265, %v5269
        %v5274 = vand.u32 2147483647, %v3387
        %vm5275 = vcmp.eq.f32.partialorder %v5274, 8.507059e+37
        %v5276 = vand.u32 %v3387, 2147483648
        %v5277 = vor.u32 1.1754944e-38, %v5276
        %v5278 = vsel %vm5275, %v5277, %v5273
        %v5279 = vmul.f32 1.0, %v5278
        %v5280 = vrcp.pop %v3388
        %v5281 = vmul.f32 %v3388, %v5280
        %v5282 = vsub.f32 1.0, %v5281
        %v5283 = vmul.f32 %v5280, %v5282
        %v5284 = vadd.f32 %v5280, %v5283
        %vm5285 = vweird.f32 %v3388
        %vm5286 = vweird.f32 %v5280
        %vm5287 = vmor %vm5285, %vm5286
        %v5288 = vsel %vm5287, %v5280, %v5284
        %v5289 = vand.u32 2147483647, %v3388
        %vm5290 = vcmp.eq.f32.partialorder %v5289, 8.507059e+37
        %v5291 = vand.u32 %v3388, 2147483648
        %v5292 = vor.u32 1.1754944e-38, %v5291
        %v5293 = vsel %vm5290, %v5292, %v5288
        %v5294 = vmul.f32 1.0, %v5293
        %v5295 = vrcp.pop %v3389
        %v5296 = vmul.f32 %v3389, %v5295
        %v5297 = vsub.f32 1.0, %v5296
        %v5298 = vmul.f32 %v5295, %v5297
        %v5299 = vadd.f32 %v5295, %v5298
        %vm5300 = vweird.f32 %v3389
        %vm5301 = vweird.f32 %v5295
        %vm5302 = vmor %vm5300, %vm5301
        %v5303 = vsel %vm5302, %v5295, %v5299
        %v5304 = vand.u32 2147483647, %v3389
        %vm5305 = vcmp.eq.f32.partialorder %v5304, 8.507059e+37
        %v5306 = vand.u32 %v3389, 2147483648
        %v5307 = vor.u32 1.1754944e-38, %v5306
        %v5308 = vsel %vm5305, %v5307, %v5303
        %v5309 = vmul.f32 1.0, %v5308
        %vm5310 = vcmask 7168
        %5311 = vst.msk [vmem:[%s359] sm:$0xff] %vm5310, %v3404
        %5312 = vst.msk [vmem:[%s359 + $0x8] sm:$0xff] %vm5310, %v3419
        %5313 = vst.msk [vmem:[%s359 + $0x10] sm:$0xff] %vm5310, %v3434
        %5314 = vst.msk [vmem:[%s359 + $0x18] sm:$0xff] %vm5310, %v3449
        %5315 = vst.msk [vmem:[%s359 + $0x20] sm:$0xff] %vm5310, %v3464
        %5316 = vst.msk [vmem:[%s359 + $0x28] sm:$0xff] %vm5310, %v3479
        %5317 = vst.msk [vmem:[%s359 + $0x30] sm:$0xff] %vm5310, %v3494
        %5318 = vst.msk [vmem:[%s359 + $0x38] sm:$0xff] %vm5310, %v3509
        %5319 = vst.msk [vmem:[%s359 + $0x40] sm:$0xff] %vm5310, %v3524
        %5320 = vst.msk [vmem:[%s359 + $0x48] sm:$0xff] %vm5310, %v3539
        %5321 = vst.msk [vmem:[%s359 + $0x50] sm:$0xff] %vm5310, %v3554
        %5322 = vst.msk [vmem:[%s359 + $0x58] sm:$0xff] %vm5310, %v3569
        %5323 = vst.msk [vmem:[%s359 + $0x60] sm:$0xff] %vm5310, %v3584
        %5324 = vst.msk [vmem:[%s359 + $0x68] sm:$0xff] %vm5310, %v3599
        %5325 = vst.msk [vmem:[%s359 + $0x70] sm:$0xff] %vm5310, %v3614
        %5326 = vst.msk [vmem:[%s359 + $0x78] sm:$0xff] %vm5310, %v3629
        %5327 = vst.msk [vmem:[%s359 + $0x80] sm:$0xff] %vm5310, %v3644
        %5328 = vst.msk [vmem:[%s359 + $0x88] sm:$0xff] %vm5310, %v3659
        %5329 = vst.msk [vmem:[%s359 + $0x90] sm:$0xff] %vm5310, %v3674
        %5330 = vst.msk [vmem:[%s359 + $0x98] sm:$0xff] %vm5310, %v3689
        %5331 = vst.msk [vmem:[%s359 + $0xa0] sm:$0xff] %vm5310, %v3704
        %5332 = vst.msk [vmem:[%s359 + $0xa8] sm:$0xff] %vm5310, %v3719
        %5333 = vst.msk [vmem:[%s359 + $0xb0] sm:$0xff] %vm5310, %v3734
        %5334 = vst.msk [vmem:[%s359 + $0xb8] sm:$0xff] %vm5310, %v3749
        %5335 = vst.msk [vmem:[%s359 + $0xc0] sm:$0xff] %vm5310, %v3764
        %5336 = vst.msk [vmem:[%s359 + $0xc8] sm:$0xff] %vm5310, %v3779
        %5337 = vst.msk [vmem:[%s359 + $0xd0] sm:$0xff] %vm5310, %v3794
        %5338 = vst.msk [vmem:[%s359 + $0xd8] sm:$0xff] %vm5310, %v3809
        %5339 = vst.msk [vmem:[%s359 + $0xe0] sm:$0xff] %vm5310, %v3824
        %5340 = vst.msk [vmem:[%s359 + $0xe8] sm:$0xff] %vm5310, %v3839
        %5341 = vst.msk [vmem:[%s359 + $0xf0] sm:$0xff] %vm5310, %v3854
        %5342 = vst.msk [vmem:[%s359 + $0xf8] sm:$0xff] %vm5310, %v3869
        %5343 = vst.msk [vmem:[%s359 + $0x100] sm:$0xff] %vm5310, %v3884
        %5344 = vst.msk [vmem:[%s359 + $0x108] sm:$0xff] %vm5310, %v3899
        %5345 = vst.msk [vmem:[%s359 + $0x110] sm:$0xff] %vm5310, %v3914
        %5346 = vst.msk [vmem:[%s359 + $0x118] sm:$0xff] %vm5310, %v3929
        %5347 = vst.msk [vmem:[%s359 + $0x120] sm:$0xff] %vm5310, %v3944
        %5348 = vst.msk [vmem:[%s359 + $0x128] sm:$0xff] %vm5310, %v3959
        %5349 = vst.msk [vmem:[%s359 + $0x130] sm:$0xff] %vm5310, %v3974
        %5350 = vst.msk [vmem:[%s359 + $0x138] sm:$0xff] %vm5310, %v3989
        %5351 = vst.msk [vmem:[%s359 + $0x140] sm:$0xff] %vm5310, %v4004
        %5352 = vst.msk [vmem:[%s359 + $0x148] sm:$0xff] %vm5310, %v4019
        %5353 = vst.msk [vmem:[%s359 + $0x150] sm:$0xff] %vm5310, %v4034
        %5354 = vst.msk [vmem:[%s359 + $0x158] sm:$0xff] %vm5310, %v4049
        %5355 = vst.msk [vmem:[%s359 + $0x160] sm:$0xff] %vm5310, %v4064
        %5356 = vst.msk [vmem:[%s359 + $0x168] sm:$0xff] %vm5310, %v4079
        %5357 = vst.msk [vmem:[%s359 + $0x170] sm:$0xff] %vm5310, %v4094
        %5358 = vst.msk [vmem:[%s359 + $0x178] sm:$0xff] %vm5310, %v4109
        %5359 = vst.msk [vmem:[%s359 + $0x180] sm:$0xff] %vm5310, %v4124
        %5360 = vst.msk [vmem:[%s359 + $0x188] sm:$0xff] %vm5310, %v4139
        %5361 = vst.msk [vmem:[%s359 + $0x190] sm:$0xff] %vm5310, %v4154
        %5362 = vst.msk [vmem:[%s359 + $0x198] sm:$0xff] %vm5310, %v4169
        %5363 = vst.msk [vmem:[%s359 + $0x1a0] sm:$0xff] %vm5310, %v4184
        %5364 = vst.msk [vmem:[%s359 + $0x1a8] sm:$0xff] %vm5310, %v4199
        %5365 = vst.msk [vmem:[%s359 + $0x1b0] sm:$0xff] %vm5310, %v4214
        %5366 = vst.msk [vmem:[%s359 + $0x1b8] sm:$0xff] %vm5310, %v4229
        %5367 = vst.msk [vmem:[%s359 + $0x1c0] sm:$0xff] %vm5310, %v4244
        %5368 = vst.msk [vmem:[%s359 + $0x1c8] sm:$0xff] %vm5310, %v4259
        %5369 = vst.msk [vmem:[%s359 + $0x1d0] sm:$0xff] %vm5310, %v4274
        %5370 = vst.msk [vmem:[%s359 + $0x1d8] sm:$0xff] %vm5310, %v4289
        %5371 = vst.msk [vmem:[%s359 + $0x1e0] sm:$0xff] %vm5310, %v4304
        %5372 = vst.msk [vmem:[%s359 + $0x1e8] sm:$0xff] %vm5310, %v4319
        %5373 = vst.msk [vmem:[%s359 + $0x1f0] sm:$0xff] %vm5310, %v4334
        %5374 = vst.msk [vmem:[%s359 + $0x1f8] sm:$0xff] %vm5310, %v4349
        %5375 = vst.msk [vmem:[%s359 + $0x200] sm:$0xff] %vm5310, %v4364
        %5376 = vst.msk [vmem:[%s359 + $0x208] sm:$0xff] %vm5310, %v4379
        %5377 = vst.msk [vmem:[%s359 + $0x210] sm:$0xff] %vm5310, %v4394
        %5378 = vst.msk [vmem:[%s359 + $0x218] sm:$0xff] %vm5310, %v4409
        %5379 = vst.msk [vmem:[%s359 + $0x220] sm:$0xff] %vm5310, %v4424
        %5380 = vst.msk [vmem:[%s359 + $0x228] sm:$0xff] %vm5310, %v4439
        %5381 = vst.msk [vmem:[%s359 + $0x230] sm:$0xff] %vm5310, %v4454
        %5382 = vst.msk [vmem:[%s359 + $0x238] sm:$0xff] %vm5310, %v4469
        %5383 = vst.msk [vmem:[%s359 + $0x240] sm:$0xff] %vm5310, %v4484
        %5384 = vst.msk [vmem:[%s359 + $0x248] sm:$0xff] %vm5310, %v4499
        %5385 = vst.msk [vmem:[%s359 + $0x250] sm:$0xff] %vm5310, %v4514
        %5386 = vst.msk [vmem:[%s359 + $0x258] sm:$0xff] %vm5310, %v4529
        %5387 = vst.msk [vmem:[%s359 + $0x260] sm:$0xff] %vm5310, %v4544
        %5388 = vst.msk [vmem:[%s359 + $0x268] sm:$0xff] %vm5310, %v4559
        %5389 = vst.msk [vmem:[%s359 + $0x270] sm:$0xff] %vm5310, %v4574
        %5390 = vst.msk [vmem:[%s359 + $0x278] sm:$0xff] %vm5310, %v4589
        %5391 = vst.msk [vmem:[%s359 + $0x280] sm:$0xff] %vm5310, %v4604
        %5392 = vst.msk [vmem:[%s359 + $0x288] sm:$0xff] %vm5310, %v4619
        %5393 = vst.msk [vmem:[%s359 + $0x290] sm:$0xff] %vm5310, %v4634
        %5394 = vst.msk [vmem:[%s359 + $0x298] sm:$0xff] %vm5310, %v4649
        %5395 = vst.msk [vmem:[%s359 + $0x2a0] sm:$0xff] %vm5310, %v4664
        %5396 = vst.msk [vmem:[%s359 + $0x2a8] sm:$0xff] %vm5310, %v4679
        %5397 = vst.msk [vmem:[%s359 + $0x2b0] sm:$0xff] %vm5310, %v4694
        %5398 = vst.msk [vmem:[%s359 + $0x2b8] sm:$0xff] %vm5310, %v4709
        %5399 = vst.msk [vmem:[%s359 + $0x2c0] sm:$0xff] %vm5310, %v4724
        %5400 = vst.msk [vmem:[%s359 + $0x2c8] sm:$0xff] %vm5310, %v4739
        %5401 = vst.msk [vmem:[%s359 + $0x2d0] sm:$0xff] %vm5310, %v4754
        %5402 = vst.msk [vmem:[%s359 + $0x2d8] sm:$0xff] %vm5310, %v4769
        %5403 = vst.msk [vmem:[%s359 + $0x2e0] sm:$0xff] %vm5310, %v4784
        %5404 = vst.msk [vmem:[%s359 + $0x2e8] sm:$0xff] %vm5310, %v4799
        %5405 = vst.msk [vmem:[%s359 + $0x2f0] sm:$0xff] %vm5310, %v4814
        %5406 = vst.msk [vmem:[%s359 + $0x2f8] sm:$0xff] %vm5310, %v4829
        %5407 = vst.msk [vmem:[%s359 + $0x300] sm:$0xff] %vm5310, %v4844
        %5408 = vst.msk [vmem:[%s359 + $0x308] sm:$0xff] %vm5310, %v4859
        %5409 = vst.msk [vmem:[%s359 + $0x310] sm:$0xff] %vm5310, %v4874
        %5410 = vst.msk [vmem:[%s359 + $0x318] sm:$0xff] %vm5310, %v4889
        %5411 = vst.msk [vmem:[%s359 + $0x320] sm:$0xff] %vm5310, %v4904
        %5412 = vst.msk [vmem:[%s359 + $0x328] sm:$0xff] %vm5310, %v4919
        %5413 = vst.msk [vmem:[%s359 + $0x330] sm:$0xff] %vm5310, %v4934
        %5414 = vst.msk [vmem:[%s359 + $0x338] sm:$0xff] %vm5310, %v4949
        %5415 = vst.msk [vmem:[%s359 + $0x340] sm:$0xff] %vm5310, %v4964
        %5416 = vst.msk [vmem:[%s359 + $0x348] sm:$0xff] %vm5310, %v4979
        %5417 = vst.msk [vmem:[%s359 + $0x350] sm:$0xff] %vm5310, %v4994
        %5418 = vst.msk [vmem:[%s359 + $0x358] sm:$0xff] %vm5310, %v5009
        %5419 = vst.msk [vmem:[%s359 + $0x360] sm:$0xff] %vm5310, %v5024
        %5420 = vst.msk [vmem:[%s359 + $0x368] sm:$0xff] %vm5310, %v5039
        %5421 = vst.msk [vmem:[%s359 + $0x370] sm:$0xff] %vm5310, %v5054
        %5422 = vst.msk [vmem:[%s359 + $0x378] sm:$0xff] %vm5310, %v5069
        %5423 = vst.msk [vmem:[%s359 + $0x380] sm:$0xff] %vm5310, %v5084
        %5424 = vst.msk [vmem:[%s359 + $0x388] sm:$0xff] %vm5310, %v5099
        %5425 = vst.msk [vmem:[%s359 + $0x390] sm:$0xff] %vm5310, %v5114
        %5426 = vst.msk [vmem:[%s359 + $0x398] sm:$0xff] %vm5310, %v5129
        %5427 = vst.msk [vmem:[%s359 + $0x3a0] sm:$0xff] %vm5310, %v5144
        %5428 = vst.msk [vmem:[%s359 + $0x3a8] sm:$0xff] %vm5310, %v5159
        %5429 = vst.msk [vmem:[%s359 + $0x3b0] sm:$0xff] %vm5310, %v5174
        %5430 = vst.msk [vmem:[%s359 + $0x3b8] sm:$0xff] %vm5310, %v5189
        %5431 = vst.msk [vmem:[%s359 + $0x3c0] sm:$0xff] %vm5310, %v5204
        %5432 = vst.msk [vmem:[%s359 + $0x3c8] sm:$0xff] %vm5310, %v5219
        %5433 = vst.msk [vmem:[%s359 + $0x3d0] sm:$0xff] %vm5310, %v5234
        %5434 = vst.msk [vmem:[%s359 + $0x3d8] sm:$0xff] %vm5310, %v5249
        %5435 = vst.msk [vmem:[%s359 + $0x3e0] sm:$0xff] %vm5310, %v5264
        %5436 = vst.msk [vmem:[%s359 + $0x3e8] sm:$0xff] %vm5310, %v5279
        %5437 = vst.msk [vmem:[%s359 + $0x3f0] sm:$0xff] %vm5310, %v5294
        %5438 = vst.msk [vmem:[%s359 + $0x3f8] sm:$0xff] %vm5310, %v5309
        %s5439 = smul.u32 128, %s23
        %p5440 = scmp.lt.s32.totalorder %s5439, 383
        %s5441 = scalar_select %p5440, %s5439, 383
        %s5442 = smul.addr %s5441, 8
        %s5443 = scalar_lea.vmem %s7, %s5442
        // Predicated region
        $region69: #{tpu_custom_call.1} parent=47 // pred_check
          %p5444 = pneg %p193
        $region70: #{tpu_custom_call.1} parent=47 // pred_check_branch
          %5446 = sbr.rel (%p5444) target = $region72
        $region71: #{tpu_custom_call.1} parent=47 // pred_region
          %s5447 = smul.u32 128, %s23
        $region72: #{tpu_custom_call.1} parent=47 // pred_fallthru
          _
      $region48: #{tpu_custom_call.1} parent=5 // pred_fallthru
        _
      %p5448 = scmp.le.s32.totalorder 2, %s18
      // Predicated region
      $region73: #{tpu_custom_call.1} parent=5 // pred_check
        %p5449 = pneg %p5448
      $region74: #{tpu_custom_call.1} parent=5 // pred_check_branch
        %5451 = sbr.rel (%p5449) target = $region76
      $region75: #{tpu_custom_call.1} parent=5 // pred_region
        %s5452 = ssub.s32 %s18, 2
        // Predicated region
        $region77: #{tpu_custom_call.1} parent=75 // pred_check
          %p5453 = pneg %p199
        $region78: #{tpu_custom_call.1} parent=75 // pred_check_branch
          %5455 = sbr.rel (%p5453) target = $region80
        $region79: #{tpu_custom_call.1} parent=75 // pred_region
          %s5456 = smul.u32 128, %s24
          %p5457 = scmp.lt.s32.totalorder %s5456, 383
          %s5458 = scalar_select %p5457, %s5456, 383
          %s5459 = smul.addr %s5458, 8
          %s5460 = scalar_lea.vmem %s7, %s5459
        $region80: #{tpu_custom_call.1} parent=75 // pred_fallthru
          _
      $region76: #{tpu_custom_call.1} parent=5 // pred_fallthru
        _
    $region6: #{tpu_custom_call.1} parent=1 // loop_footer
      %s22 = sadd.s32 1, %s18
    $region7: #{tpu_custom_call.1} parent=1 // loop_footer_branch
      %17 = sbr.rel target = $region3
    $region8: #{tpu_custom_call.1} parent=1 // loop_exit
      _
    %5461 = vsyncpa [#allocation4], 1
    %s5462 = scalar_lea.sflag [#allocation4], 1
    %5463 = vsyncpa %s5462, 1
    %5464 = vsyncpa [#allocation6], 1
    %5465 = vsyncpa [#allocation9], 1

</llo_original>
